<compile_context>
chip_gen: v6e
topology: v6e:2x2x1
jax: 0.10.0
libtpu: 0.0.40
codegen_flags: <defaults>
</compile_context>

<pallas_src>
import functools

import jax
import jax.numpy as jnp
from jax.experimental import pallas as pl
from jax.experimental.pallas import tpu as pltpu


# ------------------------------ Pallas kernel -------------------------------


def _attn_fused_kernel(x_ref, w_qkv_ref, w_exp_ref, bias_ref, y_ref,
                       qkv_scr, q_cl_scr, *, heads, dim_head):
    """Fused QKV proj + per-head attention + output 1x1 conv, one batch item.

    x_ref    : (1, C, HW)          NCHW input, spatial flattened
    w_qkv_ref: (3*hidden, C)       [Wq*scale ; Wk ; Wv] (conv (Cout, Cin) layout)
    w_exp_ref: (heads, C*g, HW)    to_out weight pre-expanded so PyTorch's raw
                                   out.reshape(B,-1,H,W) becomes a plain matmul
    bias_ref : (C*g, 1)            to_out bias replicated g times per channel
    y_ref    : (1, C*g, dim_head)  packed output; row-major == (C, H, W)
    qkv_scr  : VMEM (3*hidden, HW) channels-first Q|K|V projections
    q_cl_scr : VMEM (HW, hidden)   Q transposed to channels-last
    """
    hidden = heads * dim_head
    x_cf = x_ref[0]                                                 # (C, HW)

    # All three 1x1-conv projections in one MXU matmul (softmax scale folded
    # into the Wq rows at prep time).
    qkv_scr[...] = jnp.dot(w_qkv_ref[...], x_cf,
                           preferred_element_type=jnp.float32)      # (3h, HW)
    # Single tile-aligned transpose so every per-head sim is a plain A @ B.
    q_cl_scr[...] = qkv_scr[0:hidden, :].T                          # (HW, hid)

    acc = jnp.zeros(y_ref.shape[1:], dtype=jnp.float32)             # (C*g, d)
    for h in range(heads):                                          # static unroll
        lo = h * dim_head
        q_h = q_cl_scr[:, lo:lo + dim_head]                         # (HW, d) scaled
        k_h = qkv_scr[hidden + lo:hidden + lo + dim_head, :]        # (d, HW)
        v_h = qkv_scr[2 * hidden + lo:2 * hidden + lo + dim_head, :]  # (d, HW)

        # sim[i, j] = sum_d q[i, d] * k[d, j]  ('b h d i, b h d j -> b h i j')
        sim = jnp.dot(q_h, k_h, preferred_element_type=jnp.float32)  # (HW, HW)
        sim = sim - jnp.max(sim, axis=-1, keepdims=True)
        e = jnp.exp(sim)
        denom = jnp.sum(e, axis=-1, keepdims=True)                   # (HW, 1)
        attn = e * pl.reciprocal(denom, approx=False)

        # Fused output projection: g_h[c*g+a, j] = sum_r wo[c, h*d+r]*attn[r*g+a, j]
        g_h = jnp.dot(w_exp_ref[h], attn,
                      preferred_element_type=jnp.float32)            # (C*g, HW)
        # contract over j with V (channels-first), MXU-native A @ B^T pattern
        acc = acc + jax.lax.dot_general(
            g_h, v_h, (((1,), (1,)), ((), ())),
            preferred_element_type=jnp.float32)                      # (C*g, d)

    y_ref[0] = (acc + bias_ref[...]).astype(y_ref.dtype)


# --------------------------- parameter preparation --------------------------


def prepare_params(params, *, heads, dim_head, height, width):
    """One-time weight prep (outside the per-call jitted path)."""
    C = params["wo"].shape[0]
    HW = height * width
    # TODO(synk): general HW % dim_head != 0 would need an in-kernel raw reshape.
    assert HW % dim_head == 0, "this fused kernel assumes H*W % dim_head == 0"
    g = HW // dim_head
    scale = jnp.float32(dim_head ** (-0.5))

    w_qkv = jnp.concatenate(
        [params["wq"].astype(jnp.float32) * scale,
         params["wk"].astype(jnp.float32),
         params["wv"].astype(jnp.float32)], axis=0)                  # (3*hid, C)

    # Expand to_out's weight so PyTorch's raw out.reshape(B, -1, H, W) (which
    # interleaves the query index into the channel dim) becomes a plain matmul
    # against `attn`:  w_exp[h, c*g + a, i] = wo[c, h*d + i//g] * (i % g == a)
    wo = params["wo"].astype(jnp.float32)                            # (C, hidden)
    i_idx = jnp.arange(HW)
    r_idx = i_idx // g                                               # in [0, d)
    a_idx = i_idx % g
    sel = (a_idx[None, :] == jnp.arange(g)[:, None]).astype(jnp.float32)  # (g, HW)
    w_exp = []
    for h in range(heads):
        wo_h = wo[:, h * dim_head:(h + 1) * dim_head]                # (C, d)
        base = jnp.take(wo_h, r_idx, axis=1)                         # (C, HW)
        w_exp.append((base[:, None, :] * sel[None, :, :]).reshape(C * g, HW))
    w_exp = jnp.stack(w_exp, axis=0)                                 # (heads, C*g, HW)

    bias = jnp.repeat(params["bo"].astype(jnp.float32), g).reshape(C * g, 1)
    return {"w_qkv": w_qkv, "w_exp": w_exp, "bias": bias}


# ------------------------------ full forward --------------------------------


def attention_forward(x, prep, *, heads, dim_head):
    """Equivalent of Attention.forward. x: (B, C, H, W) NCHW float32."""
    B, C, H, W = x.shape
    HW = H * W
    hidden = heads * dim_head
    g = HW // dim_head
    x_cf = x.reshape(B, C, HW)                       # free (NCHW is native)

    kernel = functools.partial(_attn_fused_kernel, heads=heads,
                               dim_head=dim_head)
    y_packed = pl.pallas_call(
        kernel,
        out_shape=jax.ShapeDtypeStruct((B, C * g, dim_head), jnp.float32),
        grid=(B,),
        in_specs=[
            pl.BlockSpec((1, C, HW), lambda b: (b, 0, 0)),
            pl.BlockSpec((3 * hidden, C), lambda b: (0, 0)),
            pl.BlockSpec((heads, C * g, HW), lambda b: (0, 0, 0)),
            pl.BlockSpec((C * g, 1), lambda b: (0, 0)),
        ],
        out_specs=pl.BlockSpec((1, C * g, dim_head), lambda b: (b, 0, 0)),
        scratch_shapes=[
            pltpu.VMEM((3 * hidden, HW), jnp.float32),   # qkv (channels-first)
            pltpu.VMEM((HW, hidden), jnp.float32),       # q (channels-last)
        ],
        compiler_params=pltpu.CompilerParams(
            dimension_semantics=("parallel",)),
    )(x_cf, prep["w_qkv"], prep["w_exp"], prep["bias"])

    # Row-major (C*g, d) flattening == (C, HW) == (C, H, W): free metadata
    # reshape reproducing the exact PyTorch output.
    return y_packed.reshape(B, C, H, W)


# ------------------------- pure-JAX reference check --------------------------


def reference_forward(x, params, heads=4, dim_head=32):
    B, C, H, W = x.shape
    HW = H * W
    hidden = heads * dim_head
    scale = dim_head ** (-0.5)
    xf = x.reshape(B, C, HW)
    q = jnp.einsum("oc,bcp->bop", params["wq"], xf).reshape(B, heads, dim_head, HW)
    k = jnp.einsum("oc,bcp->bop", params["wk"], xf).reshape(B, heads, dim_head, HW)
    v = jnp.einsum("oc,bcp->bop", params["wv"], xf).reshape(B, heads, dim_head, HW)
    q = q * scale
    sim = jnp.einsum("bhdi,bhdj->bhij", q, k)
    sim = sim - jnp.max(sim, axis=-1, keepdims=True)
    attn = jax.nn.softmax(sim, axis=-1)
    out = jnp.einsum("bhij,bhdj->bhid", attn, v)        # (B, heads, HW, d)
    out = out.reshape(B, hidden, HW)                    # raw reshape, as PyTorch
    y = jnp.einsum("oc,bcp->bop", params["wo"], out) + params["bo"][None, :, None]
    return y.reshape(B, C, H, W)


# ---------------------------------- main -------------------------------------


if __name__ == "__main__":
    B, C, H, W = 2, 4, 16, 16
    heads, dim_head = 4, 32
    hidden = heads * dim_head

    key = jax.random.PRNGKey(0)
    kx, kq, kk, kv, ko, kb = jax.random.split(key, 6)

    x = jax.random.normal(kx, (B, C, H, W), dtype=jnp.float32)

    # Deterministic synthetic parameters in PyTorch Conv2d (Cout, Cin) layout.
    params = {
        "wq": jax.random.normal(kq, (hidden, C), dtype=jnp.float32) * 0.1,
        "wk": jax.random.normal(kk, (hidden, C), dtype=jnp.float32) * 0.1,
        "wv": jax.random.normal(kv, (hidden, C), dtype=jnp.float32) * 0.1,
        "wo": jax.random.normal(ko, (C, hidden), dtype=jnp.float32) * 0.1,
        "bo": jax.random.normal(kb, (C,), dtype=jnp.float32) * 0.1,
    }
    # NOTE: the PyTorch module also defines self.to_qkv, which is unused in
    # forward(), so it is intentionally omitted here.

    prep = prepare_params(params, heads=heads, dim_head=dim_head,
                          height=H, width=W)           # one-time weight prep

    fwd = jax.jit(functools.partial(attention_forward, heads=heads,
                                    dim_head=dim_head))
    out = jax.block_until_ready(fwd(x, prep))

    ref = reference_forward(x, params, heads=heads, dim_head=dim_head)
    assert out.shape == (B, C, H, W)
    assert jnp.allclose(out, ref, atol=2e-4, rtol=2e-4), "mismatch vs reference"

    print("KERNEL_OK")
</pallas_src>

<mosaic_0001>
module attributes {stable_mosaic.version = 11 : i64} {
  func.func @_attn_fused_kernel(%arg0: i32, %arg1: memref<1x4x256xf32, #tpu.memory_space<vmem>>, %arg2: memref<384x4xf32, #tpu.memory_space<vmem>>, %arg3: memref<4x32x256xf32, #tpu.memory_space<vmem>>, %arg4: memref<32x1xf32, #tpu.memory_space<vmem>>, %arg5: memref<1x32x32xf32, #tpu.memory_space<vmem>>, %arg6: memref<384x256xf32, #tpu.memory_space<vmem>>, %arg7: memref<256x128xf32, #tpu.memory_space<vmem>>) attributes {dimension_semantics = [#tpu.dimension_semantics<parallel>], iteration_bounds = array<i64: 2>, scalar_prefetch = 0 : i64, scratch_operands = 2 : i64, tpu.core_type = #tpu.core_type<tc>, window_params = [{transform_indices = @transform_0, window_bounds = array<i64: 1, 4, 256>}, {pipeline_mode = #tpu.pipeline_mode<synchronous>, transform_indices = @transform_1, window_bounds = array<i64: 384, 4>}, {pipeline_mode = #tpu.pipeline_mode<synchronous>, transform_indices = @transform_2, window_bounds = array<i64: 4, 32, 256>}, {pipeline_mode = #tpu.pipeline_mode<synchronous>, transform_indices = @transform_3, window_bounds = array<i64: 32, 1>}, {transform_indices = @transform_4, window_bounds = array<i64: 1, 32, 32>}]} {
    %c0 = arith.constant 0 : index
    %c0_0 = arith.constant 0 : index
    %c0_1 = arith.constant 0 : index
    %0 = vector.load %arg1[%c0, %c0_0, %c0_1] : memref<1x4x256xf32, #tpu.memory_space<vmem>>, vector<1x4x256xf32>
    %1 = vector.shape_cast %0 : vector<1x4x256xf32> to vector<4x256xf32>
    %c0_2 = arith.constant 0 : index
    %c0_3 = arith.constant 0 : index
    %2 = vector.load %arg2[%c0_2, %c0_3] : memref<384x4xf32, #tpu.memory_space<vmem>>, vector<384x4xf32>
    %cst = arith.constant dense<0.000000e+00> : vector<384x256xf32>
    %3 = tpu.matmul %2, %1, %cst {dimension_numbers = #tpu.dot_dimension_numbers<[1], [0], [0], [1], [0, 0, 1, 1], [], []>} : vector<384x4xf32>, vector<4x256xf32>, vector<384x256xf32> -> vector<384x256xf32>
    %c0_4 = arith.constant 0 : index
    %c0_5 = arith.constant 0 : index
    %4 = vector.load %arg6[%c0_4, %c0_5] : memref<384x256xf32, #tpu.memory_space<vmem>>, vector<384x256xf32>
    tpu.vector_store %arg6[%c0_4, %c0_5], %3 {strides = array<i32>} : memref<384x256xf32, #tpu.memory_space<vmem>>, vector<384x256xf32>,
    %c0_6 = arith.constant 0 : index
    %c0_7 = arith.constant 0 : index
    %5 = vector.load %arg6[%c0_6, %c0_7] : memref<384x256xf32, #tpu.memory_space<vmem>>, vector<128x256xf32>
    %6 = tpu.transpose %5, [1, 0] : vector<128x256xf32> -> vector<256x128xf32>
    %c0_8 = arith.constant 0 : index
    %c0_9 = arith.constant 0 : index
    %7 = vector.load %arg7[%c0_8, %c0_9] : memref<256x128xf32, #tpu.memory_space<vmem>>, vector<256x128xf32>
    tpu.vector_store %arg7[%c0_8, %c0_9], %6 {strides = array<i32>} : memref<256x128xf32, #tpu.memory_space<vmem>>, vector<256x128xf32>,
    %cst_10 = arith.constant 0.000000e+00 : f32
    %8 = vector.broadcast %cst_10 : f32 to vector<32x32xf32>
    %c0_11 = arith.constant 0 : index
    %c0_12 = arith.constant 0 : index
    %9 = vector.load %arg7[%c0_11, %c0_12] : memref<256x128xf32, #tpu.memory_space<vmem>>, vector<256x32xf32>
    %c128 = arith.constant 128 : index
    %c0_13 = arith.constant 0 : index
    %10 = vector.load %arg6[%c128, %c0_13] : memref<384x256xf32, #tpu.memory_space<vmem>>, vector<32x256xf32>
    %c256 = arith.constant 256 : index
    %c0_14 = arith.constant 0 : index
    %11 = vector.load %arg6[%c256, %c0_14] : memref<384x256xf32, #tpu.memory_space<vmem>>, vector<32x256xf32>
    %cst_15 = arith.constant dense<0.000000e+00> : vector<256x256xf32>
    %12 = tpu.matmul %9, %10, %cst_15 {dimension_numbers = #tpu.dot_dimension_numbers<[1], [0], [0], [1], [0, 0, 1, 1], [], []>} : vector<256x32xf32>, vector<32x256xf32>, vector<256x256xf32> -> vector<256x256xf32>
    %cst_16 = arith.constant dense<0xFF800000> : vector<256xf32>
    %13 = vector.multi_reduction <maximumf>, %12, %cst_16 [1] : vector<256x256xf32> to vector<256xf32>
    %14 = vector.shape_cast %13 : vector<256xf32> to vector<256x1xf32>
    %15 = vector.broadcast %14 : vector<256x1xf32> to vector<256x256xf32>
    %16 = arith.subf %12, %15 : vector<256x256xf32>
    %17 = math.exp %16 : vector<256x256xf32>
    %cst_17 = arith.constant dense<0.000000e+00> : vector<256xf32>
    %18 = vector.multi_reduction <add>, %17, %cst_17 [1] : vector<256x256xf32> to vector<256xf32>
    %19 = vector.shape_cast %18 : vector<256xf32> to vector<256x1xf32>
    %20 = tpu.reciprocal %19 : vector<256x1xf32> -> vector<256x1xf32>
    %21 = vector.broadcast %20 : vector<256x1xf32> to vector<256x256xf32>
    %22 = arith.mulf %17, %21 : vector<256x256xf32>
    %c0_18 = arith.constant 0 : index
    %c0_19 = arith.constant 0 : index
    %c0_20 = arith.constant 0 : index
    %23 = vector.load %arg3[%c0_18, %c0_19, %c0_20] : memref<4x32x256xf32, #tpu.memory_space<vmem>>, vector<1x32x256xf32>
    %24 = vector.shape_cast %23 : vector<1x32x256xf32> to vector<32x256xf32>
    %cst_21 = arith.constant dense<0.000000e+00> : vector<32x256xf32>
    %25 = tpu.matmul %24, %22, %cst_21 {dimension_numbers = #tpu.dot_dimension_numbers<[1], [0], [0], [1], [0, 0, 1, 1], [], []>} : vector<32x256xf32>, vector<256x256xf32>, vector<32x256xf32> -> vector<32x256xf32>
    %cst_22 = arith.constant dense<0.000000e+00> : vector<32x32xf32>
    %26 = tpu.matmul %25, %11, %cst_22 {dimension_numbers = #tpu.dot_dimension_numbers<[1], [1], [0], [0], [0, 0, 1, 0], [], []>} : vector<32x256xf32>, vector<32x256xf32>, vector<32x32xf32> -> vector<32x32xf32>
    %27 = arith.addf %8, %26 : vector<32x32xf32>
    %c0_23 = arith.constant 0 : index
    %c32 = arith.constant 32 : index
    %28 = vector.load %arg7[%c0_23, %c32] : memref<256x128xf32, #tpu.memory_space<vmem>>, vector<256x32xf32>
    %c160 = arith.constant 160 : index
    %c0_24 = arith.constant 0 : index
    %29 = vector.load %arg6[%c160, %c0_24] : memref<384x256xf32, #tpu.memory_space<vmem>>, vector<32x256xf32>
    %c288 = arith.constant 288 : index
    %c0_25 = arith.constant 0 : index
    %30 = vector.load %arg6[%c288, %c0_25] : memref<384x256xf32, #tpu.memory_space<vmem>>, vector<32x256xf32>
    %cst_26 = arith.constant dense<0.000000e+00> : vector<256x256xf32>
    %31 = tpu.matmul %28, %29, %cst_26 {dimension_numbers = #tpu.dot_dimension_numbers<[1], [0], [0], [1], [0, 0, 1, 1], [], []>} : vector<256x32xf32>, vector<32x256xf32>, vector<256x256xf32> -> vector<256x256xf32>
    %cst_27 = arith.constant dense<0xFF800000> : vector<256xf32>
    %32 = vector.multi_reduction <maximumf>, %31, %cst_27 [1] : vector<256x256xf32> to vector<256xf32>
    %33 = vector.shape_cast %32 : vector<256xf32> to vector<256x1xf32>
    %34 = vector.broadcast %33 : vector<256x1xf32> to vector<256x256xf32>
    %35 = arith.subf %31, %34 : vector<256x256xf32>
    %36 = math.exp %35 : vector<256x256xf32>
    %cst_28 = arith.constant dense<0.000000e+00> : vector<256xf32>
    %37 = vector.multi_reduction <add>, %36, %cst_28 [1] : vector<256x256xf32> to vector<256xf32>
    %38 = vector.shape_cast %37 : vector<256xf32> to vector<256x1xf32>
    %39 = tpu.reciprocal %38 : vector<256x1xf32> -> vector<256x1xf32>
    %40 = vector.broadcast %39 : vector<256x1xf32> to vector<256x256xf32>
    %41 = arith.mulf %36, %40 : vector<256x256xf32>
    %c1 = arith.constant 1 : index
    %c0_29 = arith.constant 0 : index
    %c0_30 = arith.constant 0 : index
    %42 = vector.load %arg3[%c1, %c0_29, %c0_30] : memref<4x32x256xf32, #tpu.memory_space<vmem>>, vector<1x32x256xf32>
    %43 = vector.shape_cast %42 : vector<1x32x256xf32> to vector<32x256xf32>
    %cst_31 = arith.constant dense<0.000000e+00> : vector<32x256xf32>
    %44 = tpu.matmul %43, %41, %cst_31 {dimension_numbers = #tpu.dot_dimension_numbers<[1], [0], [0], [1], [0, 0, 1, 1], [], []>} : vector<32x256xf32>, vector<256x256xf32>, vector<32x256xf32> -> vector<32x256xf32>
    %cst_32 = arith.constant dense<0.000000e+00> : vector<32x32xf32>
    %45 = tpu.matmul %44, %30, %cst_32 {dimension_numbers = #tpu.dot_dimension_numbers<[1], [1], [0], [0], [0, 0, 1, 0], [], []>} : vector<32x256xf32>, vector<32x256xf32>, vector<32x32xf32> -> vector<32x32xf32>
    %46 = arith.addf %27, %45 : vector<32x32xf32>
    %c0_33 = arith.constant 0 : index
    %c64 = arith.constant 64 : index
    %47 = vector.load %arg7[%c0_33, %c64] : memref<256x128xf32, #tpu.memory_space<vmem>>, vector<256x32xf32>
    %c192 = arith.constant 192 : index
    %c0_34 = arith.constant 0 : index
    %48 = vector.load %arg6[%c192, %c0_34] : memref<384x256xf32, #tpu.memory_space<vmem>>, vector<32x256xf32>
    %c320 = arith.constant 320 : index
    %c0_35 = arith.constant 0 : index
    %49 = vector.load %arg6[%c320, %c0_35] : memref<384x256xf32, #tpu.memory_space<vmem>>, vector<32x256xf32>
    %cst_36 = arith.constant dense<0.000000e+00> : vector<256x256xf32>
    %50 = tpu.matmul %47, %48, %cst_36 {dimension_numbers = #tpu.dot_dimension_numbers<[1], [0], [0], [1], [0, 0, 1, 1], [], []>} : vector<256x32xf32>, vector<32x256xf32>, vector<256x256xf32> -> vector<256x256xf32>
    %cst_37 = arith.constant dense<0xFF800000> : vector<256xf32>
    %51 = vector.multi_reduction <maximumf>, %50, %cst_37 [1] : vector<256x256xf32> to vector<256xf32>
    %52 = vector.shape_cast %51 : vector<256xf32> to vector<256x1xf32>
    %53 = vector.broadcast %52 : vector<256x1xf32> to vector<256x256xf32>
    %54 = arith.subf %50, %53 : vector<256x256xf32>
    %55 = math.exp %54 : vector<256x256xf32>
    %cst_38 = arith.constant dense<0.000000e+00> : vector<256xf32>
    %56 = vector.multi_reduction <add>, %55, %cst_38 [1] : vector<256x256xf32> to vector<256xf32>
    %57 = vector.shape_cast %56 : vector<256xf32> to vector<256x1xf32>
    %58 = tpu.reciprocal %57 : vector<256x1xf32> -> vector<256x1xf32>
    %59 = vector.broadcast %58 : vector<256x1xf32> to vector<256x256xf32>
    %60 = arith.mulf %55, %59 : vector<256x256xf32>
    %c2 = arith.constant 2 : index
    %c0_39 = arith.constant 0 : index
    %c0_40 = arith.constant 0 : index
    %61 = vector.load %arg3[%c2, %c0_39, %c0_40] : memref<4x32x256xf32, #tpu.memory_space<vmem>>, vector<1x32x256xf32>
    %62 = vector.shape_cast %61 : vector<1x32x256xf32> to vector<32x256xf32>
    %cst_41 = arith.constant dense<0.000000e+00> : vector<32x256xf32>
    %63 = tpu.matmul %62, %60, %cst_41 {dimension_numbers = #tpu.dot_dimension_numbers<[1], [0], [0], [1], [0, 0, 1, 1], [], []>} : vector<32x256xf32>, vector<256x256xf32>, vector<32x256xf32> -> vector<32x256xf32>
    %cst_42 = arith.constant dense<0.000000e+00> : vector<32x32xf32>
    %64 = tpu.matmul %63, %49, %cst_42 {dimension_numbers = #tpu.dot_dimension_numbers<[1], [1], [0], [0], [0, 0, 1, 0], [], []>} : vector<32x256xf32>, vector<32x256xf32>, vector<32x32xf32> -> vector<32x32xf32>
    %65 = arith.addf %46, %64 : vector<32x32xf32>
    %c0_43 = arith.constant 0 : index
    %c96 = arith.constant 96 : index
    %66 = vector.load %arg7[%c0_43, %c96] : memref<256x128xf32, #tpu.memory_space<vmem>>, vector<256x32xf32>
    %c224 = arith.constant 224 : index
    %c0_44 = arith.constant 0 : index
    %67 = vector.load %arg6[%c224, %c0_44] : memref<384x256xf32, #tpu.memory_space<vmem>>, vector<32x256xf32>
    %c352 = arith.constant 352 : index
    %c0_45 = arith.constant 0 : index
    %68 = vector.load %arg6[%c352, %c0_45] : memref<384x256xf32, #tpu.memory_space<vmem>>, vector<32x256xf32>
    %cst_46 = arith.constant dense<0.000000e+00> : vector<256x256xf32>
    %69 = tpu.matmul %66, %67, %cst_46 {dimension_numbers = #tpu.dot_dimension_numbers<[1], [0], [0], [1], [0, 0, 1, 1], [], []>} : vector<256x32xf32>, vector<32x256xf32>, vector<256x256xf32> -> vector<256x256xf32>
    %cst_47 = arith.constant dense<0xFF800000> : vector<256xf32>
    %70 = vector.multi_reduction <maximumf>, %69, %cst_47 [1] : vector<256x256xf32> to vector<256xf32>
    %71 = vector.shape_cast %70 : vector<256xf32> to vector<256x1xf32>
    %72 = vector.broadcast %71 : vector<256x1xf32> to vector<256x256xf32>
    %73 = arith.subf %69, %72 : vector<256x256xf32>
    %74 = math.exp %73 : vector<256x256xf32>
    %cst_48 = arith.constant dense<0.000000e+00> : vector<256xf32>
    %75 = vector.multi_reduction <add>, %74, %cst_48 [1] : vector<256x256xf32> to vector<256xf32>
    %76 = vector.shape_cast %75 : vector<256xf32> to vector<256x1xf32>
    %77 = tpu.reciprocal %76 : vector<256x1xf32> -> vector<256x1xf32>
    %78 = vector.broadcast %77 : vector<256x1xf32> to vector<256x256xf32>
    %79 = arith.mulf %74, %78 : vector<256x256xf32>
    %c3 = arith.constant 3 : index
    %c0_49 = arith.constant 0 : index
    %c0_50 = arith.constant 0 : index
    %80 = vector.load %arg3[%c3, %c0_49, %c0_50] : memref<4x32x256xf32, #tpu.memory_space<vmem>>, vector<1x32x256xf32>
    %81 = vector.shape_cast %80 : vector<1x32x256xf32> to vector<32x256xf32>
    %cst_51 = arith.constant dense<0.000000e+00> : vector<32x256xf32>
    %82 = tpu.matmul %81, %79, %cst_51 {dimension_numbers = #tpu.dot_dimension_numbers<[1], [0], [0], [1], [0, 0, 1, 1], [], []>} : vector<32x256xf32>, vector<256x256xf32>, vector<32x256xf32> -> vector<32x256xf32>
    %cst_52 = arith.constant dense<0.000000e+00> : vector<32x32xf32>
    %83 = tpu.matmul %82, %68, %cst_52 {dimension_numbers = #tpu.dot_dimension_numbers<[1], [1], [0], [0], [0, 0, 1, 0], [], []>} : vector<32x256xf32>, vector<32x256xf32>, vector<32x32xf32> -> vector<32x32xf32>
    %84 = arith.addf %65, %83 : vector<32x32xf32>
    %c0_53 = arith.constant 0 : index
    %c0_54 = arith.constant 0 : index
    %85 = vector.load %arg4[%c0_53, %c0_54] : memref<32x1xf32, #tpu.memory_space<vmem>>, vector<32x1xf32>
    %86 = vector.broadcast %85 : vector<32x1xf32> to vector<32x32xf32>
    %87 = arith.addf %84, %86 : vector<32x32xf32>
    %c0_55 = arith.constant 0 : index
    %c0_56 = arith.constant 0 : index
    %c0_57 = arith.constant 0 : index
    %88 = vector.load %arg5[%c0_55, %c0_56, %c0_57] : memref<1x32x32xf32, #tpu.memory_space<vmem>>, vector<1x32x32xf32>
    %89 = vector.shape_cast %88 : vector<1x32x32xf32> to vector<32x32xf32>
    %90 = vector.shape_cast %87 : vector<32x32xf32> to vector<1x32x32xf32>
    tpu.vector_store %arg5[%c0_55, %c0_56, %c0_57], %90 {strides = array<i32>} : memref<1x32x32xf32, #tpu.memory_space<vmem>>, vector<1x32x32xf32>,
    return
  }
  func.func @transform_0(%arg0: i32) -> (i32, i32, i32) {
    %c0_i32 = arith.constant 0 : i32
    %c0_i32_0 = arith.constant 0 : i32
    %c0_i32_1 = arith.constant 0 : i32
    return %arg0, %c0_i32, %c0_i32_0 : i32, i32, i32
  }
  func.func @transform_1(%arg0: i32) -> (i32, i32) {
    %c0_i32 = arith.constant 0 : i32
    %c0_i32_0 = arith.constant 0 : i32
    %c0_i32_1 = arith.constant 0 : i32
    return %c0_i32, %c0_i32_0 : i32, i32
  }
  func.func @transform_2(%arg0: i32) -> (i32, i32, i32) {
    %c0_i32 = arith.constant 0 : i32
    %c0_i32_0 = arith.constant 0 : i32
    %c0_i32_1 = arith.constant 0 : i32
    %c0_i32_2 = arith.constant 0 : i32
    return %c0_i32, %c0_i32_0, %c0_i32_1 : i32, i32, i32
  }
  func.func @transform_3(%arg0: i32) -> (i32, i32) {
    %c0_i32 = arith.constant 0 : i32
    %c0_i32_0 = arith.constant 0 : i32
    %c0_i32_1 = arith.constant 0 : i32
    return %c0_i32, %c0_i32_0 : i32, i32
  }
  func.func @transform_4(%arg0: i32) -> (i32, i32, i32) {
    %c0_i32 = arith.constant 0 : i32
    %c0_i32_0 = arith.constant 0 : i32
    %c0_i32_1 = arith.constant 0 : i32
    return %arg0, %c0_i32, %c0_i32_0 : i32, i32, i32
  }
}

</mosaic_0001>

<llo_original>
// kernel: attention_forward.1
$region0: #{attention_forward.1}
  #allocation0 [shape = 'u32[]', space=smem, size = 0x4, offset = 0x4, fixed_abs, tag = 'smem constant byte address 0x4 - core index']
  #allocation1 [shape = 'u32[144,128]{1,0:T(1,128)}', space=vmem, size = 0x12000, scoped, tag = 'internal scratch']
  #allocation2 [shape = 'f32[384,256]{1,0:T(8,128)}', space=vmem, size = 0x60000, scoped, tag = 'scratch operand']
  #allocation3 [shape = 'f32[256,128]{1,0:T(8,128)}', space=vmem, size = 0x20000, scoped, tag = 'scratch operand']
  %s0 = inlined_call_operand.vmem [shape: f32[2,4,256], index: 0, kind: input, shape index: {}]
  %s1 = inlined_call_operand.vmem [shape: f32[384,4], index: 1, kind: input, shape index: {}]
  %s2 = inlined_call_operand.vmem [shape: f32[4,32,256], index: 2, kind: input, shape index: {}]
  %s3 = inlined_call_operand.vmem [shape: f32[32,1], index: 3, kind: input, shape index: {}]
  %s4 = inlined_call_operand.vmem [shape: f32[2,32,32], index: 4, kind: output, shape index: {}]
  %s5 = sld [smem:[#allocation0]]
  $region49: #{attention_forward.1} parent=0
    _
  %s7 = ssub.s32 1, %s5
  %s8 = scalar_select 0, %s7, %s5
  loop: start=0, step=1, limit=4
  $region2: #{attention_forward.1} parent=0 // loop_pre_header
    _
  $region3: #{attention_forward.1} parent=0 // loop_header
    %s10 = sphi 0, %s14
    %p11 = scmp.ge.s32.totalorder %s10, 4
    %s20 = sphi 0, %s22
    %s23 = sphi 0, %s20
    %s24 = sphi 0, %s23
    %s40 = sphi 0, %s24
    %s44 = sphi 0, %s44
    %s46 = sphi 0, %s44
    %s47 = sphi 0, %s46
    %s61 = sphi 0, %s47
    %s65 = sphi 0, %s65
    %s67 = sphi 0, %s65
    %s68 = sphi 0, %s67
    %s82 = sphi 0, %s68
    %s86 = sphi 0, %s86
    %s88 = sphi 0, %s86
    %s89 = sphi 0, %s88
    %s103 = sphi 0, %s89
    %s109 = sphi 0, %s111
    %s112 = sphi 0, %s109
    %s113 = sphi 0, %s112
    %s129 = sphi 0, %s113
  $region4: #{attention_forward.1} parent=0 // loop_header_branch
    %13 = sbr.rel (%p11) target = $region8
  $region5: #{attention_forward.1} parent=0 // loop_body
    %s15 = ssub.s32 %s10, 1
    %s16 = ssub.s32 %s10, 2
    %s17 = sadd.s32 %s10, 1
    %s18 = ssub.s32 %s10, %s17
    %p19 = scmp.eq.s32.totalorder %s18, 0
    %s21 = sadd.s32 %s20, 1
    %s22 = scalar_select %p19, %s20, %s21
    %p25 = pneg %p19
    %p26 = scmp.eq.s32.totalorder %s10, 1
    %p27 = por %p25, %p26
    %p28 = scmp.ne.s32.totalorder %s20, %s23
    %p29 = scmp.eq.s32.totalorder %s10, 0
    %p30 = por %p28, %p29
    %p31 = scmp.ne.s32.totalorder %s20, %s23
    %p32 = scmp.eq.s32.totalorder %s15, 1
    %p33 = por %p31, %p32
    %p34 = scmp.ne.s32.totalorder %s23, %s24
    %p35 = scmp.eq.s32.totalorder %s15, 0
    %p36 = por %p34, %p35
    %p37 = scmp.ne.s32.totalorder %s23, %s24
    %p38 = scmp.eq.s32.totalorder %s16, 1
    %p39 = por %p37, %p38
    %p41 = scmp.ne.s32.totalorder %s24, %s40
    %p42 = scmp.eq.s32.totalorder %s16, 0
    %p43 = por %p41, %p42
    %s45 = sadd.s32 %s44, 1
    %p48 = scmp.eq.s32.totalorder %s10, 1
    %p49 = scmp.ne.s32.totalorder %s44, %s46
    %p50 = scmp.eq.s32.totalorder %s10, 0
    %p51 = por %p49, %p50
    %p52 = scmp.ne.s32.totalorder %s44, %s46
    %p53 = scmp.eq.s32.totalorder %s15, 1
    %p54 = por %p52, %p53
    %p55 = scmp.ne.s32.totalorder %s46, %s47
    %p56 = scmp.eq.s32.totalorder %s15, 0
    %p57 = por %p55, %p56
    %p58 = scmp.ne.s32.totalorder %s46, %s47
    %p59 = scmp.eq.s32.totalorder %s16, 1
    %p60 = por %p58, %p59
    %p62 = scmp.ne.s32.totalorder %s47, %s61
    %p63 = scmp.eq.s32.totalorder %s16, 0
    %p64 = por %p62, %p63
    %s66 = sadd.s32 %s65, 1
    %p69 = scmp.eq.s32.totalorder %s10, 1
    %p70 = scmp.ne.s32.totalorder %s65, %s67
    %p71 = scmp.eq.s32.totalorder %s10, 0
    %p72 = por %p70, %p71
    %p73 = scmp.ne.s32.totalorder %s65, %s67
    %p74 = scmp.eq.s32.totalorder %s15, 1
    %p75 = por %p73, %p74
    %p76 = scmp.ne.s32.totalorder %s67, %s68
    %p77 = scmp.eq.s32.totalorder %s15, 0
    %p78 = por %p76, %p77
    %p79 = scmp.ne.s32.totalorder %s67, %s68
    %p80 = scmp.eq.s32.totalorder %s16, 1
    %p81 = por %p79, %p80
    %p83 = scmp.ne.s32.totalorder %s68, %s82
    %p84 = scmp.eq.s32.totalorder %s16, 0
    %p85 = por %p83, %p84
    %s87 = sadd.s32 %s86, 1
    %p90 = scmp.eq.s32.totalorder %s10, 1
    %p91 = scmp.ne.s32.totalorder %s86, %s88
    %p92 = scmp.eq.s32.totalorder %s10, 0
    %p93 = por %p91, %p92
    %p94 = scmp.ne.s32.totalorder %s86, %s88
    %p95 = scmp.eq.s32.totalorder %s15, 1
    %p96 = por %p94, %p95
    %p97 = scmp.ne.s32.totalorder %s88, %s89
    %p98 = scmp.eq.s32.totalorder %s15, 0
    %p99 = por %p97, %p98
    %p100 = scmp.ne.s32.totalorder %s88, %s89
    %p101 = scmp.eq.s32.totalorder %s16, 1
    %p102 = por %p100, %p101
    %p104 = scmp.ne.s32.totalorder %s89, %s103
    %p105 = scmp.eq.s32.totalorder %s16, 0
    %p106 = por %p104, %p105
    %s107 = ssub.s32 %s10, %s17
    %p108 = scmp.eq.s32.totalorder %s107, 0
    %s110 = sadd.s32 %s109, 1
    %s111 = scalar_select %p108, %s109, %s110
    %p114 = pneg %p108
    %p115 = scmp.eq.s32.totalorder %s10, 1
    %p116 = por %p114, %p115
    %p117 = scmp.ne.s32.totalorder %s109, %s112
    %p118 = scmp.eq.s32.totalorder %s10, 0
    %p119 = por %p117, %p118
    %p120 = scmp.ne.s32.totalorder %s109, %s112
    %p121 = scmp.eq.s32.totalorder %s15, 1
    %p122 = por %p120, %p121
    %p123 = scmp.ne.s32.totalorder %s112, %s113
    %p124 = scmp.eq.s32.totalorder %s15, 0
    %p125 = por %p123, %p124
    %p126 = scmp.ne.s32.totalorder %s112, %s113
    %p127 = scmp.eq.s32.totalorder %s16, 1
    %p128 = por %p126, %p127
    %p130 = scmp.ne.s32.totalorder %s113, %s129
    %p131 = scmp.eq.s32.totalorder %s16, 0
    %p132 = por %p130, %p131
    %p133 = scmp.le.s32.totalorder 1, %s10
    %p134 = scmp.lt.s32.totalorder %s10, 3
    %p135 = pnand %p133, %p134
    %p136 = pneg %p135
    // Predicated region
    $region9: #{attention_forward.1} parent=5 // pred_check
      _
    $region10: #{attention_forward.1} parent=5 // pred_check_branch
      %138 = sbr.rel (%p135) target = $region12
    $region11: #{attention_forward.1} parent=5 // pred_region
      %s139 = ssub.s32 %s10, 1
      // Predicated region
      $region13: #{attention_forward.1} parent=11 // pred_check
        %p140 = pneg %p57
      $region14: #{attention_forward.1} parent=11 // pred_check_branch
        %142 = sbr.rel (%p140) target = $region16
      $region15: #{attention_forward.1} parent=11 // pred_region
        _
      $region16: #{attention_forward.1} parent=11 // pred_fallthru
        _
      // Predicated region
      $region17: #{attention_forward.1} parent=11 // pred_check
        %p143 = pneg %p78
      $region18: #{attention_forward.1} parent=11 // pred_check_branch
        %145 = sbr.rel (%p143) target = $region20
      $region19: #{attention_forward.1} parent=11 // pred_region
        _
      $region20: #{attention_forward.1} parent=11 // pred_fallthru
        _
      // Predicated region
      $region21: #{attention_forward.1} parent=11 // pred_check
        %p146 = pneg %p99
      $region22: #{attention_forward.1} parent=11 // pred_check_branch
        %148 = sbr.rel (%p146) target = $region24
      $region23: #{attention_forward.1} parent=11 // pred_region
        _
      $region24: #{attention_forward.1} parent=11 // pred_fallthru
        _
    $region12: #{attention_forward.1} parent=5 // pred_fallthru
      _
    %p149 = scmp.lt.s32.totalorder %s10, 2
    // Predicated region
    $region25: #{attention_forward.1} parent=5 // pred_check
      %p150 = pneg %p149
    $region26: #{attention_forward.1} parent=5 // pred_check_branch
      %152 = sbr.rel (%p150) target = $region28
    $region27: #{attention_forward.1} parent=5 // pred_region
      // Predicated region
      $region29: #{attention_forward.1} parent=27 // pred_check
        %p153 = pneg %p30
      $region30: #{attention_forward.1} parent=27 // pred_check_branch
        %155 = sbr.rel (%p153) target = $region32
      $region31: #{attention_forward.1} parent=27 // pred_region
        %p156 = scmp.lt.s32.totalorder %s10, 1
        %s157 = scalar_select %p156, %s10, 1
        %s158 = smul.addr %s157, 2
        %s159 = smul.addr %s158, 4
        %s160 = scalar_lea.vmem %s0, %s159
      $region32: #{attention_forward.1} parent=27 // pred_fallthru
        _
    $region28: #{attention_forward.1} parent=5 // pred_fallthru
      _
    %p161 = scmp.le.s32.totalorder 1, %s10
    %p162 = scmp.lt.s32.totalorder %s10, 3
    %p163 = pnand %p161, %p162
    %p164 = pneg %p163
    // Predicated region
    $region33: #{attention_forward.1} parent=5 // pred_check
      _
    $region34: #{attention_forward.1} parent=5 // pred_check_branch
      %166 = sbr.rel (%p163) target = $region36
    $region35: #{attention_forward.1} parent=5 // pred_region
      %s167 = ssub.s32 %s10, 1
      %p168 = scmp.lt.s32.totalorder %s15, 1
      %s169 = scalar_select %p168, %s15, 1
      %s170 = smul.addr %s169, 2
      %s171 = smul.addr %s170, 4
      %s172 = scalar_lea.vmem %s0, %s171
      %p173 = pneg %p36
      %p174 = pneg %p33
      %p175 = pneg %p57
      %p176 = pneg %p54
      %p177 = pneg %p78
      %p178 = pneg %p75
      %p179 = pneg %p99
      %p180 = pneg %p96
      %p181 = pneg %p125
      %p182 = pneg %p122
      %p183 = scmp.lt.s32.totalorder %s15, 1
      %s184 = scalar_select %p183, %s15, 1
      %s185 = smul.addr %s184, 4
      %s186 = smul.addr %s185, 8
      %s187 = scalar_lea.vmem %s4, %s186
      %p188 = scmp.lt.s32.totalorder %s15, 1
      %s189 = scalar_select %p188, %s15, 1
      %s190 = smul.addr %s189, 2
      %s191 = smul.addr %s190, 4
      %s192 = scalar_lea.vmem %s0, %s191
      %p193 = scmp.lt.s32.totalorder %s15, 1
      %s194 = scalar_select %p193, %s15, 1
      %s195 = smul.addr %s194, 4
      %s196 = smul.addr %s195, 8
      %s197 = scalar_lea.vmem %s4, %s196
      %v198 = vld [vmem:[%s192] sm:$0xff]
      %v199 = vld [vmem:[%s1] sm:$0xff]
      %v200 = vld [vmem:[%s1 + $0x8] sm:$0xff]
      %v201 = vld [vmem:[%s1 + $0x10] sm:$0xff]
      %v202 = vld [vmem:[%s1 + $0x18] sm:$0xff]
      %v203 = vld [vmem:[%s1 + $0x20] sm:$0xff]
      %v204 = vld [vmem:[%s1 + $0x28] sm:$0xff]
      %v205 = vld [vmem:[%s1 + $0x30] sm:$0xff]
      %v206 = vld [vmem:[%s1 + $0x38] sm:$0xff]
      %v207 = vld [vmem:[%s1 + $0x40] sm:$0xff]
      %v208 = vld [vmem:[%s1 + $0x48] sm:$0xff]
      %v209 = vld [vmem:[%s1 + $0x50] sm:$0xff]
      %v210 = vld [vmem:[%s1 + $0x58] sm:$0xff]
      %v211 = vld [vmem:[%s1 + $0x60] sm:$0xff]
      %v212 = vld [vmem:[%s1 + $0x68] sm:$0xff]
      %v213 = vld [vmem:[%s1 + $0x70] sm:$0xff]
      %v214 = vld [vmem:[%s1 + $0x78] sm:$0xff]
      %v215 = vld [vmem:[%s1 + $0x80] sm:$0xff]
      %v216 = vld [vmem:[%s1 + $0x88] sm:$0xff]
      %v217 = vld [vmem:[%s1 + $0x90] sm:$0xff]
      %v218 = vld [vmem:[%s1 + $0x98] sm:$0xff]
      %v219 = vld [vmem:[%s1 + $0xa0] sm:$0xff]
      %v220 = vld [vmem:[%s1 + $0xa8] sm:$0xff]
      %v221 = vld [vmem:[%s1 + $0xb0] sm:$0xff]
      %v222 = vld [vmem:[%s1 + $0xb8] sm:$0xff]
      %v223 = vld [vmem:[%s1 + $0xc0] sm:$0xff]
      %v224 = vld [vmem:[%s1 + $0xc8] sm:$0xff]
      %v225 = vld [vmem:[%s1 + $0xd0] sm:$0xff]
      %v226 = vld [vmem:[%s1 + $0xd8] sm:$0xff]
      %v227 = vld [vmem:[%s1 + $0xe0] sm:$0xff]
      %v228 = vld [vmem:[%s1 + $0xe8] sm:$0xff]
      %v229 = vld [vmem:[%s1 + $0xf0] sm:$0xff]
      %v230 = vld [vmem:[%s1 + $0xf8] sm:$0xff]
      %v231 = vld [vmem:[%s1 + $0x100] sm:$0xff]
      %v232 = vld [vmem:[%s1 + $0x108] sm:$0xff]
      %v233 = vld [vmem:[%s1 + $0x110] sm:$0xff]
      %v234 = vld [vmem:[%s1 + $0x118] sm:$0xff]
      %v235 = vld [vmem:[%s1 + $0x120] sm:$0xff]
      %v236 = vld [vmem:[%s1 + $0x128] sm:$0xff]
      %v237 = vld [vmem:[%s1 + $0x130] sm:$0xff]
      %v238 = vld [vmem:[%s1 + $0x138] sm:$0xff]
      %v239 = vld [vmem:[%s1 + $0x140] sm:$0xff]
      %v240 = vld [vmem:[%s1 + $0x148] sm:$0xff]
      %v241 = vld [vmem:[%s1 + $0x150] sm:$0xff]
      %v242 = vld [vmem:[%s1 + $0x158] sm:$0xff]
      %v243 = vld [vmem:[%s1 + $0x160] sm:$0xff]
      %v244 = vld [vmem:[%s1 + $0x168] sm:$0xff]
      %v245 = vld [vmem:[%s1 + $0x170] sm:$0xff]
      %v246 = vld [vmem:[%s1 + $0x178] sm:$0xff]
      %v248 = vcombine.high %v198, %v198
      %vm249 = vcmask 31744
      %v251 = vsel %vm249, %v199, 0
      %v254 = vsel %vm249, %v200, 0
      %v257 = vsel %vm249, %v201, 0
      %v260 = vsel %vm249, %v202, 0
      %v263 = vsel %vm249, %v203, 0
      %v266 = vsel %vm249, %v204, 0
      %v269 = vsel %vm249, %v205, 0
      %v272 = vsel %vm249, %v206, 0
      %v275 = vsel %vm249, %v207, 0
      %v278 = vsel %vm249, %v208, 0
      %v281 = vsel %vm249, %v209, 0
      %v284 = vsel %vm249, %v210, 0
      %v287 = vsel %vm249, %v211, 0
      %v290 = vsel %vm249, %v212, 0
      %v293 = vsel %vm249, %v213, 0
      %v296 = vsel %vm249, %v214, 0
      %v299 = vsel %vm249, %v215, 0
      %v302 = vsel %vm249, %v216, 0
      %v305 = vsel %vm249, %v217, 0
      %v308 = vsel %vm249, %v218, 0
      %v311 = vsel %vm249, %v219, 0
      %v314 = vsel %vm249, %v220, 0
      %v317 = vsel %vm249, %v221, 0
      %v320 = vsel %vm249, %v222, 0
      %v323 = vsel %vm249, %v223, 0
      %v326 = vsel %vm249, %v224, 0
      %v329 = vsel %vm249, %v225, 0
      %v332 = vsel %vm249, %v226, 0
      %v335 = vsel %vm249, %v227, 0
      %v338 = vsel %vm249, %v228, 0
      %v341 = vsel %vm249, %v229, 0
      %v344 = vsel %vm249, %v230, 0
      %v347 = vsel %vm249, %v231, 0
      %v350 = vsel %vm249, %v232, 0
      %v353 = vsel %vm249, %v233, 0
      %v356 = vsel %vm249, %v234, 0
      %v359 = vsel %vm249, %v235, 0
      %v362 = vsel %vm249, %v236, 0
      %v365 = vsel %vm249, %v237, 0
      %v368 = vsel %vm249, %v238, 0
      %v371 = vsel %vm249, %v239, 0
      %v374 = vsel %vm249, %v240, 0
      %v377 = vsel %vm249, %v241, 0
      %v380 = vsel %vm249, %v242, 0
      %v383 = vsel %vm249, %v243, 0
      %v386 = vsel %vm249, %v244, 0
      %v389 = vsel %vm249, %v245, 0
      %v392 = vsel %vm249, %v246, 0
      %vm394 = vcmask 1043456
      %v395 = vsel %vm394, %v198, 0
      %v397 = vsel %vm394, %v248, 0
      %399 = vmatprep.subr.mxu0 0.0
      %400 = vmatpush1.msra.mxu0 0.0
      %401 = vmatprep.subr.mxu0 0.0
      %402 = vmatpush1.msra.mxu0 0.0
      %403 = vmatprep.subr.mxu0 0.0
      %404 = vmatpush1.msra.mxu0 0.0
      %405 = vmatprep.subr.mxu0 0.0
      %406 = vmatpush1.msra.mxu0 0.0
      %407 = vmatprep.subr.mxu0 0.0
      %408 = vmatpush1.msra.mxu0 0.0
      %409 = vmatprep.subr.mxu0 0.0
      %410 = vmatpush1.msra.mxu0 0.0
      %411 = vmatprep.subr.mxu0 0.0
      %412 = vmatpush1.msra.mxu0 0.0
      %413 = vmatprep.subr.mxu0 0.0
      %414 = vmatpush1.msra.mxu0 0.0
      %415 = vmatprep.subr.mxu0 0.0
      %416 = vmatpush1.msra.mxu0 0.0
      %417 = vmatprep.subr.mxu0 0.0
      %418 = vmatpush1.msra.mxu0 0.0
      %419 = vmatprep.subr.mxu0 0.0
      %420 = vmatpush1.msra.mxu0 0.0
      %421 = vmatprep.subr.mxu0 0.0
      %422 = vmatpush1.msra.mxu0 0.0
      %423 = vmatprep.subr.mxu0 0.0
      %424 = vmatpush1.msra.mxu0 0.0
      %425 = vmatprep.subr.mxu0 0.0
      %426 = vmatpush1.msra.mxu0 0.0
      %427 = vmatprep.subr.mxu0 0.0
      %428 = vmatpush1.msra.mxu0 0.0
      %429 = vmatprep.subr.mxu0 %v397
      %430 = vmatpush1.msra.mxu0 %v395
      %431 = vmatprep.subr.mxu0 0.0
      %432 = vmatpush2.msra.mxu0 0.0
      %433 = vmatprep.subr.mxu0 0.0
      %434 = vmatpush2.msra.mxu0 0.0
      %435 = vmatprep.subr.mxu0 0.0
      %436 = vmatpush2.msra.mxu0 0.0
      %437 = vmatprep.subr.mxu0 0.0
      %438 = vmatpush2.msra.mxu0 0.0
      %439 = vmatprep.subr.mxu0 0.0
      %440 = vmatpush2.msra.mxu0 0.0
      %441 = vmatprep.subr.mxu0 0.0
      %442 = vmatpush2.msra.mxu0 0.0
      %443 = vmatprep.subr.mxu0 0.0
      %444 = vmatpush2.msra.mxu0 0.0
      %445 = vmatprep.subr.mxu0 0.0
      %446 = vmatpush2.msra.mxu0 0.0
      %447 = vmatprep.subr.mxu0 0.0
      %448 = vmatpush2.msra.mxu0 0.0
      %449 = vmatprep.subr.mxu0 0.0
      %450 = vmatpush2.msra.mxu0 0.0
      %451 = vmatprep.subr.mxu0 0.0
      %452 = vmatpush2.msra.mxu0 0.0
      %453 = vmatprep.subr.mxu0 0.0
      %454 = vmatpush2.msra.mxu0 0.0
      %455 = vmatprep.subr.mxu0 0.0
      %456 = vmatpush2.msra.mxu0 0.0
      %457 = vmatprep.subr.mxu0 0.0
      %458 = vmatpush2.msra.mxu0 0.0
      %459 = vmatprep.subr.mxu0 0.0
      %460 = vmatpush2.msra.mxu0 0.0
      %461 = vmatprep.subr.mxu0 0.0
      %462 = vmatpush2.msra.mxu0 0.0
      %463 = vmatprep.mubr.f32.mxu0 0.0
      %464 = vmatmul.mubr.f32.gmra.mxu0 %v251
      %v465 = vpop.f32.mrf.mxu0
      %v466 = vadd.f32 0.0, %v465
      %v467 = vpop.f32.mrf.mxu0
      %v468 = vadd.f32 0.0, %v467
      %469 = vmatprep.mubr.f32.mxu0 0.0
      %470 = vmatmul.mubr.f32.gmra.mxu0 %v254
      %v471 = vpop.f32.mrf.mxu0
      %v472 = vadd.f32 0.0, %v471
      %v473 = vpop.f32.mrf.mxu0
      %v474 = vadd.f32 0.0, %v473
      %475 = vmatprep.mubr.f32.mxu0 0.0
      %476 = vmatmul.mubr.f32.gmra.mxu0 %v257
      %v477 = vpop.f32.mrf.mxu0
      %v478 = vadd.f32 0.0, %v477
      %v479 = vpop.f32.mrf.mxu0
      %v480 = vadd.f32 0.0, %v479
      %481 = vmatprep.mubr.f32.mxu0 0.0
      %482 = vmatmul.mubr.f32.gmra.mxu0 %v260
      %v483 = vpop.f32.mrf.mxu0
      %v484 = vadd.f32 0.0, %v483
      %v485 = vpop.f32.mrf.mxu0
      %v486 = vadd.f32 0.0, %v485
      %487 = vmatprep.mubr.f32.mxu0 0.0
      %488 = vmatmul.mubr.f32.gmra.mxu0 %v263
      %v489 = vpop.f32.mrf.mxu0
      %v490 = vadd.f32 0.0, %v489
      %v491 = vpop.f32.mrf.mxu0
      %v492 = vadd.f32 0.0, %v491
      %493 = vmatprep.mubr.f32.mxu0 0.0
      %494 = vmatmul.mubr.f32.gmra.mxu0 %v266
      %v495 = vpop.f32.mrf.mxu0
      %v496 = vadd.f32 0.0, %v495
      %v497 = vpop.f32.mrf.mxu0
      %v498 = vadd.f32 0.0, %v497
      %499 = vmatprep.mubr.f32.mxu0 0.0
      %500 = vmatmul.mubr.f32.gmra.mxu0 %v269
      %v501 = vpop.f32.mrf.mxu0
      %v502 = vadd.f32 0.0, %v501
      %v503 = vpop.f32.mrf.mxu0
      %v504 = vadd.f32 0.0, %v503
      %505 = vmatprep.mubr.f32.mxu0 0.0
      %506 = vmatmul.mubr.f32.gmra.mxu0 %v272
      %v507 = vpop.f32.mrf.mxu0
      %v508 = vadd.f32 0.0, %v507
      %v509 = vpop.f32.mrf.mxu0
      %v510 = vadd.f32 0.0, %v509
      %511 = vmatprep.mubr.f32.mxu0 0.0
      %512 = vmatmul.mubr.f32.gmra.mxu0 %v275
      %v513 = vpop.f32.mrf.mxu0
      %v514 = vadd.f32 0.0, %v513
      %v515 = vpop.f32.mrf.mxu0
      %v516 = vadd.f32 0.0, %v515
      %517 = vmatprep.mubr.f32.mxu0 0.0
      %518 = vmatmul.mubr.f32.gmra.mxu0 %v278
      %v519 = vpop.f32.mrf.mxu0
      %v520 = vadd.f32 0.0, %v519
      %v521 = vpop.f32.mrf.mxu0
      %v522 = vadd.f32 0.0, %v521
      %523 = vmatprep.mubr.f32.mxu0 0.0
      %524 = vmatmul.mubr.f32.gmra.mxu0 %v281
      %v525 = vpop.f32.mrf.mxu0
      %v526 = vadd.f32 0.0, %v525
      %v527 = vpop.f32.mrf.mxu0
      %v528 = vadd.f32 0.0, %v527
      %529 = vmatprep.mubr.f32.mxu0 0.0
      %530 = vmatmul.mubr.f32.gmra.mxu0 %v284
      %v531 = vpop.f32.mrf.mxu0
      %v532 = vadd.f32 0.0, %v531
      %v533 = vpop.f32.mrf.mxu0
      %v534 = vadd.f32 0.0, %v533
      %535 = vmatprep.mubr.f32.mxu0 0.0
      %536 = vmatmul.mubr.f32.gmra.mxu0 %v287
      %v537 = vpop.f32.mrf.mxu0
      %v538 = vadd.f32 0.0, %v537
      %v539 = vpop.f32.mrf.mxu0
      %v540 = vadd.f32 0.0, %v539
      %541 = vmatprep.mubr.f32.mxu0 0.0
      %542 = vmatmul.mubr.f32.gmra.mxu0 %v290
      %v543 = vpop.f32.mrf.mxu0
      %v544 = vadd.f32 0.0, %v543
      %v545 = vpop.f32.mrf.mxu0
      %v546 = vadd.f32 0.0, %v545
      %547 = vmatprep.mubr.f32.mxu0 0.0
      %548 = vmatmul.mubr.f32.gmra.mxu0 %v293
      %v549 = vpop.f32.mrf.mxu0
      %v550 = vadd.f32 0.0, %v549
      %v551 = vpop.f32.mrf.mxu0
      %v552 = vadd.f32 0.0, %v551
      %553 = vmatprep.mubr.f32.mxu0 0.0
      %554 = vmatmul.mubr.f32.gmra.mxu0 %v296
      %v555 = vpop.f32.mrf.mxu0
      %v556 = vadd.f32 0.0, %v555
      %v557 = vpop.f32.mrf.mxu0
      %v558 = vadd.f32 0.0, %v557
      %559 = vmatprep.mubr.f32.mxu0 0.0
      %560 = vmatmul.mubr.f32.gmra.mxu0 %v299
      %v561 = vpop.f32.mrf.mxu0
      %v562 = vadd.f32 0.0, %v561
      %v563 = vpop.f32.mrf.mxu0
      %v564 = vadd.f32 0.0, %v563
      %565 = vmatprep.mubr.f32.mxu0 0.0
      %566 = vmatmul.mubr.f32.gmra.mxu0 %v302
      %v567 = vpop.f32.mrf.mxu0
      %v568 = vadd.f32 0.0, %v567
      %v569 = vpop.f32.mrf.mxu0
      %v570 = vadd.f32 0.0, %v569
      %571 = vmatprep.mubr.f32.mxu0 0.0
      %572 = vmatmul.mubr.f32.gmra.mxu0 %v305
      %v573 = vpop.f32.mrf.mxu0
      %v574 = vadd.f32 0.0, %v573
      %v575 = vpop.f32.mrf.mxu0
      %v576 = vadd.f32 0.0, %v575
      %577 = vmatprep.mubr.f32.mxu0 0.0
      %578 = vmatmul.mubr.f32.gmra.mxu0 %v308
      %v579 = vpop.f32.mrf.mxu0
      %v580 = vadd.f32 0.0, %v579
      %v581 = vpop.f32.mrf.mxu0
      %v582 = vadd.f32 0.0, %v581
      %583 = vmatprep.mubr.f32.mxu0 0.0
      %584 = vmatmul.mubr.f32.gmra.mxu0 %v311
      %v585 = vpop.f32.mrf.mxu0
      %v586 = vadd.f32 0.0, %v585
      %v587 = vpop.f32.mrf.mxu0
      %v588 = vadd.f32 0.0, %v587
      %589 = vmatprep.mubr.f32.mxu0 0.0
      %590 = vmatmul.mubr.f32.gmra.mxu0 %v314
      %v591 = vpop.f32.mrf.mxu0
      %v592 = vadd.f32 0.0, %v591
      %v593 = vpop.f32.mrf.mxu0
      %v594 = vadd.f32 0.0, %v593
      %595 = vmatprep.mubr.f32.mxu0 0.0
      %596 = vmatmul.mubr.f32.gmra.mxu0 %v317
      %v597 = vpop.f32.mrf.mxu0
      %v598 = vadd.f32 0.0, %v597
      %v599 = vpop.f32.mrf.mxu0
      %v600 = vadd.f32 0.0, %v599
      %601 = vmatprep.mubr.f32.mxu0 0.0
      %602 = vmatmul.mubr.f32.gmra.mxu0 %v320
      %v603 = vpop.f32.mrf.mxu0
      %v604 = vadd.f32 0.0, %v603
      %v605 = vpop.f32.mrf.mxu0
      %v606 = vadd.f32 0.0, %v605
      %607 = vmatprep.mubr.f32.mxu0 0.0
      %608 = vmatmul.mubr.f32.gmra.mxu0 %v323
      %v609 = vpop.f32.mrf.mxu0
      %v610 = vadd.f32 0.0, %v609
      %v611 = vpop.f32.mrf.mxu0
      %v612 = vadd.f32 0.0, %v611
      %613 = vmatprep.mubr.f32.mxu0 0.0
      %614 = vmatmul.mubr.f32.gmra.mxu0 %v326
      %v615 = vpop.f32.mrf.mxu0
      %v616 = vadd.f32 0.0, %v615
      %v617 = vpop.f32.mrf.mxu0
      %v618 = vadd.f32 0.0, %v617
      %619 = vmatprep.mubr.f32.mxu0 0.0
      %620 = vmatmul.mubr.f32.gmra.mxu0 %v329
      %v621 = vpop.f32.mrf.mxu0
      %v622 = vadd.f32 0.0, %v621
      %v623 = vpop.f32.mrf.mxu0
      %v624 = vadd.f32 0.0, %v623
      %625 = vmatprep.mubr.f32.mxu0 0.0
      %626 = vmatmul.mubr.f32.gmra.mxu0 %v332
      %v627 = vpop.f32.mrf.mxu0
      %v628 = vadd.f32 0.0, %v627
      %v629 = vpop.f32.mrf.mxu0
      %v630 = vadd.f32 0.0, %v629
      %631 = vmatprep.mubr.f32.mxu0 0.0
      %632 = vmatmul.mubr.f32.gmra.mxu0 %v335
      %v633 = vpop.f32.mrf.mxu0
      %v634 = vadd.f32 0.0, %v633
      %v635 = vpop.f32.mrf.mxu0
      %v636 = vadd.f32 0.0, %v635
      %637 = vmatprep.mubr.f32.mxu0 0.0
      %638 = vmatmul.mubr.f32.gmra.mxu0 %v338
      %v639 = vpop.f32.mrf.mxu0
      %v640 = vadd.f32 0.0, %v639
      %v641 = vpop.f32.mrf.mxu0
      %v642 = vadd.f32 0.0, %v641
      %643 = vmatprep.mubr.f32.mxu0 0.0
      %644 = vmatmul.mubr.f32.gmra.mxu0 %v341
      %v645 = vpop.f32.mrf.mxu0
      %v646 = vadd.f32 0.0, %v645
      %v647 = vpop.f32.mrf.mxu0
      %v648 = vadd.f32 0.0, %v647
      %649 = vmatprep.mubr.f32.mxu0 0.0
      %650 = vmatmul.mubr.f32.gmra.mxu0 %v344
      %v651 = vpop.f32.mrf.mxu0
      %v652 = vadd.f32 0.0, %v651
      %v653 = vpop.f32.mrf.mxu0
      %v654 = vadd.f32 0.0, %v653
      %655 = vmatprep.mubr.f32.mxu0 0.0
      %656 = vmatmul.mubr.f32.gmra.mxu0 %v347
      %v657 = vpop.f32.mrf.mxu0
      %v658 = vadd.f32 0.0, %v657
      %v659 = vpop.f32.mrf.mxu0
      %v660 = vadd.f32 0.0, %v659
      %661 = vmatprep.mubr.f32.mxu0 0.0
      %662 = vmatmul.mubr.f32.gmra.mxu0 %v350
      %v663 = vpop.f32.mrf.mxu0
      %v664 = vadd.f32 0.0, %v663
      %v665 = vpop.f32.mrf.mxu0
      %v666 = vadd.f32 0.0, %v665
      %667 = vmatprep.mubr.f32.mxu0 0.0
      %668 = vmatmul.mubr.f32.gmra.mxu0 %v353
      %v669 = vpop.f32.mrf.mxu0
      %v670 = vadd.f32 0.0, %v669
      %v671 = vpop.f32.mrf.mxu0
      %v672 = vadd.f32 0.0, %v671
      %673 = vmatprep.mubr.f32.mxu0 0.0
      %674 = vmatmul.mubr.f32.gmra.mxu0 %v356
      %v675 = vpop.f32.mrf.mxu0
      %v676 = vadd.f32 0.0, %v675
      %v677 = vpop.f32.mrf.mxu0
      %v678 = vadd.f32 0.0, %v677
      %679 = vmatprep.mubr.f32.mxu0 0.0
      %680 = vmatmul.mubr.f32.gmra.mxu0 %v359
      %v681 = vpop.f32.mrf.mxu0
      %v682 = vadd.f32 0.0, %v681
      %v683 = vpop.f32.mrf.mxu0
      %v684 = vadd.f32 0.0, %v683
      %685 = vmatprep.mubr.f32.mxu0 0.0
      %686 = vmatmul.mubr.f32.gmra.mxu0 %v362
      %v687 = vpop.f32.mrf.mxu0
      %v688 = vadd.f32 0.0, %v687
      %v689 = vpop.f32.mrf.mxu0
      %v690 = vadd.f32 0.0, %v689
      %691 = vmatprep.mubr.f32.mxu0 0.0
      %692 = vmatmul.mubr.f32.gmra.mxu0 %v365
      %v693 = vpop.f32.mrf.mxu0
      %v694 = vadd.f32 0.0, %v693
      %v695 = vpop.f32.mrf.mxu0
      %v696 = vadd.f32 0.0, %v695
      %697 = vmatprep.mubr.f32.mxu0 0.0
      %698 = vmatmul.mubr.f32.gmra.mxu0 %v368
      %v699 = vpop.f32.mrf.mxu0
      %v700 = vadd.f32 0.0, %v699
      %v701 = vpop.f32.mrf.mxu0
      %v702 = vadd.f32 0.0, %v701
      %703 = vmatprep.mubr.f32.mxu0 0.0
      %704 = vmatmul.mubr.f32.gmra.mxu0 %v371
      %v705 = vpop.f32.mrf.mxu0
      %v706 = vadd.f32 0.0, %v705
      %v707 = vpop.f32.mrf.mxu0
      %v708 = vadd.f32 0.0, %v707
      %709 = vmatprep.mubr.f32.mxu0 0.0
      %710 = vmatmul.mubr.f32.gmra.mxu0 %v374
      %v711 = vpop.f32.mrf.mxu0
      %v712 = vadd.f32 0.0, %v711
      %v713 = vpop.f32.mrf.mxu0
      %v714 = vadd.f32 0.0, %v713
      %715 = vmatprep.mubr.f32.mxu0 0.0
      %716 = vmatmul.mubr.f32.gmra.mxu0 %v377
      %v717 = vpop.f32.mrf.mxu0
      %v718 = vadd.f32 0.0, %v717
      %v719 = vpop.f32.mrf.mxu0
      %v720 = vadd.f32 0.0, %v719
      %721 = vmatprep.mubr.f32.mxu0 0.0
      %722 = vmatmul.mubr.f32.gmra.mxu0 %v380
      %v723 = vpop.f32.mrf.mxu0
      %v724 = vadd.f32 0.0, %v723
      %v725 = vpop.f32.mrf.mxu0
      %v726 = vadd.f32 0.0, %v725
      %727 = vmatprep.mubr.f32.mxu0 0.0
      %728 = vmatmul.mubr.f32.gmra.mxu0 %v383
      %v729 = vpop.f32.mrf.mxu0
      %v730 = vadd.f32 0.0, %v729
      %v731 = vpop.f32.mrf.mxu0
      %v732 = vadd.f32 0.0, %v731
      %733 = vmatprep.mubr.f32.mxu0 0.0
      %734 = vmatmul.mubr.f32.gmra.mxu0 %v386
      %v735 = vpop.f32.mrf.mxu0
      %v736 = vadd.f32 0.0, %v735
      %v737 = vpop.f32.mrf.mxu0
      %v738 = vadd.f32 0.0, %v737
      %739 = vmatprep.mubr.f32.mxu0 0.0
      %740 = vmatmul.mubr.f32.gmra.mxu0 %v389
      %v741 = vpop.f32.mrf.mxu0
      %v742 = vadd.f32 0.0, %v741
      %v743 = vpop.f32.mrf.mxu0
      %v744 = vadd.f32 0.0, %v743
      %745 = vmatprep.mubr.f32.mxu0 0.0
      %746 = vmatmul.mubr.f32.gmra.mxu0 %v392
      %v747 = vpop.f32.mrf.mxu0
      %v748 = vadd.f32 0.0, %v747
      %v749 = vpop.f32.mrf.mxu0
      %v750 = vadd.f32 0.0, %v749
      %751 = vdwg.mxu0
      %752 = vst [vmem:[#allocation2] sm:$0xff] %v466
      %753 = vst [vmem:[#allocation2 + $0x8] sm:$0xff] %v468
      %754 = vst [vmem:[#allocation2 + $0x10] sm:$0xff] %v472
      %755 = vst [vmem:[#allocation2 + $0x18] sm:$0xff] %v474
      %756 = vst [vmem:[#allocation2 + $0x20] sm:$0xff] %v478
      %757 = vst [vmem:[#allocation2 + $0x28] sm:$0xff] %v480
      %758 = vst [vmem:[#allocation2 + $0x30] sm:$0xff] %v484
      %759 = vst [vmem:[#allocation2 + $0x38] sm:$0xff] %v486
      %760 = vst [vmem:[#allocation2 + $0x40] sm:$0xff] %v490
      %761 = vst [vmem:[#allocation2 + $0x48] sm:$0xff] %v492
      %762 = vst [vmem:[#allocation2 + $0x50] sm:$0xff] %v496
      %763 = vst [vmem:[#allocation2 + $0x58] sm:$0xff] %v498
      %764 = vst [vmem:[#allocation2 + $0x60] sm:$0xff] %v502
      %765 = vst [vmem:[#allocation2 + $0x68] sm:$0xff] %v504
      %766 = vst [vmem:[#allocation2 + $0x70] sm:$0xff] %v508
      %767 = vst [vmem:[#allocation2 + $0x78] sm:$0xff] %v510
      %768 = vst [vmem:[#allocation2 + $0x80] sm:$0xff] %v514
      %769 = vst [vmem:[#allocation2 + $0x88] sm:$0xff] %v516
      %770 = vst [vmem:[#allocation2 + $0x90] sm:$0xff] %v520
      %771 = vst [vmem:[#allocation2 + $0x98] sm:$0xff] %v522
      %772 = vst [vmem:[#allocation2 + $0xa0] sm:$0xff] %v526
      %773 = vst [vmem:[#allocation2 + $0xa8] sm:$0xff] %v528
      %774 = vst [vmem:[#allocation2 + $0xb0] sm:$0xff] %v532
      %775 = vst [vmem:[#allocation2 + $0xb8] sm:$0xff] %v534
      %776 = vst [vmem:[#allocation2 + $0xc0] sm:$0xff] %v538
      %777 = vst [vmem:[#allocation2 + $0xc8] sm:$0xff] %v540
      %778 = vst [vmem:[#allocation2 + $0xd0] sm:$0xff] %v544
      %779 = vst [vmem:[#allocation2 + $0xd8] sm:$0xff] %v546
      %780 = vst [vmem:[#allocation2 + $0xe0] sm:$0xff] %v550
      %781 = vst [vmem:[#allocation2 + $0xe8] sm:$0xff] %v552
      %782 = vst [vmem:[#allocation2 + $0xf0] sm:$0xff] %v556
      %783 = vst [vmem:[#allocation2 + $0xf8] sm:$0xff] %v558
      %784 = vst [vmem:[#allocation2 + $0x100] sm:$0xff] %v562
      %785 = vst [vmem:[#allocation2 + $0x108] sm:$0xff] %v564
      %786 = vst [vmem:[#allocation2 + $0x110] sm:$0xff] %v568
      %787 = vst [vmem:[#allocation2 + $0x118] sm:$0xff] %v570
      %788 = vst [vmem:[#allocation2 + $0x120] sm:$0xff] %v574
      %789 = vst [vmem:[#allocation2 + $0x128] sm:$0xff] %v576
      %790 = vst [vmem:[#allocation2 + $0x130] sm:$0xff] %v580
      %791 = vst [vmem:[#allocation2 + $0x138] sm:$0xff] %v582
      %792 = vst [vmem:[#allocation2 + $0x140] sm:$0xff] %v586
      %793 = vst [vmem:[#allocation2 + $0x148] sm:$0xff] %v588
      %794 = vst [vmem:[#allocation2 + $0x150] sm:$0xff] %v592
      %795 = vst [vmem:[#allocation2 + $0x158] sm:$0xff] %v594
      %796 = vst [vmem:[#allocation2 + $0x160] sm:$0xff] %v598
      %797 = vst [vmem:[#allocation2 + $0x168] sm:$0xff] %v600
      %798 = vst [vmem:[#allocation2 + $0x170] sm:$0xff] %v604
      %799 = vst [vmem:[#allocation2 + $0x178] sm:$0xff] %v606
      %800 = vst [vmem:[#allocation2 + $0x180] sm:$0xff] %v610
      %801 = vst [vmem:[#allocation2 + $0x188] sm:$0xff] %v612
      %802 = vst [vmem:[#allocation2 + $0x190] sm:$0xff] %v616
      %803 = vst [vmem:[#allocation2 + $0x198] sm:$0xff] %v618
      %804 = vst [vmem:[#allocation2 + $0x1a0] sm:$0xff] %v622
      %805 = vst [vmem:[#allocation2 + $0x1a8] sm:$0xff] %v624
      %806 = vst [vmem:[#allocation2 + $0x1b0] sm:$0xff] %v628
      %807 = vst [vmem:[#allocation2 + $0x1b8] sm:$0xff] %v630
      %808 = vst [vmem:[#allocation2 + $0x1c0] sm:$0xff] %v634
      %809 = vst [vmem:[#allocation2 + $0x1c8] sm:$0xff] %v636
      %810 = vst [vmem:[#allocation2 + $0x1d0] sm:$0xff] %v640
      %811 = vst [vmem:[#allocation2 + $0x1d8] sm:$0xff] %v642
      %812 = vst [vmem:[#allocation2 + $0x1e0] sm:$0xff] %v646
      %813 = vst [vmem:[#allocation2 + $0x1e8] sm:$0xff] %v648
      %814 = vst [vmem:[#allocation2 + $0x1f0] sm:$0xff] %v652
      %815 = vst [vmem:[#allocation2 + $0x1f8] sm:$0xff] %v654
      %816 = vst [vmem:[#allocation2 + $0x200] sm:$0xff] %v658
      %817 = vst [vmem:[#allocation2 + $0x208] sm:$0xff] %v660
      %818 = vst [vmem:[#allocation2 + $0x210] sm:$0xff] %v664
      %819 = vst [vmem:[#allocation2 + $0x218] sm:$0xff] %v666
      %820 = vst [vmem:[#allocation2 + $0x220] sm:$0xff] %v670
      %821 = vst [vmem:[#allocation2 + $0x228] sm:$0xff] %v672
      %822 = vst [vmem:[#allocation2 + $0x230] sm:$0xff] %v676
      %823 = vst [vmem:[#allocation2 + $0x238] sm:$0xff] %v678
      %824 = vst [vmem:[#allocation2 + $0x240] sm:$0xff] %v682
      %825 = vst [vmem:[#allocation2 + $0x248] sm:$0xff] %v684
      %826 = vst [vmem:[#allocation2 + $0x250] sm:$0xff] %v688
      %827 = vst [vmem:[#allocation2 + $0x258] sm:$0xff] %v690
      %828 = vst [vmem:[#allocation2 + $0x260] sm:$0xff] %v694
      %829 = vst [vmem:[#allocation2 + $0x268] sm:$0xff] %v696
      %830 = vst [vmem:[#allocation2 + $0x270] sm:$0xff] %v700
      %831 = vst [vmem:[#allocation2 + $0x278] sm:$0xff] %v702
      %832 = vst [vmem:[#allocation2 + $0x280] sm:$0xff] %v706
      %833 = vst [vmem:[#allocation2 + $0x288] sm:$0xff] %v708
      %834 = vst [vmem:[#allocation2 + $0x290] sm:$0xff] %v712
      %835 = vst [vmem:[#allocation2 + $0x298] sm:$0xff] %v714
      %836 = vst [vmem:[#allocation2 + $0x2a0] sm:$0xff] %v718
      %837 = vst [vmem:[#allocation2 + $0x2a8] sm:$0xff] %v720
      %838 = vst [vmem:[#allocation2 + $0x2b0] sm:$0xff] %v724
      %839 = vst [vmem:[#allocation2 + $0x2b8] sm:$0xff] %v726
      %840 = vst [vmem:[#allocation2 + $0x2c0] sm:$0xff] %v730
      %841 = vst [vmem:[#allocation2 + $0x2c8] sm:$0xff] %v732
      %842 = vst [vmem:[#allocation2 + $0x2d0] sm:$0xff] %v736
      %843 = vst [vmem:[#allocation2 + $0x2d8] sm:$0xff] %v738
      %844 = vst [vmem:[#allocation2 + $0x2e0] sm:$0xff] %v742
      %845 = vst [vmem:[#allocation2 + $0x2e8] sm:$0xff] %v744
      %846 = vst [vmem:[#allocation2 + $0x2f0] sm:$0xff] %v748
      %847 = vst [vmem:[#allocation2 + $0x2f8] sm:$0xff] %v750
      %v848 = vld [vmem:[#allocation2] sm:$0xff]
      %v849 = vld [vmem:[#allocation2 + $0x8] sm:$0xff]
      %v850 = vld [vmem:[#allocation2 + $0x10] sm:$0xff]
      %v851 = vld [vmem:[#allocation2 + $0x18] sm:$0xff]
      %v852 = vld [vmem:[#allocation2 + $0x20] sm:$0xff]
      %v853 = vld [vmem:[#allocation2 + $0x28] sm:$0xff]
      %v854 = vld [vmem:[#allocation2 + $0x30] sm:$0xff]
      %v855 = vld [vmem:[#allocation2 + $0x38] sm:$0xff]
      %v856 = vld [vmem:[#allocation2 + $0x40] sm:$0xff]
      %v857 = vld [vmem:[#allocation2 + $0x48] sm:$0xff]
      %v858 = vld [vmem:[#allocation2 + $0x50] sm:$0xff]
      %v859 = vld [vmem:[#allocation2 + $0x58] sm:$0xff]
      %v860 = vld [vmem:[#allocation2 + $0x60] sm:$0xff]
      %v861 = vld [vmem:[#allocation2 + $0x68] sm:$0xff]
      %v862 = vld [vmem:[#allocation2 + $0x70] sm:$0xff]
      %v863 = vld [vmem:[#allocation2 + $0x78] sm:$0xff]
      %v864 = vld [vmem:[#allocation2 + $0x80] sm:$0xff]
      %v865 = vld [vmem:[#allocation2 + $0x88] sm:$0xff]
      %v866 = vld [vmem:[#allocation2 + $0x90] sm:$0xff]
      %v867 = vld [vmem:[#allocation2 + $0x98] sm:$0xff]
      %v868 = vld [vmem:[#allocation2 + $0xa0] sm:$0xff]
      %v869 = vld [vmem:[#allocation2 + $0xa8] sm:$0xff]
      %v870 = vld [vmem:[#allocation2 + $0xb0] sm:$0xff]
      %v871 = vld [vmem:[#allocation2 + $0xb8] sm:$0xff]
      %v872 = vld [vmem:[#allocation2 + $0xc0] sm:$0xff]
      %v873 = vld [vmem:[#allocation2 + $0xc8] sm:$0xff]
      %v874 = vld [vmem:[#allocation2 + $0xd0] sm:$0xff]
      %v875 = vld [vmem:[#allocation2 + $0xd8] sm:$0xff]
      %v876 = vld [vmem:[#allocation2 + $0xe0] sm:$0xff]
      %v877 = vld [vmem:[#allocation2 + $0xe8] sm:$0xff]
      %v878 = vld [vmem:[#allocation2 + $0xf0] sm:$0xff]
      %v879 = vld [vmem:[#allocation2 + $0xf8] sm:$0xff]
      %880 = vxpose.xlu0.b32.start [1/16] %v848, 128
      %881 = vxpose.xlu0.b32.cont [2/16] %v850, 128
      %882 = vxpose.xlu0.b32.cont [3/16] %v852, 128
      %883 = vxpose.xlu0.b32.cont [4/16] %v854, 128
      %884 = vxpose.xlu0.b32.cont [5/16] %v856, 128
      %885 = vxpose.xlu0.b32.cont [6/16] %v858, 128
      %886 = vxpose.xlu0.b32.cont [7/16] %v860, 128
      %887 = vxpose.xlu0.b32.cont [8/16] %v862, 128
      %888 = vxpose.xlu0.b32.cont [9/16] %v864, 128
      %889 = vxpose.xlu0.b32.cont [10/16] %v866, 128
      %890 = vxpose.xlu0.b32.cont [11/16] %v868, 128
      %891 = vxpose.xlu0.b32.cont [12/16] %v870, 128
      %892 = vxpose.xlu0.b32.cont [13/16] %v872, 128
      %893 = vxpose.xlu0.b32.cont [14/16] %v874, 128
      %894 = vxpose.xlu0.b32.cont [15/16] %v876, 128
      %895 = vxpose.xlu0.b32.end [16/16] %v878, 128
      %v896 = vpop.trf.xlu0
      %v897 = vpop.trf.xlu0
      %v898 = vpop.trf.xlu0
      %v899 = vpop.trf.xlu0
      %v900 = vpop.trf.xlu0
      %v901 = vpop.trf.xlu0
      %v902 = vpop.trf.xlu0
      %v903 = vpop.trf.xlu0
      %v904 = vpop.trf.xlu0
      %v905 = vpop.trf.xlu0
      %v906 = vpop.trf.xlu0
      %v907 = vpop.trf.xlu0
      %v908 = vpop.trf.xlu0
      %v909 = vpop.trf.xlu0
      %v910 = vpop.trf.xlu0
      %v911 = vpop.trf.xlu0
      %912 = vxpose.xlu0.b32.start [1/16] %v849, 128
      %913 = vxpose.xlu0.b32.cont [2/16] %v851, 128
      %914 = vxpose.xlu0.b32.cont [3/16] %v853, 128
      %915 = vxpose.xlu0.b32.cont [4/16] %v855, 128
      %916 = vxpose.xlu0.b32.cont [5/16] %v857, 128
      %917 = vxpose.xlu0.b32.cont [6/16] %v859, 128
      %918 = vxpose.xlu0.b32.cont [7/16] %v861, 128
      %919 = vxpose.xlu0.b32.cont [8/16] %v863, 128
      %920 = vxpose.xlu0.b32.cont [9/16] %v865, 128
      %921 = vxpose.xlu0.b32.cont [10/16] %v867, 128
      %922 = vxpose.xlu0.b32.cont [11/16] %v869, 128
      %923 = vxpose.xlu0.b32.cont [12/16] %v871, 128
      %924 = vxpose.xlu0.b32.cont [13/16] %v873, 128
      %925 = vxpose.xlu0.b32.cont [14/16] %v875, 128
      %926 = vxpose.xlu0.b32.cont [15/16] %v877, 128
      %927 = vxpose.xlu0.b32.end [16/16] %v879, 128
      %v928 = vpop.trf.xlu0
      %v929 = vpop.trf.xlu0
      %v930 = vpop.trf.xlu0
      %v931 = vpop.trf.xlu0
      %v932 = vpop.trf.xlu0
      %v933 = vpop.trf.xlu0
      %v934 = vpop.trf.xlu0
      %v935 = vpop.trf.xlu0
      %v936 = vpop.trf.xlu0
      %v937 = vpop.trf.xlu0
      %v938 = vpop.trf.xlu0
      %v939 = vpop.trf.xlu0
      %v940 = vpop.trf.xlu0
      %v941 = vpop.trf.xlu0
      %v942 = vpop.trf.xlu0
      %v943 = vpop.trf.xlu0
      %944 = vst [vmem:[#allocation3] sm:$0xff] %v896
      %945 = vst [vmem:[#allocation3 + $0x8] sm:$0xff] %v897
      %946 = vst [vmem:[#allocation3 + $0x10] sm:$0xff] %v898
      %947 = vst [vmem:[#allocation3 + $0x18] sm:$0xff] %v899
      %948 = vst [vmem:[#allocation3 + $0x20] sm:$0xff] %v900
      %949 = vst [vmem:[#allocation3 + $0x28] sm:$0xff] %v901
      %950 = vst [vmem:[#allocation3 + $0x30] sm:$0xff] %v902
      %951 = vst [vmem:[#allocation3 + $0x38] sm:$0xff] %v903
      %952 = vst [vmem:[#allocation3 + $0x40] sm:$0xff] %v904
      %953 = vst [vmem:[#allocation3 + $0x48] sm:$0xff] %v905
      %954 = vst [vmem:[#allocation3 + $0x50] sm:$0xff] %v906
      %955 = vst [vmem:[#allocation3 + $0x58] sm:$0xff] %v907
      %956 = vst [vmem:[#allocation3 + $0x60] sm:$0xff] %v908
      %957 = vst [vmem:[#allocation3 + $0x68] sm:$0xff] %v909
      %958 = vst [vmem:[#allocation3 + $0x70] sm:$0xff] %v910
      %959 = vst [vmem:[#allocation3 + $0x78] sm:$0xff] %v911
      %960 = vst [vmem:[#allocation3 + $0x80] sm:$0xff] %v928
      %961 = vst [vmem:[#allocation3 + $0x88] sm:$0xff] %v929
      %962 = vst [vmem:[#allocation3 + $0x90] sm:$0xff] %v930
      %963 = vst [vmem:[#allocation3 + $0x98] sm:$0xff] %v931
      %964 = vst [vmem:[#allocation3 + $0xa0] sm:$0xff] %v932
      %965 = vst [vmem:[#allocation3 + $0xa8] sm:$0xff] %v933
      %966 = vst [vmem:[#allocation3 + $0xb0] sm:$0xff] %v934
      %967 = vst [vmem:[#allocation3 + $0xb8] sm:$0xff] %v935
      %968 = vst [vmem:[#allocation3 + $0xc0] sm:$0xff] %v936
      %969 = vst [vmem:[#allocation3 + $0xc8] sm:$0xff] %v937
      %970 = vst [vmem:[#allocation3 + $0xd0] sm:$0xff] %v938
      %971 = vst [vmem:[#allocation3 + $0xd8] sm:$0xff] %v939
      %972 = vst [vmem:[#allocation3 + $0xe0] sm:$0xff] %v940
      %973 = vst [vmem:[#allocation3 + $0xe8] sm:$0xff] %v941
      %974 = vst [vmem:[#allocation3 + $0xf0] sm:$0xff] %v942
      %975 = vst [vmem:[#allocation3 + $0xf8] sm:$0xff] %v943
      %v976 = vld [vmem:[#allocation3] sm:$0xff]
      %v977 = vld [vmem:[#allocation3 + $0x8] sm:$0xff]
      %v978 = vld [vmem:[#allocation3 + $0x10] sm:$0xff]
      %v979 = vld [vmem:[#allocation3 + $0x18] sm:$0xff]
      %v980 = vld [vmem:[#allocation3 + $0x20] sm:$0xff]
      %v981 = vld [vmem:[#allocation3 + $0x28] sm:$0xff]
      %v982 = vld [vmem:[#allocation3 + $0x30] sm:$0xff]
      %v983 = vld [vmem:[#allocation3 + $0x38] sm:$0xff]
      %v984 = vld [vmem:[#allocation3 + $0x40] sm:$0xff]
      %v985 = vld [vmem:[#allocation3 + $0x48] sm:$0xff]
      %v986 = vld [vmem:[#allocation3 + $0x50] sm:$0xff]
      %v987 = vld [vmem:[#allocation3 + $0x58] sm:$0xff]
      %v988 = vld [vmem:[#allocation3 + $0x60] sm:$0xff]
      %v989 = vld [vmem:[#allocation3 + $0x68] sm:$0xff]
      %v990 = vld [vmem:[#allocation3 + $0x70] sm:$0xff]
      %v991 = vld [vmem:[#allocation3 + $0x78] sm:$0xff]
      %v992 = vld [vmem:[#allocation3 + $0x80] sm:$0xff]
      %v993 = vld [vmem:[#allocation3 + $0x88] sm:$0xff]
      %v994 = vld [vmem:[#allocation3 + $0x90] sm:$0xff]
      %v995 = vld [vmem:[#allocation3 + $0x98] sm:$0xff]
      %v996 = vld [vmem:[#allocation3 + $0xa0] sm:$0xff]
      %v997 = vld [vmem:[#allocation3 + $0xa8] sm:$0xff]
      %v998 = vld [vmem:[#allocation3 + $0xb0] sm:$0xff]
      %v999 = vld [vmem:[#allocation3 + $0xb8] sm:$0xff]
      %v1000 = vld [vmem:[#allocation3 + $0xc0] sm:$0xff]
      %v1001 = vld [vmem:[#allocation3 + $0xc8] sm:$0xff]
      %v1002 = vld [vmem:[#allocation3 + $0xd0] sm:$0xff]
      %v1003 = vld [vmem:[#allocation3 + $0xd8] sm:$0xff]
      %v1004 = vld [vmem:[#allocation3 + $0xe0] sm:$0xff]
      %v1005 = vld [vmem:[#allocation3 + $0xe8] sm:$0xff]
      %v1006 = vld [vmem:[#allocation3 + $0xf0] sm:$0xff]
      %v1007 = vld [vmem:[#allocation3 + $0xf8] sm:$0xff]
      %v1008 = vld [vmem:[#allocation2 + $0x100] sm:$0xff]
      %v1009 = vld [vmem:[#allocation2 + $0x108] sm:$0xff]
      %v1010 = vld [vmem:[#allocation2 + $0x110] sm:$0xff]
      %v1011 = vld [vmem:[#allocation2 + $0x118] sm:$0xff]
      %v1012 = vld [vmem:[#allocation2 + $0x120] sm:$0xff]
      %v1013 = vld [vmem:[#allocation2 + $0x128] sm:$0xff]
      %v1014 = vld [vmem:[#allocation2 + $0x130] sm:$0xff]
      %v1015 = vld [vmem:[#allocation2 + $0x138] sm:$0xff]
      %v1016 = vld [vmem:[#allocation2 + $0x200] sm:$0xff]
      %v1017 = vld [vmem:[#allocation2 + $0x208] sm:$0xff]
      %v1018 = vld [vmem:[#allocation2 + $0x210] sm:$0xff]
      %v1019 = vld [vmem:[#allocation2 + $0x218] sm:$0xff]
      %v1020 = vld [vmem:[#allocation2 + $0x220] sm:$0xff]
      %v1021 = vld [vmem:[#allocation2 + $0x228] sm:$0xff]
      %v1022 = vld [vmem:[#allocation2 + $0x230] sm:$0xff]
      %v1023 = vld [vmem:[#allocation2 + $0x238] sm:$0xff]
      %vm1024 = vcmask 261120
      %v1026 = vsel %vm1024, %v976, 0
      %v1029 = vsel %vm1024, %v977, 0
      %v1032 = vsel %vm1024, %v978, 0
      %v1035 = vsel %vm1024, %v979, 0
      %v1038 = vsel %vm1024, %v980, 0
      %v1041 = vsel %vm1024, %v981, 0
      %v1044 = vsel %vm1024, %v982, 0
      %v1047 = vsel %vm1024, %v983, 0
      %v1050 = vsel %vm1024, %v984, 0
      %v1053 = vsel %vm1024, %v985, 0
      %v1056 = vsel %vm1024, %v986, 0
      %v1059 = vsel %vm1024, %v987, 0
      %v1062 = vsel %vm1024, %v988, 0
      %v1065 = vsel %vm1024, %v989, 0
      %v1068 = vsel %vm1024, %v990, 0
      %v1071 = vsel %vm1024, %v991, 0
      %v1074 = vsel %vm1024, %v992, 0
      %v1077 = vsel %vm1024, %v993, 0
      %v1080 = vsel %vm1024, %v994, 0
      %v1083 = vsel %vm1024, %v995, 0
      %v1086 = vsel %vm1024, %v996, 0
      %v1089 = vsel %vm1024, %v997, 0
      %v1092 = vsel %vm1024, %v998, 0
      %v1095 = vsel %vm1024, %v999, 0
      %v1098 = vsel %vm1024, %v1000, 0
      %v1101 = vsel %vm1024, %v1001, 0
      %v1104 = vsel %vm1024, %v1002, 0
      %v1107 = vsel %vm1024, %v1003, 0
      %v1110 = vsel %vm1024, %v1004, 0
      %v1113 = vsel %vm1024, %v1005, 0
      %v1116 = vsel %vm1024, %v1006, 0
      %v1119 = vsel %vm1024, %v1007, 0
      %1121 = vmatprep.subr.mxu0 0.0
      %1122 = vmatpush1.msra.mxu0 0.0
      %1123 = vmatprep.subr.mxu0 0.0
      %1124 = vmatpush1.msra.mxu0 0.0
      %1125 = vmatprep.subr.mxu0 0.0
      %1126 = vmatpush1.msra.mxu0 0.0
      %1127 = vmatprep.subr.mxu0 0.0
      %1128 = vmatpush1.msra.mxu0 0.0
      %1129 = vmatprep.subr.mxu0 0.0
      %1130 = vmatpush1.msra.mxu0 0.0
      %1131 = vmatprep.subr.mxu0 0.0
      %1132 = vmatpush1.msra.mxu0 0.0
      %1133 = vmatprep.subr.mxu0 0.0
      %1134 = vmatpush1.msra.mxu0 0.0
      %1135 = vmatprep.subr.mxu0 0.0
      %1136 = vmatpush1.msra.mxu0 0.0
      %1137 = vmatprep.subr.mxu0 0.0
      %1138 = vmatpush1.msra.mxu0 0.0
      %1139 = vmatprep.subr.mxu0 0.0
      %1140 = vmatpush1.msra.mxu0 0.0
      %1141 = vmatprep.subr.mxu0 0.0
      %1142 = vmatpush1.msra.mxu0 0.0
      %1143 = vmatprep.subr.mxu0 0.0
      %1144 = vmatpush1.msra.mxu0 0.0
      %1145 = vmatprep.subr.mxu0 %v1015
      %1146 = vmatpush1.msra.mxu0 %v1014
      %1147 = vmatprep.subr.mxu0 %v1013
      %1148 = vmatpush1.msra.mxu0 %v1012
      %1149 = vmatprep.subr.mxu0 %v1011
      %1150 = vmatpush1.msra.mxu0 %v1010
      %1151 = vmatprep.subr.mxu0 %v1009
      %1152 = vmatpush1.msra.mxu0 %v1008
      %1153 = vmatprep.subr.mxu0 0.0
      %1154 = vmatpush2.msra.mxu0 0.0
      %1155 = vmatprep.subr.mxu0 0.0
      %1156 = vmatpush2.msra.mxu0 0.0
      %1157 = vmatprep.subr.mxu0 0.0
      %1158 = vmatpush2.msra.mxu0 0.0
      %1159 = vmatprep.subr.mxu0 0.0
      %1160 = vmatpush2.msra.mxu0 0.0
      %1161 = vmatprep.subr.mxu0 0.0
      %1162 = vmatpush2.msra.mxu0 0.0
      %1163 = vmatprep.subr.mxu0 0.0
      %1164 = vmatpush2.msra.mxu0 0.0
      %1165 = vmatprep.subr.mxu0 0.0
      %1166 = vmatpush2.msra.mxu0 0.0
      %1167 = vmatprep.subr.mxu0 0.0
      %1168 = vmatpush2.msra.mxu0 0.0
      %1169 = vmatprep.subr.mxu0 0.0
      %1170 = vmatpush2.msra.mxu0 0.0
      %1171 = vmatprep.subr.mxu0 0.0
      %1172 = vmatpush2.msra.mxu0 0.0
      %1173 = vmatprep.subr.mxu0 0.0
      %1174 = vmatpush2.msra.mxu0 0.0
      %1175 = vmatprep.subr.mxu0 0.0
      %1176 = vmatpush2.msra.mxu0 0.0
      %1177 = vmatprep.subr.mxu0 0.0
      %1178 = vmatpush2.msra.mxu0 0.0
      %1179 = vmatprep.subr.mxu0 0.0
      %1180 = vmatpush2.msra.mxu0 0.0
      %1181 = vmatprep.subr.mxu0 0.0
      %1182 = vmatpush2.msra.mxu0 0.0
      %1183 = vmatprep.subr.mxu0 0.0
      %1184 = vmatpush2.msra.mxu0 0.0
      %1185 = vmatprep.mubr.f32.mxu0 0.0
      %1186 = vmatmul.mubr.f32.gmra.mxu0 %v1026
      %v1187 = vpop.f32.mrf.mxu0
      %v1188 = vadd.f32 0.0, %v1187
      %v1189 = vpop.f32.mrf.mxu0
      %v1190 = vadd.f32 0.0, %v1189
      %1191 = vmatprep.mubr.f32.mxu0 0.0
      %1192 = vmatmul.mubr.f32.gmra.mxu0 %v1029
      %v1193 = vpop.f32.mrf.mxu0
      %v1194 = vadd.f32 0.0, %v1193
      %v1195 = vpop.f32.mrf.mxu0
      %v1196 = vadd.f32 0.0, %v1195
      %1197 = vmatprep.mubr.f32.mxu0 0.0
      %1198 = vmatmul.mubr.f32.gmra.mxu0 %v1032
      %v1199 = vpop.f32.mrf.mxu0
      %v1200 = vadd.f32 0.0, %v1199
      %v1201 = vpop.f32.mrf.mxu0
      %v1202 = vadd.f32 0.0, %v1201
      %1203 = vmatprep.mubr.f32.mxu0 0.0
      %1204 = vmatmul.mubr.f32.gmra.mxu0 %v1035
      %v1205 = vpop.f32.mrf.mxu0
      %v1206 = vadd.f32 0.0, %v1205
      %v1207 = vpop.f32.mrf.mxu0
      %v1208 = vadd.f32 0.0, %v1207
      %1209 = vmatprep.mubr.f32.mxu0 0.0
      %1210 = vmatmul.mubr.f32.gmra.mxu0 %v1038
      %v1211 = vpop.f32.mrf.mxu0
      %v1212 = vadd.f32 0.0, %v1211
      %v1213 = vpop.f32.mrf.mxu0
      %v1214 = vadd.f32 0.0, %v1213
      %1215 = vmatprep.mubr.f32.mxu0 0.0
      %1216 = vmatmul.mubr.f32.gmra.mxu0 %v1041
      %v1217 = vpop.f32.mrf.mxu0
      %v1218 = vadd.f32 0.0, %v1217
      %v1219 = vpop.f32.mrf.mxu0
      %v1220 = vadd.f32 0.0, %v1219
      %1221 = vmatprep.mubr.f32.mxu0 0.0
      %1222 = vmatmul.mubr.f32.gmra.mxu0 %v1044
      %v1223 = vpop.f32.mrf.mxu0
      %v1224 = vadd.f32 0.0, %v1223
      %v1225 = vpop.f32.mrf.mxu0
      %v1226 = vadd.f32 0.0, %v1225
      %1227 = vmatprep.mubr.f32.mxu0 0.0
      %1228 = vmatmul.mubr.f32.gmra.mxu0 %v1047
      %v1229 = vpop.f32.mrf.mxu0
      %v1230 = vadd.f32 0.0, %v1229
      %v1231 = vpop.f32.mrf.mxu0
      %v1232 = vadd.f32 0.0, %v1231
      %1233 = vmatprep.mubr.f32.mxu0 0.0
      %1234 = vmatmul.mubr.f32.gmra.mxu0 %v1050
      %v1235 = vpop.f32.mrf.mxu0
      %v1236 = vadd.f32 0.0, %v1235
      %v1237 = vpop.f32.mrf.mxu0
      %v1238 = vadd.f32 0.0, %v1237
      %1239 = vmatprep.mubr.f32.mxu0 0.0
      %1240 = vmatmul.mubr.f32.gmra.mxu0 %v1053
      %v1241 = vpop.f32.mrf.mxu0
      %v1242 = vadd.f32 0.0, %v1241
      %v1243 = vpop.f32.mrf.mxu0
      %v1244 = vadd.f32 0.0, %v1243
      %1245 = vmatprep.mubr.f32.mxu0 0.0
      %1246 = vmatmul.mubr.f32.gmra.mxu0 %v1056
      %v1247 = vpop.f32.mrf.mxu0
      %v1248 = vadd.f32 0.0, %v1247
      %v1249 = vpop.f32.mrf.mxu0
      %v1250 = vadd.f32 0.0, %v1249
      %1251 = vmatprep.mubr.f32.mxu0 0.0
      %1252 = vmatmul.mubr.f32.gmra.mxu0 %v1059
      %v1253 = vpop.f32.mrf.mxu0
      %v1254 = vadd.f32 0.0, %v1253
      %v1255 = vpop.f32.mrf.mxu0
      %v1256 = vadd.f32 0.0, %v1255
      %1257 = vmatprep.mubr.f32.mxu0 0.0
      %1258 = vmatmul.mubr.f32.gmra.mxu0 %v1062
      %v1259 = vpop.f32.mrf.mxu0
      %v1260 = vadd.f32 0.0, %v1259
      %v1261 = vpop.f32.mrf.mxu0
      %v1262 = vadd.f32 0.0, %v1261
      %1263 = vmatprep.mubr.f32.mxu0 0.0
      %1264 = vmatmul.mubr.f32.gmra.mxu0 %v1065
      %v1265 = vpop.f32.mrf.mxu0
      %v1266 = vadd.f32 0.0, %v1265
      %v1267 = vpop.f32.mrf.mxu0
      %v1268 = vadd.f32 0.0, %v1267
      %1269 = vmatprep.mubr.f32.mxu0 0.0
      %1270 = vmatmul.mubr.f32.gmra.mxu0 %v1068
      %v1271 = vpop.f32.mrf.mxu0
      %v1272 = vadd.f32 0.0, %v1271
      %v1273 = vpop.f32.mrf.mxu0
      %v1274 = vadd.f32 0.0, %v1273
      %1275 = vmatprep.mubr.f32.mxu0 0.0
      %1276 = vmatmul.mubr.f32.gmra.mxu0 %v1071
      %v1277 = vpop.f32.mrf.mxu0
      %v1278 = vadd.f32 0.0, %v1277
      %v1279 = vpop.f32.mrf.mxu0
      %v1280 = vadd.f32 0.0, %v1279
      %1281 = vmatprep.mubr.f32.mxu0 0.0
      %1282 = vmatmul.mubr.f32.gmra.mxu0 %v1074
      %v1283 = vpop.f32.mrf.mxu0
      %v1284 = vadd.f32 0.0, %v1283
      %v1285 = vpop.f32.mrf.mxu0
      %v1286 = vadd.f32 0.0, %v1285
      %1287 = vmatprep.mubr.f32.mxu0 0.0
      %1288 = vmatmul.mubr.f32.gmra.mxu0 %v1077
      %v1289 = vpop.f32.mrf.mxu0
      %v1290 = vadd.f32 0.0, %v1289
      %v1291 = vpop.f32.mrf.mxu0
      %v1292 = vadd.f32 0.0, %v1291
      %1293 = vmatprep.mubr.f32.mxu0 0.0
      %1294 = vmatmul.mubr.f32.gmra.mxu0 %v1080
      %v1295 = vpop.f32.mrf.mxu0
      %v1296 = vadd.f32 0.0, %v1295
      %v1297 = vpop.f32.mrf.mxu0
      %v1298 = vadd.f32 0.0, %v1297
      %1299 = vmatprep.mubr.f32.mxu0 0.0
      %1300 = vmatmul.mubr.f32.gmra.mxu0 %v1083
      %v1301 = vpop.f32.mrf.mxu0
      %v1302 = vadd.f32 0.0, %v1301
      %v1303 = vpop.f32.mrf.mxu0
      %v1304 = vadd.f32 0.0, %v1303
      %1305 = vmatprep.mubr.f32.mxu0 0.0
      %1306 = vmatmul.mubr.f32.gmra.mxu0 %v1086
      %v1307 = vpop.f32.mrf.mxu0
      %v1308 = vadd.f32 0.0, %v1307
      %v1309 = vpop.f32.mrf.mxu0
      %v1310 = vadd.f32 0.0, %v1309
      %1311 = vmatprep.mubr.f32.mxu0 0.0
      %1312 = vmatmul.mubr.f32.gmra.mxu0 %v1089
      %v1313 = vpop.f32.mrf.mxu0
      %v1314 = vadd.f32 0.0, %v1313
      %v1315 = vpop.f32.mrf.mxu0
      %v1316 = vadd.f32 0.0, %v1315
      %1317 = vmatprep.mubr.f32.mxu0 0.0
      %1318 = vmatmul.mubr.f32.gmra.mxu0 %v1092
      %v1319 = vpop.f32.mrf.mxu0
      %v1320 = vadd.f32 0.0, %v1319
      %v1321 = vpop.f32.mrf.mxu0
      %v1322 = vadd.f32 0.0, %v1321
      %1323 = vmatprep.mubr.f32.mxu0 0.0
      %1324 = vmatmul.mubr.f32.gmra.mxu0 %v1095
      %v1325 = vpop.f32.mrf.mxu0
      %v1326 = vadd.f32 0.0, %v1325
      %v1327 = vpop.f32.mrf.mxu0
      %v1328 = vadd.f32 0.0, %v1327
      %1329 = vmatprep.mubr.f32.mxu0 0.0
      %1330 = vmatmul.mubr.f32.gmra.mxu0 %v1098
      %v1331 = vpop.f32.mrf.mxu0
      %v1332 = vadd.f32 0.0, %v1331
      %v1333 = vpop.f32.mrf.mxu0
      %v1334 = vadd.f32 0.0, %v1333
      %1335 = vmatprep.mubr.f32.mxu0 0.0
      %1336 = vmatmul.mubr.f32.gmra.mxu0 %v1101
      %v1337 = vpop.f32.mrf.mxu0
      %v1338 = vadd.f32 0.0, %v1337
      %v1339 = vpop.f32.mrf.mxu0
      %v1340 = vadd.f32 0.0, %v1339
      %1341 = vmatprep.mubr.f32.mxu0 0.0
      %1342 = vmatmul.mubr.f32.gmra.mxu0 %v1104
      %v1343 = vpop.f32.mrf.mxu0
      %v1344 = vadd.f32 0.0, %v1343
      %v1345 = vpop.f32.mrf.mxu0
      %v1346 = vadd.f32 0.0, %v1345
      %1347 = vmatprep.mubr.f32.mxu0 0.0
      %1348 = vmatmul.mubr.f32.gmra.mxu0 %v1107
      %v1349 = vpop.f32.mrf.mxu0
      %v1350 = vadd.f32 0.0, %v1349
      %v1351 = vpop.f32.mrf.mxu0
      %v1352 = vadd.f32 0.0, %v1351
      %1353 = vmatprep.mubr.f32.mxu0 0.0
      %1354 = vmatmul.mubr.f32.gmra.mxu0 %v1110
      %v1355 = vpop.f32.mrf.mxu0
      %v1356 = vadd.f32 0.0, %v1355
      %v1357 = vpop.f32.mrf.mxu0
      %v1358 = vadd.f32 0.0, %v1357
      %1359 = vmatprep.mubr.f32.mxu0 0.0
      %1360 = vmatmul.mubr.f32.gmra.mxu0 %v1113
      %v1361 = vpop.f32.mrf.mxu0
      %v1362 = vadd.f32 0.0, %v1361
      %v1363 = vpop.f32.mrf.mxu0
      %v1364 = vadd.f32 0.0, %v1363
      %1365 = vmatprep.mubr.f32.mxu0 0.0
      %1366 = vmatmul.mubr.f32.gmra.mxu0 %v1116
      %v1367 = vpop.f32.mrf.mxu0
      %v1368 = vadd.f32 0.0, %v1367
      %v1369 = vpop.f32.mrf.mxu0
      %v1370 = vadd.f32 0.0, %v1369
      %1371 = vmatprep.mubr.f32.mxu0 0.0
      %1372 = vmatmul.mubr.f32.gmra.mxu0 %v1119
      %v1373 = vpop.f32.mrf.mxu0
      %v1374 = vadd.f32 0.0, %v1373
      %v1375 = vpop.f32.mrf.mxu0
      %v1376 = vadd.f32 0.0, %v1375
      %1377 = vdwg.mxu0
      %v1378 = vmax.f32 %v1188, %v1190
      %1379 = vmax.xlane.f32.xlu0 %v1378
      %v1380 = vpop.xlane.xlu0 %1379
      %v1381 = vmax.f32 %v1194, %v1196
      %1382 = vmax.xlane.f32.xlu0 %v1381
      %v1383 = vpop.xlane.xlu0 %1382
      %v1384 = vmax.f32 %v1200, %v1202
      %1385 = vmax.xlane.f32.xlu0 %v1384
      %v1386 = vpop.xlane.xlu0 %1385
      %v1387 = vmax.f32 %v1206, %v1208
      %1388 = vmax.xlane.f32.xlu0 %v1387
      %v1389 = vpop.xlane.xlu0 %1388
      %v1390 = vmax.f32 %v1212, %v1214
      %1391 = vmax.xlane.f32.xlu0 %v1390
      %v1392 = vpop.xlane.xlu0 %1391
      %v1393 = vmax.f32 %v1218, %v1220
      %1394 = vmax.xlane.f32.xlu0 %v1393
      %v1395 = vpop.xlane.xlu0 %1394
      %v1396 = vmax.f32 %v1224, %v1226
      %1397 = vmax.xlane.f32.xlu0 %v1396
      %v1398 = vpop.xlane.xlu0 %1397
      %v1399 = vmax.f32 %v1230, %v1232
      %1400 = vmax.xlane.f32.xlu0 %v1399
      %v1401 = vpop.xlane.xlu0 %1400
      %v1402 = vmax.f32 %v1236, %v1238
      %1403 = vmax.xlane.f32.xlu0 %v1402
      %v1404 = vpop.xlane.xlu0 %1403
      %v1405 = vmax.f32 %v1242, %v1244
      %1406 = vmax.xlane.f32.xlu0 %v1405
      %v1407 = vpop.xlane.xlu0 %1406
      %v1408 = vmax.f32 %v1248, %v1250
      %1409 = vmax.xlane.f32.xlu0 %v1408
      %v1410 = vpop.xlane.xlu0 %1409
      %v1411 = vmax.f32 %v1254, %v1256
      %1412 = vmax.xlane.f32.xlu0 %v1411
      %v1413 = vpop.xlane.xlu0 %1412
      %v1414 = vmax.f32 %v1260, %v1262
      %1415 = vmax.xlane.f32.xlu0 %v1414
      %v1416 = vpop.xlane.xlu0 %1415
      %v1417 = vmax.f32 %v1266, %v1268
      %1418 = vmax.xlane.f32.xlu0 %v1417
      %v1419 = vpop.xlane.xlu0 %1418
      %v1420 = vmax.f32 %v1272, %v1274
      %1421 = vmax.xlane.f32.xlu0 %v1420
      %v1422 = vpop.xlane.xlu0 %1421
      %v1423 = vmax.f32 %v1278, %v1280
      %1424 = vmax.xlane.f32.xlu0 %v1423
      %v1425 = vpop.xlane.xlu0 %1424
      %v1426 = vmax.f32 %v1284, %v1286
      %1427 = vmax.xlane.f32.xlu0 %v1426
      %v1428 = vpop.xlane.xlu0 %1427
      %v1429 = vmax.f32 %v1290, %v1292
      %1430 = vmax.xlane.f32.xlu0 %v1429
      %v1431 = vpop.xlane.xlu0 %1430
      %v1432 = vmax.f32 %v1296, %v1298
      %1433 = vmax.xlane.f32.xlu0 %v1432
      %v1434 = vpop.xlane.xlu0 %1433
      %v1435 = vmax.f32 %v1302, %v1304
      %1436 = vmax.xlane.f32.xlu0 %v1435
      %v1437 = vpop.xlane.xlu0 %1436
      %v1438 = vmax.f32 %v1308, %v1310
      %1439 = vmax.xlane.f32.xlu0 %v1438
      %v1440 = vpop.xlane.xlu0 %1439
      %v1441 = vmax.f32 %v1314, %v1316
      %1442 = vmax.xlane.f32.xlu0 %v1441
      %v1443 = vpop.xlane.xlu0 %1442
      %v1444 = vmax.f32 %v1320, %v1322
      %1445 = vmax.xlane.f32.xlu0 %v1444
      %v1446 = vpop.xlane.xlu0 %1445
      %v1447 = vmax.f32 %v1326, %v1328
      %1448 = vmax.xlane.f32.xlu0 %v1447
      %v1449 = vpop.xlane.xlu0 %1448
      %v1450 = vmax.f32 %v1332, %v1334
      %1451 = vmax.xlane.f32.xlu0 %v1450
      %v1452 = vpop.xlane.xlu0 %1451
      %v1453 = vmax.f32 %v1338, %v1340
      %1454 = vmax.xlane.f32.xlu0 %v1453
      %v1455 = vpop.xlane.xlu0 %1454
      %v1456 = vmax.f32 %v1344, %v1346
      %1457 = vmax.xlane.f32.xlu0 %v1456
      %v1458 = vpop.xlane.xlu0 %1457
      %v1459 = vmax.f32 %v1350, %v1352
      %1460 = vmax.xlane.f32.xlu0 %v1459
      %v1461 = vpop.xlane.xlu0 %1460
      %v1462 = vmax.f32 %v1356, %v1358
      %1463 = vmax.xlane.f32.xlu0 %v1462
      %v1464 = vpop.xlane.xlu0 %1463
      %v1465 = vmax.f32 %v1362, %v1364
      %1466 = vmax.xlane.f32.xlu0 %v1465
      %v1467 = vpop.xlane.xlu0 %1466
      %v1468 = vmax.f32 %v1368, %v1370
      %1469 = vmax.xlane.f32.xlu0 %v1468
      %v1470 = vpop.xlane.xlu0 %1469
      %v1471 = vmax.f32 %v1374, %v1376
      %1472 = vmax.xlane.f32.xlu0 %v1471
      %v1473 = vpop.xlane.xlu0 %1472
      %v1474 = vsub.f32 %v1188, %v1380
      %v1475 = vsub.f32 %v1190, %v1380
      %v1476 = vsub.f32 %v1194, %v1383
      %v1477 = vsub.f32 %v1196, %v1383
      %v1478 = vsub.f32 %v1200, %v1386
      %v1479 = vsub.f32 %v1202, %v1386
      %v1480 = vsub.f32 %v1206, %v1389
      %v1481 = vsub.f32 %v1208, %v1389
      %v1482 = vsub.f32 %v1212, %v1392
      %v1483 = vsub.f32 %v1214, %v1392
      %v1484 = vsub.f32 %v1218, %v1395
      %v1485 = vsub.f32 %v1220, %v1395
      %v1486 = vsub.f32 %v1224, %v1398
      %v1487 = vsub.f32 %v1226, %v1398
      %v1488 = vsub.f32 %v1230, %v1401
      %v1489 = vsub.f32 %v1232, %v1401
      %v1490 = vsub.f32 %v1236, %v1404
      %v1491 = vsub.f32 %v1238, %v1404
      %v1492 = vsub.f32 %v1242, %v1407
      %v1493 = vsub.f32 %v1244, %v1407
      %v1494 = vsub.f32 %v1248, %v1410
      %v1495 = vsub.f32 %v1250, %v1410
      %v1496 = vsub.f32 %v1254, %v1413
      %v1497 = vsub.f32 %v1256, %v1413
      %v1498 = vsub.f32 %v1260, %v1416
      %v1499 = vsub.f32 %v1262, %v1416
      %v1500 = vsub.f32 %v1266, %v1419
      %v1501 = vsub.f32 %v1268, %v1419
      %v1502 = vsub.f32 %v1272, %v1422
      %v1503 = vsub.f32 %v1274, %v1422
      %v1504 = vsub.f32 %v1278, %v1425
      %v1505 = vsub.f32 %v1280, %v1425
      %v1506 = vsub.f32 %v1284, %v1428
      %v1507 = vsub.f32 %v1286, %v1428
      %v1508 = vsub.f32 %v1290, %v1431
      %v1509 = vsub.f32 %v1292, %v1431
      %v1510 = vsub.f32 %v1296, %v1434
      %v1511 = vsub.f32 %v1298, %v1434
      %v1512 = vsub.f32 %v1302, %v1437
      %v1513 = vsub.f32 %v1304, %v1437
      %v1514 = vsub.f32 %v1308, %v1440
      %v1515 = vsub.f32 %v1310, %v1440
      %v1516 = vsub.f32 %v1314, %v1443
      %v1517 = vsub.f32 %v1316, %v1443
      %v1518 = vsub.f32 %v1320, %v1446
      %v1519 = vsub.f32 %v1322, %v1446
      %v1520 = vsub.f32 %v1326, %v1449
      %v1521 = vsub.f32 %v1328, %v1449
      %v1522 = vsub.f32 %v1332, %v1452
      %v1523 = vsub.f32 %v1334, %v1452
      %v1524 = vsub.f32 %v1338, %v1455
      %v1525 = vsub.f32 %v1340, %v1455
      %v1526 = vsub.f32 %v1344, %v1458
      %v1527 = vsub.f32 %v1346, %v1458
      %v1528 = vsub.f32 %v1350, %v1461
      %v1529 = vsub.f32 %v1352, %v1461
      %v1530 = vsub.f32 %v1356, %v1464
      %v1531 = vsub.f32 %v1358, %v1464
      %v1532 = vsub.f32 %v1362, %v1467
      %v1533 = vsub.f32 %v1364, %v1467
      %v1534 = vsub.f32 %v1368, %v1470
      %v1535 = vsub.f32 %v1370, %v1470
      %v1536 = vsub.f32 %v1374, %v1473
      %v1537 = vsub.f32 %v1376, %v1473
      %v1538 = vmul.f32 %v1474, 1.442695
      %v1539 = vpow.pop %v1538
      %v1540 = vmul.f32 %v1475, 1.442695
      %v1541 = vpow.pop %v1540
      %v1542 = vmul.f32 %v1476, 1.442695
      %v1543 = vpow.pop %v1542
      %v1544 = vmul.f32 %v1477, 1.442695
      %v1545 = vpow.pop %v1544
      %v1546 = vmul.f32 %v1478, 1.442695
      %v1547 = vpow.pop %v1546
      %v1548 = vmul.f32 %v1479, 1.442695
      %v1549 = vpow.pop %v1548
      %v1550 = vmul.f32 %v1480, 1.442695
      %v1551 = vpow.pop %v1550
      %v1552 = vmul.f32 %v1481, 1.442695
      %v1553 = vpow.pop %v1552
      %v1554 = vmul.f32 %v1482, 1.442695
      %v1555 = vpow.pop %v1554
      %v1556 = vmul.f32 %v1483, 1.442695
      %v1557 = vpow.pop %v1556
      %v1558 = vmul.f32 %v1484, 1.442695
      %v1559 = vpow.pop %v1558
      %v1560 = vmul.f32 %v1485, 1.442695
      %v1561 = vpow.pop %v1560
      %v1562 = vmul.f32 %v1486, 1.442695
      %v1563 = vpow.pop %v1562
      %v1564 = vmul.f32 %v1487, 1.442695
      %v1565 = vpow.pop %v1564
      %v1566 = vmul.f32 %v1488, 1.442695
      %v1567 = vpow.pop %v1566
      %v1568 = vmul.f32 %v1489, 1.442695
      %v1569 = vpow.pop %v1568
      %v1570 = vmul.f32 %v1490, 1.442695
      %v1571 = vpow.pop %v1570
      %v1572 = vmul.f32 %v1491, 1.442695
      %v1573 = vpow.pop %v1572
      %v1574 = vmul.f32 %v1492, 1.442695
      %v1575 = vpow.pop %v1574
      %v1576 = vmul.f32 %v1493, 1.442695
      %v1577 = vpow.pop %v1576
      %v1578 = vmul.f32 %v1494, 1.442695
      %v1579 = vpow.pop %v1578
      %v1580 = vmul.f32 %v1495, 1.442695
      %v1581 = vpow.pop %v1580
      %v1582 = vmul.f32 %v1496, 1.442695
      %v1583 = vpow.pop %v1582
      %v1584 = vmul.f32 %v1497, 1.442695
      %v1585 = vpow.pop %v1584
      %v1586 = vmul.f32 %v1498, 1.442695
      %v1587 = vpow.pop %v1586
      %v1588 = vmul.f32 %v1499, 1.442695
      %v1589 = vpow.pop %v1588
      %v1590 = vmul.f32 %v1500, 1.442695
      %v1591 = vpow.pop %v1590
      %v1592 = vmul.f32 %v1501, 1.442695
      %v1593 = vpow.pop %v1592
      %v1594 = vmul.f32 %v1502, 1.442695
      %v1595 = vpow.pop %v1594
      %v1596 = vmul.f32 %v1503, 1.442695
      %v1597 = vpow.pop %v1596
      %v1598 = vmul.f32 %v1504, 1.442695
      %v1599 = vpow.pop %v1598
      %v1600 = vmul.f32 %v1505, 1.442695
      %v1601 = vpow.pop %v1600
      %v1602 = vmul.f32 %v1506, 1.442695
      %v1603 = vpow.pop %v1602
      %v1604 = vmul.f32 %v1507, 1.442695
      %v1605 = vpow.pop %v1604
      %v1606 = vmul.f32 %v1508, 1.442695
      %v1607 = vpow.pop %v1606
      %v1608 = vmul.f32 %v1509, 1.442695
      %v1609 = vpow.pop %v1608
      %v1610 = vmul.f32 %v1510, 1.442695
      %v1611 = vpow.pop %v1610
      %v1612 = vmul.f32 %v1511, 1.442695
      %v1613 = vpow.pop %v1612
      %v1614 = vmul.f32 %v1512, 1.442695
      %v1615 = vpow.pop %v1614
      %v1616 = vmul.f32 %v1513, 1.442695
      %v1617 = vpow.pop %v1616
      %v1618 = vmul.f32 %v1514, 1.442695
      %v1619 = vpow.pop %v1618
      %v1620 = vmul.f32 %v1515, 1.442695
      %v1621 = vpow.pop %v1620
      %v1622 = vmul.f32 %v1516, 1.442695
      %v1623 = vpow.pop %v1622
      %v1624 = vmul.f32 %v1517, 1.442695
      %v1625 = vpow.pop %v1624
      %v1626 = vmul.f32 %v1518, 1.442695
      %v1627 = vpow.pop %v1626
      %v1628 = vmul.f32 %v1519, 1.442695
      %v1629 = vpow.pop %v1628
      %v1630 = vmul.f32 %v1520, 1.442695
      %v1631 = vpow.pop %v1630
      %v1632 = vmul.f32 %v1521, 1.442695
      %v1633 = vpow.pop %v1632
      %v1634 = vmul.f32 %v1522, 1.442695
      %v1635 = vpow.pop %v1634
      %v1636 = vmul.f32 %v1523, 1.442695
      %v1637 = vpow.pop %v1636
      %v1638 = vmul.f32 %v1524, 1.442695
      %v1639 = vpow.pop %v1638
      %v1640 = vmul.f32 %v1525, 1.442695
      %v1641 = vpow.pop %v1640
      %v1642 = vmul.f32 %v1526, 1.442695
      %v1643 = vpow.pop %v1642
      %v1644 = vmul.f32 %v1527, 1.442695
      %v1645 = vpow.pop %v1644
      %v1646 = vmul.f32 %v1528, 1.442695
      %v1647 = vpow.pop %v1646
      %v1648 = vmul.f32 %v1529, 1.442695
      %v1649 = vpow.pop %v1648
      %v1650 = vmul.f32 %v1530, 1.442695
      %v1651 = vpow.pop %v1650
      %v1652 = vmul.f32 %v1531, 1.442695
      %v1653 = vpow.pop %v1652
      %v1654 = vmul.f32 %v1532, 1.442695
      %v1655 = vpow.pop %v1654
      %v1656 = vmul.f32 %v1533, 1.442695
      %v1657 = vpow.pop %v1656
      %v1658 = vmul.f32 %v1534, 1.442695
      %v1659 = vpow.pop %v1658
      %v1660 = vmul.f32 %v1535, 1.442695
      %v1661 = vpow.pop %v1660
      %v1662 = vmul.f32 %v1536, 1.442695
      %v1663 = vpow.pop %v1662
      %v1664 = vmul.f32 %v1537, 1.442695
      %v1665 = vpow.pop %v1664
      %v1666 = vadd.f32 %v1539, %v1541
      %1667 = vadd.xlane.f32.xlu0 %v1666
      %v1668 = vpop.xlane.xlu0 %1667
      %v1669 = vadd.f32 %v1543, %v1545
      %1670 = vadd.xlane.f32.xlu0 %v1669
      %v1671 = vpop.xlane.xlu0 %1670
      %v1672 = vadd.f32 %v1547, %v1549
      %1673 = vadd.xlane.f32.xlu0 %v1672
      %v1674 = vpop.xlane.xlu0 %1673
      %v1675 = vadd.f32 %v1551, %v1553
      %1676 = vadd.xlane.f32.xlu0 %v1675
      %v1677 = vpop.xlane.xlu0 %1676
      %v1678 = vadd.f32 %v1555, %v1557
      %1679 = vadd.xlane.f32.xlu0 %v1678
      %v1680 = vpop.xlane.xlu0 %1679
      %v1681 = vadd.f32 %v1559, %v1561
      %1682 = vadd.xlane.f32.xlu0 %v1681
      %v1683 = vpop.xlane.xlu0 %1682
      %v1684 = vadd.f32 %v1563, %v1565
      %1685 = vadd.xlane.f32.xlu0 %v1684
      %v1686 = vpop.xlane.xlu0 %1685
      %v1687 = vadd.f32 %v1567, %v1569
      %1688 = vadd.xlane.f32.xlu0 %v1687
      %v1689 = vpop.xlane.xlu0 %1688
      %v1690 = vadd.f32 %v1571, %v1573
      %1691 = vadd.xlane.f32.xlu0 %v1690
      %v1692 = vpop.xlane.xlu0 %1691
      %v1693 = vadd.f32 %v1575, %v1577
      %1694 = vadd.xlane.f32.xlu0 %v1693
      %v1695 = vpop.xlane.xlu0 %1694
      %v1696 = vadd.f32 %v1579, %v1581
      %1697 = vadd.xlane.f32.xlu0 %v1696
      %v1698 = vpop.xlane.xlu0 %1697
      %v1699 = vadd.f32 %v1583, %v1585
      %1700 = vadd.xlane.f32.xlu0 %v1699
      %v1701 = vpop.xlane.xlu0 %1700
      %v1702 = vadd.f32 %v1587, %v1589
      %1703 = vadd.xlane.f32.xlu0 %v1702
      %v1704 = vpop.xlane.xlu0 %1703
      %v1705 = vadd.f32 %v1591, %v1593
      %1706 = vadd.xlane.f32.xlu0 %v1705
      %v1707 = vpop.xlane.xlu0 %1706
      %v1708 = vadd.f32 %v1595, %v1597
      %1709 = vadd.xlane.f32.xlu0 %v1708
      %v1710 = vpop.xlane.xlu0 %1709
      %v1711 = vadd.f32 %v1599, %v1601
      %1712 = vadd.xlane.f32.xlu0 %v1711
      %v1713 = vpop.xlane.xlu0 %1712
      %v1714 = vadd.f32 %v1603, %v1605
      %1715 = vadd.xlane.f32.xlu0 %v1714
      %v1716 = vpop.xlane.xlu0 %1715
      %v1717 = vadd.f32 %v1607, %v1609
      %1718 = vadd.xlane.f32.xlu0 %v1717
      %v1719 = vpop.xlane.xlu0 %1718
      %v1720 = vadd.f32 %v1611, %v1613
      %1721 = vadd.xlane.f32.xlu0 %v1720
      %v1722 = vpop.xlane.xlu0 %1721
      %v1723 = vadd.f32 %v1615, %v1617
      %1724 = vadd.xlane.f32.xlu0 %v1723
      %v1725 = vpop.xlane.xlu0 %1724
      %v1726 = vadd.f32 %v1619, %v1621
      %1727 = vadd.xlane.f32.xlu0 %v1726
      %v1728 = vpop.xlane.xlu0 %1727
      %v1729 = vadd.f32 %v1623, %v1625
      %1730 = vadd.xlane.f32.xlu0 %v1729
      %v1731 = vpop.xlane.xlu0 %1730
      %v1732 = vadd.f32 %v1627, %v1629
      %1733 = vadd.xlane.f32.xlu0 %v1732
      %v1734 = vpop.xlane.xlu0 %1733
      %v1735 = vadd.f32 %v1631, %v1633
      %1736 = vadd.xlane.f32.xlu0 %v1735
      %v1737 = vpop.xlane.xlu0 %1736
      %v1738 = vadd.f32 %v1635, %v1637
      %1739 = vadd.xlane.f32.xlu0 %v1738
      %v1740 = vpop.xlane.xlu0 %1739
      %v1741 = vadd.f32 %v1639, %v1641
      %1742 = vadd.xlane.f32.xlu0 %v1741
      %v1743 = vpop.xlane.xlu0 %1742
      %v1744 = vadd.f32 %v1643, %v1645
      %1745 = vadd.xlane.f32.xlu0 %v1744
      %v1746 = vpop.xlane.xlu0 %1745
      %v1747 = vadd.f32 %v1647, %v1649
      %1748 = vadd.xlane.f32.xlu0 %v1747
      %v1749 = vpop.xlane.xlu0 %1748
      %v1750 = vadd.f32 %v1651, %v1653
      %1751 = vadd.xlane.f32.xlu0 %v1750
      %v1752 = vpop.xlane.xlu0 %1751
      %v1753 = vadd.f32 %v1655, %v1657
      %1754 = vadd.xlane.f32.xlu0 %v1753
      %v1755 = vpop.xlane.xlu0 %1754
      %v1756 = vadd.f32 %v1659, %v1661
      %1757 = vadd.xlane.f32.xlu0 %v1756
      %v1758 = vpop.xlane.xlu0 %1757
      %v1759 = vadd.f32 %v1663, %v1665
      %1760 = vadd.xlane.f32.xlu0 %v1759
      %v1761 = vpop.xlane.xlu0 %1760
      %v1762 = vrcp.pop %v1668
      %v1763 = vrcp.pop %v1671
      %v1764 = vrcp.pop %v1674
      %v1765 = vrcp.pop %v1677
      %v1766 = vrcp.pop %v1680
      %v1767 = vrcp.pop %v1683
      %v1768 = vrcp.pop %v1686
      %v1769 = vrcp.pop %v1689
      %v1770 = vrcp.pop %v1692
      %v1771 = vrcp.pop %v1695
      %v1772 = vrcp.pop %v1698
      %v1773 = vrcp.pop %v1701
      %v1774 = vrcp.pop %v1704
      %v1775 = vrcp.pop %v1707
      %v1776 = vrcp.pop %v1710
      %v1777 = vrcp.pop %v1713
      %v1778 = vrcp.pop %v1716
      %v1779 = vrcp.pop %v1719
      %v1780 = vrcp.pop %v1722
      %v1781 = vrcp.pop %v1725
      %v1782 = vrcp.pop %v1728
      %v1783 = vrcp.pop %v1731
      %v1784 = vrcp.pop %v1734
      %v1785 = vrcp.pop %v1737
      %v1786 = vrcp.pop %v1740
      %v1787 = vrcp.pop %v1743
      %v1788 = vrcp.pop %v1746
      %v1789 = vrcp.pop %v1749
      %v1790 = vrcp.pop %v1752
      %v1791 = vrcp.pop %v1755
      %v1792 = vrcp.pop %v1758
      %v1793 = vrcp.pop %v1761
      %v1794 = vmul.f32 %v1539, %v1762
      %v1795 = vmul.f32 %v1541, %v1762
      %v1796 = vmul.f32 %v1543, %v1763
      %v1797 = vmul.f32 %v1545, %v1763
      %v1798 = vmul.f32 %v1547, %v1764
      %v1799 = vmul.f32 %v1549, %v1764
      %v1800 = vmul.f32 %v1551, %v1765
      %v1801 = vmul.f32 %v1553, %v1765
      %v1802 = vmul.f32 %v1555, %v1766
      %v1803 = vmul.f32 %v1557, %v1766
      %v1804 = vmul.f32 %v1559, %v1767
      %v1805 = vmul.f32 %v1561, %v1767
      %v1806 = vmul.f32 %v1563, %v1768
      %v1807 = vmul.f32 %v1565, %v1768
      %v1808 = vmul.f32 %v1567, %v1769
      %v1809 = vmul.f32 %v1569, %v1769
      %v1810 = vmul.f32 %v1571, %v1770
      %v1811 = vmul.f32 %v1573, %v1770
      %v1812 = vmul.f32 %v1575, %v1771
      %v1813 = vmul.f32 %v1577, %v1771
      %v1814 = vmul.f32 %v1579, %v1772
      %v1815 = vmul.f32 %v1581, %v1772
      %v1816 = vmul.f32 %v1583, %v1773
      %v1817 = vmul.f32 %v1585, %v1773
      %v1818 = vmul.f32 %v1587, %v1774
      %v1819 = vmul.f32 %v1589, %v1774
      %v1820 = vmul.f32 %v1591, %v1775
      %v1821 = vmul.f32 %v1593, %v1775
      %v1822 = vmul.f32 %v1595, %v1776
      %v1823 = vmul.f32 %v1597, %v1776
      %v1824 = vmul.f32 %v1599, %v1777
      %v1825 = vmul.f32 %v1601, %v1777
      %v1826 = vmul.f32 %v1603, %v1778
      %v1827 = vmul.f32 %v1605, %v1778
      %v1828 = vmul.f32 %v1607, %v1779
      %v1829 = vmul.f32 %v1609, %v1779
      %v1830 = vmul.f32 %v1611, %v1780
      %v1831 = vmul.f32 %v1613, %v1780
      %v1832 = vmul.f32 %v1615, %v1781
      %v1833 = vmul.f32 %v1617, %v1781
      %v1834 = vmul.f32 %v1619, %v1782
      %v1835 = vmul.f32 %v1621, %v1782
      %v1836 = vmul.f32 %v1623, %v1783
      %v1837 = vmul.f32 %v1625, %v1783
      %v1838 = vmul.f32 %v1627, %v1784
      %v1839 = vmul.f32 %v1629, %v1784
      %v1840 = vmul.f32 %v1631, %v1785
      %v1841 = vmul.f32 %v1633, %v1785
      %v1842 = vmul.f32 %v1635, %v1786
      %v1843 = vmul.f32 %v1637, %v1786
      %v1844 = vmul.f32 %v1639, %v1787
      %v1845 = vmul.f32 %v1641, %v1787
      %v1846 = vmul.f32 %v1643, %v1788
      %v1847 = vmul.f32 %v1645, %v1788
      %v1848 = vmul.f32 %v1647, %v1789
      %v1849 = vmul.f32 %v1649, %v1789
      %v1850 = vmul.f32 %v1651, %v1790
      %v1851 = vmul.f32 %v1653, %v1790
      %v1852 = vmul.f32 %v1655, %v1791
      %v1853 = vmul.f32 %v1657, %v1791
      %v1854 = vmul.f32 %v1659, %v1792
      %v1855 = vmul.f32 %v1661, %v1792
      %v1856 = vmul.f32 %v1663, %v1793
      %v1857 = vmul.f32 %v1665, %v1793
      %v1858 = vld [vmem:[%s2] sm:$0xff]
      %v1859 = vld [vmem:[%s2 + $0x8] sm:$0xff]
      %v1860 = vld [vmem:[%s2 + $0x10] sm:$0xff]
      %v1861 = vld [vmem:[%s2 + $0x18] sm:$0xff]
      %v1862 = vld [vmem:[%s2 + $0x20] sm:$0xff]
      %v1863 = vld [vmem:[%s2 + $0x28] sm:$0xff]
      %v1864 = vld [vmem:[%s2 + $0x30] sm:$0xff]
      %v1865 = vld [vmem:[%s2 + $0x38] sm:$0xff]
      %1866 = vmatprep.subr.mxu0 %v1825
      %1867 = vmatpush1.msra.mxu0 %v1824
      %1868 = vmatprep.subr.mxu0 %v1823
      %1869 = vmatpush1.msra.mxu0 %v1822
      %1870 = vmatprep.subr.mxu0 %v1821
      %1871 = vmatpush1.msra.mxu0 %v1820
      %1872 = vmatprep.subr.mxu0 %v1819
      %1873 = vmatpush1.msra.mxu0 %v1818
      %1874 = vmatprep.subr.mxu0 %v1817
      %1875 = vmatpush1.msra.mxu0 %v1816
      %1876 = vmatprep.subr.mxu0 %v1815
      %1877 = vmatpush1.msra.mxu0 %v1814
      %1878 = vmatprep.subr.mxu0 %v1813
      %1879 = vmatpush1.msra.mxu0 %v1812
      %1880 = vmatprep.subr.mxu0 %v1811
      %1881 = vmatpush1.msra.mxu0 %v1810
      %1882 = vmatprep.subr.mxu0 %v1809
      %1883 = vmatpush1.msra.mxu0 %v1808
      %1884 = vmatprep.subr.mxu0 %v1807
      %1885 = vmatpush1.msra.mxu0 %v1806
      %1886 = vmatprep.subr.mxu0 %v1805
      %1887 = vmatpush1.msra.mxu0 %v1804
      %1888 = vmatprep.subr.mxu0 %v1803
      %1889 = vmatpush1.msra.mxu0 %v1802
      %1890 = vmatprep.subr.mxu0 %v1801
      %1891 = vmatpush1.msra.mxu0 %v1800
      %1892 = vmatprep.subr.mxu0 %v1799
      %1893 = vmatpush1.msra.mxu0 %v1798
      %1894 = vmatprep.subr.mxu0 %v1797
      %1895 = vmatpush1.msra.mxu0 %v1796
      %1896 = vmatprep.subr.mxu0 %v1795
      %1897 = vmatpush1.msra.mxu0 %v1794
      %1898 = vmatprep.subr.mxu0 %v1857
      %1899 = vmatpush2.msra.mxu0 %v1856
      %1900 = vmatprep.subr.mxu0 %v1855
      %1901 = vmatpush2.msra.mxu0 %v1854
      %1902 = vmatprep.subr.mxu0 %v1853
      %1903 = vmatpush2.msra.mxu0 %v1852
      %1904 = vmatprep.subr.mxu0 %v1851
      %1905 = vmatpush2.msra.mxu0 %v1850
      %1906 = vmatprep.subr.mxu0 %v1849
      %1907 = vmatpush2.msra.mxu0 %v1848
      %1908 = vmatprep.subr.mxu0 %v1847
      %1909 = vmatpush2.msra.mxu0 %v1846
      %1910 = vmatprep.subr.mxu0 %v1845
      %1911 = vmatpush2.msra.mxu0 %v1844
      %1912 = vmatprep.subr.mxu0 %v1843
      %1913 = vmatpush2.msra.mxu0 %v1842
      %1914 = vmatprep.subr.mxu0 %v1841
      %1915 = vmatpush2.msra.mxu0 %v1840
      %1916 = vmatprep.subr.mxu0 %v1839
      %1917 = vmatpush2.msra.mxu0 %v1838
      %1918 = vmatprep.subr.mxu0 %v1837
      %1919 = vmatpush2.msra.mxu0 %v1836
      %1920 = vmatprep.subr.mxu0 %v1835
      %1921 = vmatpush2.msra.mxu0 %v1834
      %1922 = vmatprep.subr.mxu0 %v1833
      %1923 = vmatpush2.msra.mxu0 %v1832
      %1924 = vmatprep.subr.mxu0 %v1831
      %1925 = vmatpush2.msra.mxu0 %v1830
      %1926 = vmatprep.subr.mxu0 %v1829
      %1927 = vmatpush2.msra.mxu0 %v1828
      %1928 = vmatprep.subr.mxu0 %v1827
      %1929 = vmatpush2.msra.mxu0 %v1826
      %1930 = vmatprep.mubr.f32.mxu0 %v1859
      %1931 = vmatmul.mubr.f32.gmra.mxu0 %v1858
      %v1932 = vpop.f32.mrf.mxu0
      %v1933 = vadd.f32 0.0, %v1932
      %v1934 = vpop.f32.mrf.mxu0
      %v1935 = vadd.f32 0.0, %v1934
      %1936 = vmatprep.mubr.f32.mxu0 %v1861
      %1937 = vmatmul.mubr.f32.gmra.mxu0 %v1860
      %v1938 = vpop.f32.mrf.mxu0
      %v1939 = vadd.f32 0.0, %v1938
      %v1940 = vpop.f32.mrf.mxu0
      %v1941 = vadd.f32 0.0, %v1940
      %1942 = vmatprep.mubr.f32.mxu0 %v1863
      %1943 = vmatmul.mubr.f32.gmra.mxu0 %v1862
      %v1944 = vpop.f32.mrf.mxu0
      %v1945 = vadd.f32 0.0, %v1944
      %v1946 = vpop.f32.mrf.mxu0
      %v1947 = vadd.f32 0.0, %v1946
      %1948 = vmatprep.mubr.f32.mxu0 %v1865
      %1949 = vmatmul.mubr.f32.gmra.mxu0 %v1864
      %v1950 = vpop.f32.mrf.mxu0
      %v1951 = vadd.f32 0.0, %v1950
      %v1952 = vpop.f32.mrf.mxu0
      %v1953 = vadd.f32 0.0, %v1952
      %1954 = vdwg.mxu0
      %v1955 = vld [vmem:[#allocation2 + $0x140] sm:$0xff]
      %v1956 = vld [vmem:[#allocation2 + $0x148] sm:$0xff]
      %v1957 = vld [vmem:[#allocation2 + $0x150] sm:$0xff]
      %v1958 = vld [vmem:[#allocation2 + $0x158] sm:$0xff]
      %v1959 = vld [vmem:[#allocation2 + $0x160] sm:$0xff]
      %v1960 = vld [vmem:[#allocation2 + $0x168] sm:$0xff]
      %v1961 = vld [vmem:[#allocation2 + $0x170] sm:$0xff]
      %v1962 = vld [vmem:[#allocation2 + $0x178] sm:$0xff]
      %v1963 = vld [vmem:[#allocation2 + $0x240] sm:$0xff]
      %v1964 = vld [vmem:[#allocation2 + $0x248] sm:$0xff]
      %v1965 = vld [vmem:[#allocation2 + $0x250] sm:$0xff]
      %v1966 = vld [vmem:[#allocation2 + $0x258] sm:$0xff]
      %v1967 = vld [vmem:[#allocation2 + $0x260] sm:$0xff]
      %v1968 = vld [vmem:[#allocation2 + $0x268] sm:$0xff]
      %v1969 = vld [vmem:[#allocation2 + $0x270] sm:$0xff]
      %v1970 = vld [vmem:[#allocation2 + $0x278] sm:$0xff]
      %1971 = vrot.lane.b32.xlu0 %v976, 96
      %v1972 = vpop.permute.xlu0 %1971
      %1973 = vrot.lane.b32.xlu0 %v977, 96
      %v1974 = vpop.permute.xlu0 %1973
      %1975 = vrot.lane.b32.xlu0 %v978, 96
      %v1976 = vpop.permute.xlu0 %1975
      %1977 = vrot.lane.b32.xlu0 %v979, 96
      %v1978 = vpop.permute.xlu0 %1977
      %1979 = vrot.lane.b32.xlu0 %v980, 96
      %v1980 = vpop.permute.xlu0 %1979
      %1981 = vrot.lane.b32.xlu0 %v981, 96
      %v1982 = vpop.permute.xlu0 %1981
      %1983 = vrot.lane.b32.xlu0 %v982, 96
      %v1984 = vpop.permute.xlu0 %1983
      %1985 = vrot.lane.b32.xlu0 %v983, 96
      %v1986 = vpop.permute.xlu0 %1985
      %1987 = vrot.lane.b32.xlu0 %v984, 96
      %v1988 = vpop.permute.xlu0 %1987
      %1989 = vrot.lane.b32.xlu0 %v985, 96
      %v1990 = vpop.permute.xlu0 %1989
      %1991 = vrot.lane.b32.xlu0 %v986, 96
      %v1992 = vpop.permute.xlu0 %1991
      %1993 = vrot.lane.b32.xlu0 %v987, 96
      %v1994 = vpop.permute.xlu0 %1993
      %1995 = vrot.lane.b32.xlu0 %v988, 96
      %v1996 = vpop.permute.xlu0 %1995
      %1997 = vrot.lane.b32.xlu0 %v989, 96
      %v1998 = vpop.permute.xlu0 %1997
      %1999 = vrot.lane.b32.xlu0 %v990, 96
      %v2000 = vpop.permute.xlu0 %1999
      %2001 = vrot.lane.b32.xlu0 %v991, 96
      %v2002 = vpop.permute.xlu0 %2001
      %2003 = vrot.lane.b32.xlu0 %v992, 96
      %v2004 = vpop.permute.xlu0 %2003
      %2005 = vrot.lane.b32.xlu0 %v993, 96
      %v2006 = vpop.permute.xlu0 %2005
      %2007 = vrot.lane.b32.xlu0 %v994, 96
      %v2008 = vpop.permute.xlu0 %2007
      %2009 = vrot.lane.b32.xlu0 %v995, 96
      %v2010 = vpop.permute.xlu0 %2009
      %2011 = vrot.lane.b32.xlu0 %v996, 96
      %v2012 = vpop.permute.xlu0 %2011
      %2013 = vrot.lane.b32.xlu0 %v997, 96
      %v2014 = vpop.permute.xlu0 %2013
      %2015 = vrot.lane.b32.xlu0 %v998, 96
      %v2016 = vpop.permute.xlu0 %2015
      %2017 = vrot.lane.b32.xlu0 %v999, 96
      %v2018 = vpop.permute.xlu0 %2017
      %2019 = vrot.lane.b32.xlu0 %v1000, 96
      %v2020 = vpop.permute.xlu0 %2019
      %2021 = vrot.lane.b32.xlu0 %v1001, 96
      %v2022 = vpop.permute.xlu0 %2021
      %2023 = vrot.lane.b32.xlu0 %v1002, 96
      %v2024 = vpop.permute.xlu0 %2023
      %2025 = vrot.lane.b32.xlu0 %v1003, 96
      %v2026 = vpop.permute.xlu0 %2025
      %2027 = vrot.lane.b32.xlu0 %v1004, 96
      %v2028 = vpop.permute.xlu0 %2027
      %2029 = vrot.lane.b32.xlu0 %v1005, 96
      %v2030 = vpop.permute.xlu0 %2029
      %2031 = vrot.lane.b32.xlu0 %v1006, 96
      %v2032 = vpop.permute.xlu0 %2031
      %2033 = vrot.lane.b32.xlu0 %v1007, 96
      %v2034 = vpop.permute.xlu0 %2033
      %v2035 = vsel %vm1024, %v1972, 0
      %v2037 = vsel %vm1024, %v1974, 0
      %v2039 = vsel %vm1024, %v1976, 0
      %v2041 = vsel %vm1024, %v1978, 0
      %v2043 = vsel %vm1024, %v1980, 0
      %v2045 = vsel %vm1024, %v1982, 0
      %v2047 = vsel %vm1024, %v1984, 0
      %v2049 = vsel %vm1024, %v1986, 0
      %v2051 = vsel %vm1024, %v1988, 0
      %v2053 = vsel %vm1024, %v1990, 0
      %v2055 = vsel %vm1024, %v1992, 0
      %v2057 = vsel %vm1024, %v1994, 0
      %v2059 = vsel %vm1024, %v1996, 0
      %v2061 = vsel %vm1024, %v1998, 0
      %v2063 = vsel %vm1024, %v2000, 0
      %v2065 = vsel %vm1024, %v2002, 0
      %v2067 = vsel %vm1024, %v2004, 0
      %v2069 = vsel %vm1024, %v2006, 0
      %v2071 = vsel %vm1024, %v2008, 0
      %v2073 = vsel %vm1024, %v2010, 0
      %v2075 = vsel %vm1024, %v2012, 0
      %v2077 = vsel %vm1024, %v2014, 0
      %v2079 = vsel %vm1024, %v2016, 0
      %v2081 = vsel %vm1024, %v2018, 0
      %v2083 = vsel %vm1024, %v2020, 0
      %v2085 = vsel %vm1024, %v2022, 0
      %v2087 = vsel %vm1024, %v2024, 0
      %v2089 = vsel %vm1024, %v2026, 0
      %v2091 = vsel %vm1024, %v2028, 0
      %v2093 = vsel %vm1024, %v2030, 0
      %v2095 = vsel %vm1024, %v2032, 0
      %v2097 = vsel %vm1024, %v2034, 0
      %2099 = vmatprep.subr.mxu0 0.0
      %2100 = vmatpush1.msra.mxu0 0.0
      %2101 = vmatprep.subr.mxu0 0.0
      %2102 = vmatpush1.msra.mxu0 0.0
      %2103 = vmatprep.subr.mxu0 0.0
      %2104 = vmatpush1.msra.mxu0 0.0
      %2105 = vmatprep.subr.mxu0 0.0
      %2106 = vmatpush1.msra.mxu0 0.0
      %2107 = vmatprep.subr.mxu0 0.0
      %2108 = vmatpush1.msra.mxu0 0.0
      %2109 = vmatprep.subr.mxu0 0.0
      %2110 = vmatpush1.msra.mxu0 0.0
      %2111 = vmatprep.subr.mxu0 0.0
      %2112 = vmatpush1.msra.mxu0 0.0
      %2113 = vmatprep.subr.mxu0 0.0
      %2114 = vmatpush1.msra.mxu0 0.0
      %2115 = vmatprep.subr.mxu0 0.0
      %2116 = vmatpush1.msra.mxu0 0.0
      %2117 = vmatprep.subr.mxu0 0.0
      %2118 = vmatpush1.msra.mxu0 0.0
      %2119 = vmatprep.subr.mxu0 0.0
      %2120 = vmatpush1.msra.mxu0 0.0
      %2121 = vmatprep.subr.mxu0 0.0
      %2122 = vmatpush1.msra.mxu0 0.0
      %2123 = vmatprep.subr.mxu0 %v1962
      %2124 = vmatpush1.msra.mxu0 %v1961
      %2125 = vmatprep.subr.mxu0 %v1960
      %2126 = vmatpush1.msra.mxu0 %v1959
      %2127 = vmatprep.subr.mxu0 %v1958
      %2128 = vmatpush1.msra.mxu0 %v1957
      %2129 = vmatprep.subr.mxu0 %v1956
      %2130 = vmatpush1.msra.mxu0 %v1955
      %2131 = vmatprep.subr.mxu0 0.0
      %2132 = vmatpush2.msra.mxu0 0.0
      %2133 = vmatprep.subr.mxu0 0.0
      %2134 = vmatpush2.msra.mxu0 0.0
      %2135 = vmatprep.subr.mxu0 0.0
      %2136 = vmatpush2.msra.mxu0 0.0
      %2137 = vmatprep.subr.mxu0 0.0
      %2138 = vmatpush2.msra.mxu0 0.0
      %2139 = vmatprep.subr.mxu0 0.0
      %2140 = vmatpush2.msra.mxu0 0.0
      %2141 = vmatprep.subr.mxu0 0.0
      %2142 = vmatpush2.msra.mxu0 0.0
      %2143 = vmatprep.subr.mxu0 0.0
      %2144 = vmatpush2.msra.mxu0 0.0
      %2145 = vmatprep.subr.mxu0 0.0
      %2146 = vmatpush2.msra.mxu0 0.0
      %2147 = vmatprep.subr.mxu0 0.0
      %2148 = vmatpush2.msra.mxu0 0.0
      %2149 = vmatprep.subr.mxu0 0.0
      %2150 = vmatpush2.msra.mxu0 0.0
      %2151 = vmatprep.subr.mxu0 0.0
      %2152 = vmatpush2.msra.mxu0 0.0
      %2153 = vmatprep.subr.mxu0 0.0
      %2154 = vmatpush2.msra.mxu0 0.0
      %2155 = vmatprep.subr.mxu0 0.0
      %2156 = vmatpush2.msra.mxu0 0.0
      %2157 = vmatprep.subr.mxu0 0.0
      %2158 = vmatpush2.msra.mxu0 0.0
      %2159 = vmatprep.subr.mxu0 0.0
      %2160 = vmatpush2.msra.mxu0 0.0
      %2161 = vmatprep.subr.mxu0 0.0
      %2162 = vmatpush2.msra.mxu0 0.0
      %2163 = vmatprep.mubr.f32.mxu0 0.0
      %2164 = vmatmul.mubr.f32.gmra.mxu0 %v2035
      %v2165 = vpop.f32.mrf.mxu0
      %v2166 = vadd.f32 0.0, %v2165
      %v2167 = vpop.f32.mrf.mxu0
      %v2168 = vadd.f32 0.0, %v2167
      %2169 = vmatprep.mubr.f32.mxu0 0.0
      %2170 = vmatmul.mubr.f32.gmra.mxu0 %v2037
      %v2171 = vpop.f32.mrf.mxu0
      %v2172 = vadd.f32 0.0, %v2171
      %v2173 = vpop.f32.mrf.mxu0
      %v2174 = vadd.f32 0.0, %v2173
      %2175 = vmatprep.mubr.f32.mxu0 0.0
      %2176 = vmatmul.mubr.f32.gmra.mxu0 %v2039
      %v2177 = vpop.f32.mrf.mxu0
      %v2178 = vadd.f32 0.0, %v2177
      %v2179 = vpop.f32.mrf.mxu0
      %v2180 = vadd.f32 0.0, %v2179
      %2181 = vmatprep.mubr.f32.mxu0 0.0
      %2182 = vmatmul.mubr.f32.gmra.mxu0 %v2041
      %v2183 = vpop.f32.mrf.mxu0
      %v2184 = vadd.f32 0.0, %v2183
      %v2185 = vpop.f32.mrf.mxu0
      %v2186 = vadd.f32 0.0, %v2185
      %2187 = vmatprep.mubr.f32.mxu0 0.0
      %2188 = vmatmul.mubr.f32.gmra.mxu0 %v2043
      %v2189 = vpop.f32.mrf.mxu0
      %v2190 = vadd.f32 0.0, %v2189
      %v2191 = vpop.f32.mrf.mxu0
      %v2192 = vadd.f32 0.0, %v2191
      %2193 = vmatprep.mubr.f32.mxu0 0.0
      %2194 = vmatmul.mubr.f32.gmra.mxu0 %v2045
      %v2195 = vpop.f32.mrf.mxu0
      %v2196 = vadd.f32 0.0, %v2195
      %v2197 = vpop.f32.mrf.mxu0
      %v2198 = vadd.f32 0.0, %v2197
      %2199 = vmatprep.mubr.f32.mxu0 0.0
      %2200 = vmatmul.mubr.f32.gmra.mxu0 %v2047
      %v2201 = vpop.f32.mrf.mxu0
      %v2202 = vadd.f32 0.0, %v2201
      %v2203 = vpop.f32.mrf.mxu0
      %v2204 = vadd.f32 0.0, %v2203
      %2205 = vmatprep.mubr.f32.mxu0 0.0
      %2206 = vmatmul.mubr.f32.gmra.mxu0 %v2049
      %v2207 = vpop.f32.mrf.mxu0
      %v2208 = vadd.f32 0.0, %v2207
      %v2209 = vpop.f32.mrf.mxu0
      %v2210 = vadd.f32 0.0, %v2209
      %2211 = vmatprep.mubr.f32.mxu0 0.0
      %2212 = vmatmul.mubr.f32.gmra.mxu0 %v2051
      %v2213 = vpop.f32.mrf.mxu0
      %v2214 = vadd.f32 0.0, %v2213
      %v2215 = vpop.f32.mrf.mxu0
      %v2216 = vadd.f32 0.0, %v2215
      %2217 = vmatprep.mubr.f32.mxu0 0.0
      %2218 = vmatmul.mubr.f32.gmra.mxu0 %v2053
      %v2219 = vpop.f32.mrf.mxu0
      %v2220 = vadd.f32 0.0, %v2219
      %v2221 = vpop.f32.mrf.mxu0
      %v2222 = vadd.f32 0.0, %v2221
      %2223 = vmatprep.mubr.f32.mxu0 0.0
      %2224 = vmatmul.mubr.f32.gmra.mxu0 %v2055
      %v2225 = vpop.f32.mrf.mxu0
      %v2226 = vadd.f32 0.0, %v2225
      %v2227 = vpop.f32.mrf.mxu0
      %v2228 = vadd.f32 0.0, %v2227
      %2229 = vmatprep.mubr.f32.mxu0 0.0
      %2230 = vmatmul.mubr.f32.gmra.mxu0 %v2057
      %v2231 = vpop.f32.mrf.mxu0
      %v2232 = vadd.f32 0.0, %v2231
      %v2233 = vpop.f32.mrf.mxu0
      %v2234 = vadd.f32 0.0, %v2233
      %2235 = vmatprep.mubr.f32.mxu0 0.0
      %2236 = vmatmul.mubr.f32.gmra.mxu0 %v2059
      %v2237 = vpop.f32.mrf.mxu0
      %v2238 = vadd.f32 0.0, %v2237
      %v2239 = vpop.f32.mrf.mxu0
      %v2240 = vadd.f32 0.0, %v2239
      %2241 = vmatprep.mubr.f32.mxu0 0.0
      %2242 = vmatmul.mubr.f32.gmra.mxu0 %v2061
      %v2243 = vpop.f32.mrf.mxu0
      %v2244 = vadd.f32 0.0, %v2243
      %v2245 = vpop.f32.mrf.mxu0
      %v2246 = vadd.f32 0.0, %v2245
      %2247 = vmatprep.mubr.f32.mxu0 0.0
      %2248 = vmatmul.mubr.f32.gmra.mxu0 %v2063
      %v2249 = vpop.f32.mrf.mxu0
      %v2250 = vadd.f32 0.0, %v2249
      %v2251 = vpop.f32.mrf.mxu0
      %v2252 = vadd.f32 0.0, %v2251
      %2253 = vmatprep.mubr.f32.mxu0 0.0
      %2254 = vmatmul.mubr.f32.gmra.mxu0 %v2065
      %v2255 = vpop.f32.mrf.mxu0
      %v2256 = vadd.f32 0.0, %v2255
      %v2257 = vpop.f32.mrf.mxu0
      %v2258 = vadd.f32 0.0, %v2257
      %2259 = vmatprep.mubr.f32.mxu0 0.0
      %2260 = vmatmul.mubr.f32.gmra.mxu0 %v2067
      %v2261 = vpop.f32.mrf.mxu0
      %v2262 = vadd.f32 0.0, %v2261
      %v2263 = vpop.f32.mrf.mxu0
      %v2264 = vadd.f32 0.0, %v2263
      %2265 = vmatprep.mubr.f32.mxu0 0.0
      %2266 = vmatmul.mubr.f32.gmra.mxu0 %v2069
      %v2267 = vpop.f32.mrf.mxu0
      %v2268 = vadd.f32 0.0, %v2267
      %v2269 = vpop.f32.mrf.mxu0
      %v2270 = vadd.f32 0.0, %v2269
      %2271 = vmatprep.mubr.f32.mxu0 0.0
      %2272 = vmatmul.mubr.f32.gmra.mxu0 %v2071
      %v2273 = vpop.f32.mrf.mxu0
      %v2274 = vadd.f32 0.0, %v2273
      %v2275 = vpop.f32.mrf.mxu0
      %v2276 = vadd.f32 0.0, %v2275
      %2277 = vmatprep.mubr.f32.mxu0 0.0
      %2278 = vmatmul.mubr.f32.gmra.mxu0 %v2073
      %v2279 = vpop.f32.mrf.mxu0
      %v2280 = vadd.f32 0.0, %v2279
      %v2281 = vpop.f32.mrf.mxu0
      %v2282 = vadd.f32 0.0, %v2281
      %2283 = vmatprep.mubr.f32.mxu0 0.0
      %2284 = vmatmul.mubr.f32.gmra.mxu0 %v2075
      %v2285 = vpop.f32.mrf.mxu0
      %v2286 = vadd.f32 0.0, %v2285
      %v2287 = vpop.f32.mrf.mxu0
      %v2288 = vadd.f32 0.0, %v2287
      %2289 = vmatprep.mubr.f32.mxu0 0.0
      %2290 = vmatmul.mubr.f32.gmra.mxu0 %v2077
      %v2291 = vpop.f32.mrf.mxu0
      %v2292 = vadd.f32 0.0, %v2291
      %v2293 = vpop.f32.mrf.mxu0
      %v2294 = vadd.f32 0.0, %v2293
      %2295 = vmatprep.mubr.f32.mxu0 0.0
      %2296 = vmatmul.mubr.f32.gmra.mxu0 %v2079
      %v2297 = vpop.f32.mrf.mxu0
      %v2298 = vadd.f32 0.0, %v2297
      %v2299 = vpop.f32.mrf.mxu0
      %v2300 = vadd.f32 0.0, %v2299
      %2301 = vmatprep.mubr.f32.mxu0 0.0
      %2302 = vmatmul.mubr.f32.gmra.mxu0 %v2081
      %v2303 = vpop.f32.mrf.mxu0
      %v2304 = vadd.f32 0.0, %v2303
      %v2305 = vpop.f32.mrf.mxu0
      %v2306 = vadd.f32 0.0, %v2305
      %2307 = vmatprep.mubr.f32.mxu0 0.0
      %2308 = vmatmul.mubr.f32.gmra.mxu0 %v2083
      %v2309 = vpop.f32.mrf.mxu0
      %v2310 = vadd.f32 0.0, %v2309
      %v2311 = vpop.f32.mrf.mxu0
      %v2312 = vadd.f32 0.0, %v2311
      %2313 = vmatprep.mubr.f32.mxu0 0.0
      %2314 = vmatmul.mubr.f32.gmra.mxu0 %v2085
      %v2315 = vpop.f32.mrf.mxu0
      %v2316 = vadd.f32 0.0, %v2315
      %v2317 = vpop.f32.mrf.mxu0
      %v2318 = vadd.f32 0.0, %v2317
      %2319 = vmatprep.mubr.f32.mxu0 0.0
      %2320 = vmatmul.mubr.f32.gmra.mxu0 %v2087
      %v2321 = vpop.f32.mrf.mxu0
      %v2322 = vadd.f32 0.0, %v2321
      %v2323 = vpop.f32.mrf.mxu0
      %v2324 = vadd.f32 0.0, %v2323
      %2325 = vmatprep.mubr.f32.mxu0 0.0
      %2326 = vmatmul.mubr.f32.gmra.mxu0 %v2089
      %v2327 = vpop.f32.mrf.mxu0
      %v2328 = vadd.f32 0.0, %v2327
      %v2329 = vpop.f32.mrf.mxu0
      %v2330 = vadd.f32 0.0, %v2329
      %2331 = vmatprep.mubr.f32.mxu0 0.0
      %2332 = vmatmul.mubr.f32.gmra.mxu0 %v2091
      %v2333 = vpop.f32.mrf.mxu0
      %v2334 = vadd.f32 0.0, %v2333
      %v2335 = vpop.f32.mrf.mxu0
      %v2336 = vadd.f32 0.0, %v2335
      %2337 = vmatprep.mubr.f32.mxu0 0.0
      %2338 = vmatmul.mubr.f32.gmra.mxu0 %v2093
      %v2339 = vpop.f32.mrf.mxu0
      %v2340 = vadd.f32 0.0, %v2339
      %v2341 = vpop.f32.mrf.mxu0
      %v2342 = vadd.f32 0.0, %v2341
      %2343 = vmatprep.mubr.f32.mxu0 0.0
      %2344 = vmatmul.mubr.f32.gmra.mxu0 %v2095
      %v2345 = vpop.f32.mrf.mxu0
      %v2346 = vadd.f32 0.0, %v2345
      %v2347 = vpop.f32.mrf.mxu0
      %v2348 = vadd.f32 0.0, %v2347
      %2349 = vmatprep.mubr.f32.mxu0 0.0
      %2350 = vmatmul.mubr.f32.gmra.mxu0 %v2097
      %v2351 = vpop.f32.mrf.mxu0
      %v2352 = vadd.f32 0.0, %v2351
      %v2353 = vpop.f32.mrf.mxu0
      %v2354 = vadd.f32 0.0, %v2353
      %2355 = vdwg.mxu0
      %v2356 = vmax.f32 %v2166, %v2168
      %2357 = vmax.xlane.f32.xlu0 %v2356
      %v2358 = vpop.xlane.xlu0 %2357
      %v2359 = vmax.f32 %v2172, %v2174
      %2360 = vmax.xlane.f32.xlu0 %v2359
      %v2361 = vpop.xlane.xlu0 %2360
      %v2362 = vmax.f32 %v2178, %v2180
      %2363 = vmax.xlane.f32.xlu0 %v2362
      %v2364 = vpop.xlane.xlu0 %2363
      %v2365 = vmax.f32 %v2184, %v2186
      %2366 = vmax.xlane.f32.xlu0 %v2365
      %v2367 = vpop.xlane.xlu0 %2366
      %v2368 = vmax.f32 %v2190, %v2192
      %2369 = vmax.xlane.f32.xlu0 %v2368
      %v2370 = vpop.xlane.xlu0 %2369
      %v2371 = vmax.f32 %v2196, %v2198
      %2372 = vmax.xlane.f32.xlu0 %v2371
      %v2373 = vpop.xlane.xlu0 %2372
      %v2374 = vmax.f32 %v2202, %v2204
      %2375 = vmax.xlane.f32.xlu0 %v2374
      %v2376 = vpop.xlane.xlu0 %2375
      %v2377 = vmax.f32 %v2208, %v2210
      %2378 = vmax.xlane.f32.xlu0 %v2377
      %v2379 = vpop.xlane.xlu0 %2378
      %v2380 = vmax.f32 %v2214, %v2216
      %2381 = vmax.xlane.f32.xlu0 %v2380
      %v2382 = vpop.xlane.xlu0 %2381
      %v2383 = vmax.f32 %v2220, %v2222
      %2384 = vmax.xlane.f32.xlu0 %v2383
      %v2385 = vpop.xlane.xlu0 %2384
      %v2386 = vmax.f32 %v2226, %v2228
      %2387 = vmax.xlane.f32.xlu0 %v2386
      %v2388 = vpop.xlane.xlu0 %2387
      %v2389 = vmax.f32 %v2232, %v2234
      %2390 = vmax.xlane.f32.xlu0 %v2389
      %v2391 = vpop.xlane.xlu0 %2390
      %v2392 = vmax.f32 %v2238, %v2240
      %2393 = vmax.xlane.f32.xlu0 %v2392
      %v2394 = vpop.xlane.xlu0 %2393
      %v2395 = vmax.f32 %v2244, %v2246
      %2396 = vmax.xlane.f32.xlu0 %v2395
      %v2397 = vpop.xlane.xlu0 %2396
      %v2398 = vmax.f32 %v2250, %v2252
      %2399 = vmax.xlane.f32.xlu0 %v2398
      %v2400 = vpop.xlane.xlu0 %2399
      %v2401 = vmax.f32 %v2256, %v2258
      %2402 = vmax.xlane.f32.xlu0 %v2401
      %v2403 = vpop.xlane.xlu0 %2402
      %v2404 = vmax.f32 %v2262, %v2264
      %2405 = vmax.xlane.f32.xlu0 %v2404
      %v2406 = vpop.xlane.xlu0 %2405
      %v2407 = vmax.f32 %v2268, %v2270
      %2408 = vmax.xlane.f32.xlu0 %v2407
      %v2409 = vpop.xlane.xlu0 %2408
      %v2410 = vmax.f32 %v2274, %v2276
      %2411 = vmax.xlane.f32.xlu0 %v2410
      %v2412 = vpop.xlane.xlu0 %2411
      %v2413 = vmax.f32 %v2280, %v2282
      %2414 = vmax.xlane.f32.xlu0 %v2413
      %v2415 = vpop.xlane.xlu0 %2414
      %v2416 = vmax.f32 %v2286, %v2288
      %2417 = vmax.xlane.f32.xlu0 %v2416
      %v2418 = vpop.xlane.xlu0 %2417
      %v2419 = vmax.f32 %v2292, %v2294
      %2420 = vmax.xlane.f32.xlu0 %v2419
      %v2421 = vpop.xlane.xlu0 %2420
      %v2422 = vmax.f32 %v2298, %v2300
      %2423 = vmax.xlane.f32.xlu0 %v2422
      %v2424 = vpop.xlane.xlu0 %2423
      %v2425 = vmax.f32 %v2304, %v2306
      %2426 = vmax.xlane.f32.xlu0 %v2425
      %v2427 = vpop.xlane.xlu0 %2426
      %v2428 = vmax.f32 %v2310, %v2312
      %2429 = vmax.xlane.f32.xlu0 %v2428
      %v2430 = vpop.xlane.xlu0 %2429
      %v2431 = vmax.f32 %v2316, %v2318
      %2432 = vmax.xlane.f32.xlu0 %v2431
      %v2433 = vpop.xlane.xlu0 %2432
      %v2434 = vmax.f32 %v2322, %v2324
      %2435 = vmax.xlane.f32.xlu0 %v2434
      %v2436 = vpop.xlane.xlu0 %2435
      %v2437 = vmax.f32 %v2328, %v2330
      %2438 = vmax.xlane.f32.xlu0 %v2437
      %v2439 = vpop.xlane.xlu0 %2438
      %v2440 = vmax.f32 %v2334, %v2336
      %2441 = vmax.xlane.f32.xlu0 %v2440
      %v2442 = vpop.xlane.xlu0 %2441
      %v2443 = vmax.f32 %v2340, %v2342
      %2444 = vmax.xlane.f32.xlu0 %v2443
      %v2445 = vpop.xlane.xlu0 %2444
      %v2446 = vmax.f32 %v2346, %v2348
      %2447 = vmax.xlane.f32.xlu0 %v2446
      %v2448 = vpop.xlane.xlu0 %2447
      %v2449 = vmax.f32 %v2352, %v2354
      %2450 = vmax.xlane.f32.xlu0 %v2449
      %v2451 = vpop.xlane.xlu0 %2450
      %v2452 = vsub.f32 %v2166, %v2358
      %v2453 = vsub.f32 %v2168, %v2358
      %v2454 = vsub.f32 %v2172, %v2361
      %v2455 = vsub.f32 %v2174, %v2361
      %v2456 = vsub.f32 %v2178, %v2364
      %v2457 = vsub.f32 %v2180, %v2364
      %v2458 = vsub.f32 %v2184, %v2367
      %v2459 = vsub.f32 %v2186, %v2367
      %v2460 = vsub.f32 %v2190, %v2370
      %v2461 = vsub.f32 %v2192, %v2370
      %v2462 = vsub.f32 %v2196, %v2373
      %v2463 = vsub.f32 %v2198, %v2373
      %v2464 = vsub.f32 %v2202, %v2376
      %v2465 = vsub.f32 %v2204, %v2376
      %v2466 = vsub.f32 %v2208, %v2379
      %v2467 = vsub.f32 %v2210, %v2379
      %v2468 = vsub.f32 %v2214, %v2382
      %v2469 = vsub.f32 %v2216, %v2382
      %v2470 = vsub.f32 %v2220, %v2385
      %v2471 = vsub.f32 %v2222, %v2385
      %v2472 = vsub.f32 %v2226, %v2388
      %v2473 = vsub.f32 %v2228, %v2388
      %v2474 = vsub.f32 %v2232, %v2391
      %v2475 = vsub.f32 %v2234, %v2391
      %v2476 = vsub.f32 %v2238, %v2394
      %v2477 = vsub.f32 %v2240, %v2394
      %v2478 = vsub.f32 %v2244, %v2397
      %v2479 = vsub.f32 %v2246, %v2397
      %v2480 = vsub.f32 %v2250, %v2400
      %v2481 = vsub.f32 %v2252, %v2400
      %v2482 = vsub.f32 %v2256, %v2403
      %v2483 = vsub.f32 %v2258, %v2403
      %v2484 = vsub.f32 %v2262, %v2406
      %v2485 = vsub.f32 %v2264, %v2406
      %v2486 = vsub.f32 %v2268, %v2409
      %v2487 = vsub.f32 %v2270, %v2409
      %v2488 = vsub.f32 %v2274, %v2412
      %v2489 = vsub.f32 %v2276, %v2412
      %v2490 = vsub.f32 %v2280, %v2415
      %v2491 = vsub.f32 %v2282, %v2415
      %v2492 = vsub.f32 %v2286, %v2418
      %v2493 = vsub.f32 %v2288, %v2418
      %v2494 = vsub.f32 %v2292, %v2421
      %v2495 = vsub.f32 %v2294, %v2421
      %v2496 = vsub.f32 %v2298, %v2424
      %v2497 = vsub.f32 %v2300, %v2424
      %v2498 = vsub.f32 %v2304, %v2427
      %v2499 = vsub.f32 %v2306, %v2427
      %v2500 = vsub.f32 %v2310, %v2430
      %v2501 = vsub.f32 %v2312, %v2430
      %v2502 = vsub.f32 %v2316, %v2433
      %v2503 = vsub.f32 %v2318, %v2433
      %v2504 = vsub.f32 %v2322, %v2436
      %v2505 = vsub.f32 %v2324, %v2436
      %v2506 = vsub.f32 %v2328, %v2439
      %v2507 = vsub.f32 %v2330, %v2439
      %v2508 = vsub.f32 %v2334, %v2442
      %v2509 = vsub.f32 %v2336, %v2442
      %v2510 = vsub.f32 %v2340, %v2445
      %v2511 = vsub.f32 %v2342, %v2445
      %v2512 = vsub.f32 %v2346, %v2448
      %v2513 = vsub.f32 %v2348, %v2448
      %v2514 = vsub.f32 %v2352, %v2451
      %v2515 = vsub.f32 %v2354, %v2451
      %v2516 = vmul.f32 %v2452, 1.442695
      %v2517 = vpow.pop %v2516
      %v2518 = vmul.f32 %v2453, 1.442695
      %v2519 = vpow.pop %v2518
      %v2520 = vmul.f32 %v2454, 1.442695
      %v2521 = vpow.pop %v2520
      %v2522 = vmul.f32 %v2455, 1.442695
      %v2523 = vpow.pop %v2522
      %v2524 = vmul.f32 %v2456, 1.442695
      %v2525 = vpow.pop %v2524
      %v2526 = vmul.f32 %v2457, 1.442695
      %v2527 = vpow.pop %v2526
      %v2528 = vmul.f32 %v2458, 1.442695
      %v2529 = vpow.pop %v2528
      %v2530 = vmul.f32 %v2459, 1.442695
      %v2531 = vpow.pop %v2530
      %v2532 = vmul.f32 %v2460, 1.442695
      %v2533 = vpow.pop %v2532
      %v2534 = vmul.f32 %v2461, 1.442695
      %v2535 = vpow.pop %v2534
      %v2536 = vmul.f32 %v2462, 1.442695
      %v2537 = vpow.pop %v2536
      %v2538 = vmul.f32 %v2463, 1.442695
      %v2539 = vpow.pop %v2538
      %v2540 = vmul.f32 %v2464, 1.442695
      %v2541 = vpow.pop %v2540
      %v2542 = vmul.f32 %v2465, 1.442695
      %v2543 = vpow.pop %v2542
      %v2544 = vmul.f32 %v2466, 1.442695
      %v2545 = vpow.pop %v2544
      %v2546 = vmul.f32 %v2467, 1.442695
      %v2547 = vpow.pop %v2546
      %v2548 = vmul.f32 %v2468, 1.442695
      %v2549 = vpow.pop %v2548
      %v2550 = vmul.f32 %v2469, 1.442695
      %v2551 = vpow.pop %v2550
      %v2552 = vmul.f32 %v2470, 1.442695
      %v2553 = vpow.pop %v2552
      %v2554 = vmul.f32 %v2471, 1.442695
      %v2555 = vpow.pop %v2554
      %v2556 = vmul.f32 %v2472, 1.442695
      %v2557 = vpow.pop %v2556
      %v2558 = vmul.f32 %v2473, 1.442695
      %v2559 = vpow.pop %v2558
      %v2560 = vmul.f32 %v2474, 1.442695
      %v2561 = vpow.pop %v2560
      %v2562 = vmul.f32 %v2475, 1.442695
      %v2563 = vpow.pop %v2562
      %v2564 = vmul.f32 %v2476, 1.442695
      %v2565 = vpow.pop %v2564
      %v2566 = vmul.f32 %v2477, 1.442695
      %v2567 = vpow.pop %v2566
      %v2568 = vmul.f32 %v2478, 1.442695
      %v2569 = vpow.pop %v2568
      %v2570 = vmul.f32 %v2479, 1.442695
      %v2571 = vpow.pop %v2570
      %v2572 = vmul.f32 %v2480, 1.442695
      %v2573 = vpow.pop %v2572
      %v2574 = vmul.f32 %v2481, 1.442695
      %v2575 = vpow.pop %v2574
      %v2576 = vmul.f32 %v2482, 1.442695
      %v2577 = vpow.pop %v2576
      %v2578 = vmul.f32 %v2483, 1.442695
      %v2579 = vpow.pop %v2578
      %v2580 = vmul.f32 %v2484, 1.442695
      %v2581 = vpow.pop %v2580
      %v2582 = vmul.f32 %v2485, 1.442695
      %v2583 = vpow.pop %v2582
      %v2584 = vmul.f32 %v2486, 1.442695
      %v2585 = vpow.pop %v2584
      %v2586 = vmul.f32 %v2487, 1.442695
      %v2587 = vpow.pop %v2586
      %v2588 = vmul.f32 %v2488, 1.442695
      %v2589 = vpow.pop %v2588
      %v2590 = vmul.f32 %v2489, 1.442695
      %v2591 = vpow.pop %v2590
      %v2592 = vmul.f32 %v2490, 1.442695
      %v2593 = vpow.pop %v2592
      %v2594 = vmul.f32 %v2491, 1.442695
      %v2595 = vpow.pop %v2594
      %v2596 = vmul.f32 %v2492, 1.442695
      %v2597 = vpow.pop %v2596
      %v2598 = vmul.f32 %v2493, 1.442695
      %v2599 = vpow.pop %v2598
      %v2600 = vmul.f32 %v2494, 1.442695
      %v2601 = vpow.pop %v2600
      %v2602 = vmul.f32 %v2495, 1.442695
      %v2603 = vpow.pop %v2602
      %v2604 = vmul.f32 %v2496, 1.442695
      %v2605 = vpow.pop %v2604
      %v2606 = vmul.f32 %v2497, 1.442695
      %v2607 = vpow.pop %v2606
      %v2608 = vmul.f32 %v2498, 1.442695
      %v2609 = vpow.pop %v2608
      %v2610 = vmul.f32 %v2499, 1.442695
      %v2611 = vpow.pop %v2610
      %v2612 = vmul.f32 %v2500, 1.442695
      %v2613 = vpow.pop %v2612
      %v2614 = vmul.f32 %v2501, 1.442695
      %v2615 = vpow.pop %v2614
      %v2616 = vmul.f32 %v2502, 1.442695
      %v2617 = vpow.pop %v2616
      %v2618 = vmul.f32 %v2503, 1.442695
      %v2619 = vpow.pop %v2618
      %v2620 = vmul.f32 %v2504, 1.442695
      %v2621 = vpow.pop %v2620
      %v2622 = vmul.f32 %v2505, 1.442695
      %v2623 = vpow.pop %v2622
      %v2624 = vmul.f32 %v2506, 1.442695
      %v2625 = vpow.pop %v2624
      %v2626 = vmul.f32 %v2507, 1.442695
      %v2627 = vpow.pop %v2626
      %v2628 = vmul.f32 %v2508, 1.442695
      %v2629 = vpow.pop %v2628
      %v2630 = vmul.f32 %v2509, 1.442695
      %v2631 = vpow.pop %v2630
      %v2632 = vmul.f32 %v2510, 1.442695
      %v2633 = vpow.pop %v2632
      %v2634 = vmul.f32 %v2511, 1.442695
      %v2635 = vpow.pop %v2634
      %v2636 = vmul.f32 %v2512, 1.442695
      %v2637 = vpow.pop %v2636
      %v2638 = vmul.f32 %v2513, 1.442695
      %v2639 = vpow.pop %v2638
      %v2640 = vmul.f32 %v2514, 1.442695
      %v2641 = vpow.pop %v2640
      %v2642 = vmul.f32 %v2515, 1.442695
      %v2643 = vpow.pop %v2642
      %v2644 = vadd.f32 %v2517, %v2519
      %2645 = vadd.xlane.f32.xlu0 %v2644
      %v2646 = vpop.xlane.xlu0 %2645
      %v2647 = vadd.f32 %v2521, %v2523
      %2648 = vadd.xlane.f32.xlu0 %v2647
      %v2649 = vpop.xlane.xlu0 %2648
      %v2650 = vadd.f32 %v2525, %v2527
      %2651 = vadd.xlane.f32.xlu0 %v2650
      %v2652 = vpop.xlane.xlu0 %2651
      %v2653 = vadd.f32 %v2529, %v2531
      %2654 = vadd.xlane.f32.xlu0 %v2653
      %v2655 = vpop.xlane.xlu0 %2654
      %v2656 = vadd.f32 %v2533, %v2535
      %2657 = vadd.xlane.f32.xlu0 %v2656
      %v2658 = vpop.xlane.xlu0 %2657
      %v2659 = vadd.f32 %v2537, %v2539
      %2660 = vadd.xlane.f32.xlu0 %v2659
      %v2661 = vpop.xlane.xlu0 %2660
      %v2662 = vadd.f32 %v2541, %v2543
      %2663 = vadd.xlane.f32.xlu0 %v2662
      %v2664 = vpop.xlane.xlu0 %2663
      %v2665 = vadd.f32 %v2545, %v2547
      %2666 = vadd.xlane.f32.xlu0 %v2665
      %v2667 = vpop.xlane.xlu0 %2666
      %v2668 = vadd.f32 %v2549, %v2551
      %2669 = vadd.xlane.f32.xlu0 %v2668
      %v2670 = vpop.xlane.xlu0 %2669
      %v2671 = vadd.f32 %v2553, %v2555
      %2672 = vadd.xlane.f32.xlu0 %v2671
      %v2673 = vpop.xlane.xlu0 %2672
      %v2674 = vadd.f32 %v2557, %v2559
      %2675 = vadd.xlane.f32.xlu0 %v2674
      %v2676 = vpop.xlane.xlu0 %2675
      %v2677 = vadd.f32 %v2561, %v2563
      %2678 = vadd.xlane.f32.xlu0 %v2677
      %v2679 = vpop.xlane.xlu0 %2678
      %v2680 = vadd.f32 %v2565, %v2567
      %2681 = vadd.xlane.f32.xlu0 %v2680
      %v2682 = vpop.xlane.xlu0 %2681
      %v2683 = vadd.f32 %v2569, %v2571
      %2684 = vadd.xlane.f32.xlu0 %v2683
      %v2685 = vpop.xlane.xlu0 %2684
      %v2686 = vadd.f32 %v2573, %v2575
      %2687 = vadd.xlane.f32.xlu0 %v2686
      %v2688 = vpop.xlane.xlu0 %2687
      %v2689 = vadd.f32 %v2577, %v2579
      %2690 = vadd.xlane.f32.xlu0 %v2689
      %v2691 = vpop.xlane.xlu0 %2690
      %v2692 = vadd.f32 %v2581, %v2583
      %2693 = vadd.xlane.f32.xlu0 %v2692
      %v2694 = vpop.xlane.xlu0 %2693
      %v2695 = vadd.f32 %v2585, %v2587
      %2696 = vadd.xlane.f32.xlu0 %v2695
      %v2697 = vpop.xlane.xlu0 %2696
      %v2698 = vadd.f32 %v2589, %v2591
      %2699 = vadd.xlane.f32.xlu0 %v2698
      %v2700 = vpop.xlane.xlu0 %2699
      %v2701 = vadd.f32 %v2593, %v2595
      %2702 = vadd.xlane.f32.xlu0 %v2701
      %v2703 = vpop.xlane.xlu0 %2702
      %v2704 = vadd.f32 %v2597, %v2599
      %2705 = vadd.xlane.f32.xlu0 %v2704
      %v2706 = vpop.xlane.xlu0 %2705
      %v2707 = vadd.f32 %v2601, %v2603
      %2708 = vadd.xlane.f32.xlu0 %v2707
      %v2709 = vpop.xlane.xlu0 %2708
      %v2710 = vadd.f32 %v2605, %v2607
      %2711 = vadd.xlane.f32.xlu0 %v2710
      %v2712 = vpop.xlane.xlu0 %2711
      %v2713 = vadd.f32 %v2609, %v2611
      %2714 = vadd.xlane.f32.xlu0 %v2713
      %v2715 = vpop.xlane.xlu0 %2714
      %v2716 = vadd.f32 %v2613, %v2615
      %2717 = vadd.xlane.f32.xlu0 %v2716
      %v2718 = vpop.xlane.xlu0 %2717
      %v2719 = vadd.f32 %v2617, %v2619
      %2720 = vadd.xlane.f32.xlu0 %v2719
      %v2721 = vpop.xlane.xlu0 %2720
      %v2722 = vadd.f32 %v2621, %v2623
      %2723 = vadd.xlane.f32.xlu0 %v2722
      %v2724 = vpop.xlane.xlu0 %2723
      %v2725 = vadd.f32 %v2625, %v2627
      %2726 = vadd.xlane.f32.xlu0 %v2725
      %v2727 = vpop.xlane.xlu0 %2726
      %v2728 = vadd.f32 %v2629, %v2631
      %2729 = vadd.xlane.f32.xlu0 %v2728
      %v2730 = vpop.xlane.xlu0 %2729
      %v2731 = vadd.f32 %v2633, %v2635
      %2732 = vadd.xlane.f32.xlu0 %v2731
      %v2733 = vpop.xlane.xlu0 %2732
      %v2734 = vadd.f32 %v2637, %v2639
      %2735 = vadd.xlane.f32.xlu0 %v2734
      %v2736 = vpop.xlane.xlu0 %2735
      %v2737 = vadd.f32 %v2641, %v2643
      %2738 = vadd.xlane.f32.xlu0 %v2737
      %v2739 = vpop.xlane.xlu0 %2738
      %v2740 = vrcp.pop %v2646
      %v2741 = vrcp.pop %v2649
      %v2742 = vrcp.pop %v2652
      %v2743 = vrcp.pop %v2655
      %v2744 = vrcp.pop %v2658
      %v2745 = vrcp.pop %v2661
      %v2746 = vrcp.pop %v2664
      %v2747 = vrcp.pop %v2667
      %v2748 = vrcp.pop %v2670
      %v2749 = vrcp.pop %v2673
      %v2750 = vrcp.pop %v2676
      %v2751 = vrcp.pop %v2679
      %v2752 = vrcp.pop %v2682
      %v2753 = vrcp.pop %v2685
      %v2754 = vrcp.pop %v2688
      %v2755 = vrcp.pop %v2691
      %v2756 = vrcp.pop %v2694
      %v2757 = vrcp.pop %v2697
      %v2758 = vrcp.pop %v2700
      %v2759 = vrcp.pop %v2703
      %v2760 = vrcp.pop %v2706
      %v2761 = vrcp.pop %v2709
      %v2762 = vrcp.pop %v2712
      %v2763 = vrcp.pop %v2715
      %v2764 = vrcp.pop %v2718
      %v2765 = vrcp.pop %v2721
      %v2766 = vrcp.pop %v2724
      %v2767 = vrcp.pop %v2727
      %v2768 = vrcp.pop %v2730
      %v2769 = vrcp.pop %v2733
      %v2770 = vrcp.pop %v2736
      %v2771 = vrcp.pop %v2739
      %v2772 = vmul.f32 %v2517, %v2740
      %v2773 = vmul.f32 %v2519, %v2740
      %v2774 = vmul.f32 %v2521, %v2741
      %v2775 = vmul.f32 %v2523, %v2741
      %v2776 = vmul.f32 %v2525, %v2742
      %v2777 = vmul.f32 %v2527, %v2742
      %v2778 = vmul.f32 %v2529, %v2743
      %v2779 = vmul.f32 %v2531, %v2743
      %v2780 = vmul.f32 %v2533, %v2744
      %v2781 = vmul.f32 %v2535, %v2744
      %v2782 = vmul.f32 %v2537, %v2745
      %v2783 = vmul.f32 %v2539, %v2745
      %v2784 = vmul.f32 %v2541, %v2746
      %v2785 = vmul.f32 %v2543, %v2746
      %v2786 = vmul.f32 %v2545, %v2747
      %v2787 = vmul.f32 %v2547, %v2747
      %v2788 = vmul.f32 %v2549, %v2748
      %v2789 = vmul.f32 %v2551, %v2748
      %v2790 = vmul.f32 %v2553, %v2749
      %v2791 = vmul.f32 %v2555, %v2749
      %v2792 = vmul.f32 %v2557, %v2750
      %v2793 = vmul.f32 %v2559, %v2750
      %v2794 = vmul.f32 %v2561, %v2751
      %v2795 = vmul.f32 %v2563, %v2751
      %v2796 = vmul.f32 %v2565, %v2752
      %v2797 = vmul.f32 %v2567, %v2752
      %v2798 = vmul.f32 %v2569, %v2753
      %v2799 = vmul.f32 %v2571, %v2753
      %v2800 = vmul.f32 %v2573, %v2754
      %v2801 = vmul.f32 %v2575, %v2754
      %v2802 = vmul.f32 %v2577, %v2755
      %v2803 = vmul.f32 %v2579, %v2755
      %v2804 = vmul.f32 %v2581, %v2756
      %v2805 = vmul.f32 %v2583, %v2756
      %v2806 = vmul.f32 %v2585, %v2757
      %v2807 = vmul.f32 %v2587, %v2757
      %v2808 = vmul.f32 %v2589, %v2758
      %v2809 = vmul.f32 %v2591, %v2758
      %v2810 = vmul.f32 %v2593, %v2759
      %v2811 = vmul.f32 %v2595, %v2759
      %v2812 = vmul.f32 %v2597, %v2760
      %v2813 = vmul.f32 %v2599, %v2760
      %v2814 = vmul.f32 %v2601, %v2761
      %v2815 = vmul.f32 %v2603, %v2761
      %v2816 = vmul.f32 %v2605, %v2762
      %v2817 = vmul.f32 %v2607, %v2762
      %v2818 = vmul.f32 %v2609, %v2763
      %v2819 = vmul.f32 %v2611, %v2763
      %v2820 = vmul.f32 %v2613, %v2764
      %v2821 = vmul.f32 %v2615, %v2764
      %v2822 = vmul.f32 %v2617, %v2765
      %v2823 = vmul.f32 %v2619, %v2765
      %v2824 = vmul.f32 %v2621, %v2766
      %v2825 = vmul.f32 %v2623, %v2766
      %v2826 = vmul.f32 %v2625, %v2767
      %v2827 = vmul.f32 %v2627, %v2767
      %v2828 = vmul.f32 %v2629, %v2768
      %v2829 = vmul.f32 %v2631, %v2768
      %v2830 = vmul.f32 %v2633, %v2769
      %v2831 = vmul.f32 %v2635, %v2769
      %v2832 = vmul.f32 %v2637, %v2770
      %v2833 = vmul.f32 %v2639, %v2770
      %v2834 = vmul.f32 %v2641, %v2771
      %v2835 = vmul.f32 %v2643, %v2771
      %s2836 = scalar_lea.vmem %s2, 64
      %v2837 = vld [vmem:[%s2836] sm:$0xff]
      %v2838 = vld [vmem:[%s2836 + $0x8] sm:$0xff]
      %v2839 = vld [vmem:[%s2836 + $0x10] sm:$0xff]
      %v2840 = vld [vmem:[%s2836 + $0x18] sm:$0xff]
      %v2841 = vld [vmem:[%s2836 + $0x20] sm:$0xff]
      %v2842 = vld [vmem:[%s2836 + $0x28] sm:$0xff]
      %v2843 = vld [vmem:[%s2836 + $0x30] sm:$0xff]
      %v2844 = vld [vmem:[%s2836 + $0x38] sm:$0xff]
      %2845 = vmatprep.subr.mxu0 %v2803
      %2846 = vmatpush1.msra.mxu0 %v2802
      %2847 = vmatprep.subr.mxu0 %v2801
      %2848 = vmatpush1.msra.mxu0 %v2800
      %2849 = vmatprep.subr.mxu0 %v2799
      %2850 = vmatpush1.msra.mxu0 %v2798
      %2851 = vmatprep.subr.mxu0 %v2797
      %2852 = vmatpush1.msra.mxu0 %v2796
      %2853 = vmatprep.subr.mxu0 %v2795
      %2854 = vmatpush1.msra.mxu0 %v2794
      %2855 = vmatprep.subr.mxu0 %v2793
      %2856 = vmatpush1.msra.mxu0 %v2792
      %2857 = vmatprep.subr.mxu0 %v2791
      %2858 = vmatpush1.msra.mxu0 %v2790
      %2859 = vmatprep.subr.mxu0 %v2789
      %2860 = vmatpush1.msra.mxu0 %v2788
      %2861 = vmatprep.subr.mxu0 %v2787
      %2862 = vmatpush1.msra.mxu0 %v2786
      %2863 = vmatprep.subr.mxu0 %v2785
      %2864 = vmatpush1.msra.mxu0 %v2784
      %2865 = vmatprep.subr.mxu0 %v2783
      %2866 = vmatpush1.msra.mxu0 %v2782
      %2867 = vmatprep.subr.mxu0 %v2781
      %2868 = vmatpush1.msra.mxu0 %v2780
      %2869 = vmatprep.subr.mxu0 %v2779
      %2870 = vmatpush1.msra.mxu0 %v2778
      %2871 = vmatprep.subr.mxu0 %v2777
      %2872 = vmatpush1.msra.mxu0 %v2776
      %2873 = vmatprep.subr.mxu0 %v2775
      %2874 = vmatpush1.msra.mxu0 %v2774
      %2875 = vmatprep.subr.mxu0 %v2773
      %2876 = vmatpush1.msra.mxu0 %v2772
      %2877 = vmatprep.subr.mxu0 %v2835
      %2878 = vmatpush2.msra.mxu0 %v2834
      %2879 = vmatprep.subr.mxu0 %v2833
      %2880 = vmatpush2.msra.mxu0 %v2832
      %2881 = vmatprep.subr.mxu0 %v2831
      %2882 = vmatpush2.msra.mxu0 %v2830
      %2883 = vmatprep.subr.mxu0 %v2829
      %2884 = vmatpush2.msra.mxu0 %v2828
      %2885 = vmatprep.subr.mxu0 %v2827
      %2886 = vmatpush2.msra.mxu0 %v2826
      %2887 = vmatprep.subr.mxu0 %v2825
      %2888 = vmatpush2.msra.mxu0 %v2824
      %2889 = vmatprep.subr.mxu0 %v2823
      %2890 = vmatpush2.msra.mxu0 %v2822
      %2891 = vmatprep.subr.mxu0 %v2821
      %2892 = vmatpush2.msra.mxu0 %v2820
      %2893 = vmatprep.subr.mxu0 %v2819
      %2894 = vmatpush2.msra.mxu0 %v2818
      %2895 = vmatprep.subr.mxu0 %v2817
      %2896 = vmatpush2.msra.mxu0 %v2816
      %2897 = vmatprep.subr.mxu0 %v2815
      %2898 = vmatpush2.msra.mxu0 %v2814
      %2899 = vmatprep.subr.mxu0 %v2813
      %2900 = vmatpush2.msra.mxu0 %v2812
      %2901 = vmatprep.subr.mxu0 %v2811
      %2902 = vmatpush2.msra.mxu0 %v2810
      %2903 = vmatprep.subr.mxu0 %v2809
      %2904 = vmatpush2.msra.mxu0 %v2808
      %2905 = vmatprep.subr.mxu0 %v2807
      %2906 = vmatpush2.msra.mxu0 %v2806
      %2907 = vmatprep.subr.mxu0 %v2805
      %2908 = vmatpush2.msra.mxu0 %v2804
      %2909 = vmatprep.mubr.f32.mxu0 %v2838
      %2910 = vmatmul.mubr.f32.gmra.mxu0 %v2837
      %v2911 = vpop.f32.mrf.mxu0
      %v2912 = vadd.f32 0.0, %v2911
      %v2913 = vpop.f32.mrf.mxu0
      %v2914 = vadd.f32 0.0, %v2913
      %2915 = vmatprep.mubr.f32.mxu0 %v2840
      %2916 = vmatmul.mubr.f32.gmra.mxu0 %v2839
      %v2917 = vpop.f32.mrf.mxu0
      %v2918 = vadd.f32 0.0, %v2917
      %v2919 = vpop.f32.mrf.mxu0
      %v2920 = vadd.f32 0.0, %v2919
      %2921 = vmatprep.mubr.f32.mxu0 %v2842
      %2922 = vmatmul.mubr.f32.gmra.mxu0 %v2841
      %v2923 = vpop.f32.mrf.mxu0
      %v2924 = vadd.f32 0.0, %v2923
      %v2925 = vpop.f32.mrf.mxu0
      %v2926 = vadd.f32 0.0, %v2925
      %2927 = vmatprep.mubr.f32.mxu0 %v2844
      %2928 = vmatmul.mubr.f32.gmra.mxu0 %v2843
      %v2929 = vpop.f32.mrf.mxu0
      %v2930 = vadd.f32 0.0, %v2929
      %v2931 = vpop.f32.mrf.mxu0
      %v2932 = vadd.f32 0.0, %v2931
      %2933 = vdwg.mxu0
      %2934 = vmatprep.subr.mxu0 0.0
      %2935 = vmatpush1.xpose.msra.mxu0 0.0
      %2936 = vmatprep.subr.mxu0 0.0
      %2937 = vmatpush1.xpose.msra.mxu0 0.0
      %2938 = vmatprep.subr.mxu0 0.0
      %2939 = vmatpush1.xpose.msra.mxu0 0.0
      %2940 = vmatprep.subr.mxu0 0.0
      %2941 = vmatpush1.xpose.msra.mxu0 0.0
      %2942 = vmatprep.subr.mxu0 0.0
      %2943 = vmatpush1.xpose.msra.mxu0 0.0
      %2944 = vmatprep.subr.mxu0 0.0
      %2945 = vmatpush1.xpose.msra.mxu0 0.0
      %2946 = vmatprep.subr.mxu0 0.0
      %2947 = vmatpush1.xpose.msra.mxu0 0.0
      %2948 = vmatprep.subr.mxu0 0.0
      %2949 = vmatpush1.xpose.msra.mxu0 0.0
      %2950 = vmatprep.subr.mxu0 0.0
      %2951 = vmatpush1.xpose.msra.mxu0 0.0
      %2952 = vmatprep.subr.mxu0 0.0
      %2953 = vmatpush1.xpose.msra.mxu0 0.0
      %2954 = vmatprep.subr.mxu0 0.0
      %2955 = vmatpush1.xpose.msra.mxu0 0.0
      %2956 = vmatprep.subr.mxu0 0.0
      %2957 = vmatpush1.xpose.msra.mxu0 0.0
      %2958 = vmatprep.subr.mxu0 %v1970
      %2959 = vmatpush1.xpose.msra.mxu0 %v1969
      %2960 = vmatprep.subr.mxu0 %v1968
      %2961 = vmatpush1.xpose.msra.mxu0 %v1967
      %2962 = vmatprep.subr.mxu0 %v1966
      %2963 = vmatpush1.xpose.msra.mxu0 %v1965
      %2964 = vmatprep.subr.mxu0 %v1964
      %2965 = vmatpush1.xpose.msra.mxu0 %v1963
      %2966 = vmatprep.subr.mxu0 0.0
      %2967 = vmatpush2.xpose.msra.mxu0 0.0
      %2968 = vmatprep.subr.mxu0 0.0
      %2969 = vmatpush2.xpose.msra.mxu0 0.0
      %2970 = vmatprep.subr.mxu0 0.0
      %2971 = vmatpush2.xpose.msra.mxu0 0.0
      %2972 = vmatprep.subr.mxu0 0.0
      %2973 = vmatpush2.xpose.msra.mxu0 0.0
      %2974 = vmatprep.subr.mxu0 0.0
      %2975 = vmatpush2.xpose.msra.mxu0 0.0
      %2976 = vmatprep.subr.mxu0 0.0
      %2977 = vmatpush2.xpose.msra.mxu0 0.0
      %2978 = vmatprep.subr.mxu0 0.0
      %2979 = vmatpush2.xpose.msra.mxu0 0.0
      %2980 = vmatprep.subr.mxu0 0.0
      %2981 = vmatpush2.xpose.msra.mxu0 0.0
      %2982 = vmatprep.subr.mxu0 0.0
      %2983 = vmatpush2.xpose.msra.mxu0 0.0
      %2984 = vmatprep.subr.mxu0 0.0
      %2985 = vmatpush2.xpose.msra.mxu0 0.0
      %2986 = vmatprep.subr.mxu0 0.0
      %2987 = vmatpush2.xpose.msra.mxu0 0.0
      %2988 = vmatprep.subr.mxu0 0.0
      %2989 = vmatpush2.xpose.msra.mxu0 0.0
      %2990 = vmatprep.subr.mxu0 0.0
      %2991 = vmatpush2.xpose.msra.mxu0 0.0
      %2992 = vmatprep.subr.mxu0 0.0
      %2993 = vmatpush2.xpose.msra.mxu0 0.0
      %2994 = vmatprep.subr.mxu0 0.0
      %2995 = vmatpush2.xpose.msra.mxu0 0.0
      %2996 = vmatprep.subr.mxu0 0.0
      %2997 = vmatpush2.xpose.msra.mxu0 0.0
      %2998 = vmatprep.mubr.f32.mxu0 %v2914
      %2999 = vmatmul.mubr.f32.gmra.mxu0 %v2912
      %v3000 = vpop.f32.mrf.mxu0
      %v3001 = vadd.f32 0.0, %v3000
      %v3002 = vpop.f32.mrf.mxu0
      %3003 = vmatprep.mubr.f32.mxu0 %v2920
      %3004 = vmatmul.mubr.f32.gmra.mxu0 %v2918
      %v3005 = vpop.f32.mrf.mxu0
      %v3006 = vadd.f32 0.0, %v3005
      %v3007 = vpop.f32.mrf.mxu0
      %3008 = vmatprep.mubr.f32.mxu0 %v2926
      %3009 = vmatmul.mubr.f32.gmra.mxu0 %v2924
      %v3010 = vpop.f32.mrf.mxu0
      %v3011 = vadd.f32 0.0, %v3010
      %v3012 = vpop.f32.mrf.mxu0
      %3013 = vmatprep.mubr.f32.mxu0 %v2932
      %3014 = vmatmul.mubr.f32.gmra.mxu0 %v2930
      %v3015 = vpop.f32.mrf.mxu0
      %v3016 = vadd.f32 0.0, %v3015
      %v3017 = vpop.f32.mrf.mxu0
      %3018 = vdwg.mxu0
      %3019 = vmatprep.subr.mxu0 0.0
      %3020 = vmatpush1.xpose.msra.mxu0 0.0
      %3021 = vmatprep.subr.mxu0 0.0
      %3022 = vmatpush1.xpose.msra.mxu0 0.0
      %3023 = vmatprep.subr.mxu0 0.0
      %3024 = vmatpush1.xpose.msra.mxu0 0.0
      %3025 = vmatprep.subr.mxu0 0.0
      %3026 = vmatpush1.xpose.msra.mxu0 0.0
      %3027 = vmatprep.subr.mxu0 0.0
      %3028 = vmatpush1.xpose.msra.mxu0 0.0
      %3029 = vmatprep.subr.mxu0 0.0
      %3030 = vmatpush1.xpose.msra.mxu0 0.0
      %3031 = vmatprep.subr.mxu0 0.0
      %3032 = vmatpush1.xpose.msra.mxu0 0.0
      %3033 = vmatprep.subr.mxu0 0.0
      %3034 = vmatpush1.xpose.msra.mxu0 0.0
      %3035 = vmatprep.subr.mxu0 0.0
      %3036 = vmatpush1.xpose.msra.mxu0 0.0
      %3037 = vmatprep.subr.mxu0 0.0
      %3038 = vmatpush1.xpose.msra.mxu0 0.0
      %3039 = vmatprep.subr.mxu0 0.0
      %3040 = vmatpush1.xpose.msra.mxu0 0.0
      %3041 = vmatprep.subr.mxu0 0.0
      %3042 = vmatpush1.xpose.msra.mxu0 0.0
      %3043 = vmatprep.subr.mxu0 %v1023
      %3044 = vmatpush1.xpose.msra.mxu0 %v1022
      %3045 = vmatprep.subr.mxu0 %v1021
      %3046 = vmatpush1.xpose.msra.mxu0 %v1020
      %3047 = vmatprep.subr.mxu0 %v1019
      %3048 = vmatpush1.xpose.msra.mxu0 %v1018
      %3049 = vmatprep.subr.mxu0 %v1017
      %3050 = vmatpush1.xpose.msra.mxu0 %v1016
      %3051 = vmatprep.subr.mxu0 0.0
      %3052 = vmatpush2.xpose.msra.mxu0 0.0
      %3053 = vmatprep.subr.mxu0 0.0
      %3054 = vmatpush2.xpose.msra.mxu0 0.0
      %3055 = vmatprep.subr.mxu0 0.0
      %3056 = vmatpush2.xpose.msra.mxu0 0.0
      %3057 = vmatprep.subr.mxu0 0.0
      %3058 = vmatpush2.xpose.msra.mxu0 0.0
      %3059 = vmatprep.subr.mxu0 0.0
      %3060 = vmatpush2.xpose.msra.mxu0 0.0
      %3061 = vmatprep.subr.mxu0 0.0
      %3062 = vmatpush2.xpose.msra.mxu0 0.0
      %3063 = vmatprep.subr.mxu0 0.0
      %3064 = vmatpush2.xpose.msra.mxu0 0.0
      %3065 = vmatprep.subr.mxu0 0.0
      %3066 = vmatpush2.xpose.msra.mxu0 0.0
      %3067 = vmatprep.subr.mxu0 0.0
      %3068 = vmatpush2.xpose.msra.mxu0 0.0
      %3069 = vmatprep.subr.mxu0 0.0
      %3070 = vmatpush2.xpose.msra.mxu0 0.0
      %3071 = vmatprep.subr.mxu0 0.0
      %3072 = vmatpush2.xpose.msra.mxu0 0.0
      %3073 = vmatprep.subr.mxu0 0.0
      %3074 = vmatpush2.xpose.msra.mxu0 0.0
      %3075 = vmatprep.subr.mxu0 0.0
      %3076 = vmatpush2.xpose.msra.mxu0 0.0
      %3077 = vmatprep.subr.mxu0 0.0
      %3078 = vmatpush2.xpose.msra.mxu0 0.0
      %3079 = vmatprep.subr.mxu0 0.0
      %3080 = vmatpush2.xpose.msra.mxu0 0.0
      %3081 = vmatprep.subr.mxu0 0.0
      %3082 = vmatpush2.xpose.msra.mxu0 0.0
      %3083 = vmatprep.mubr.f32.mxu0 %v1935
      %3084 = vmatmul.mubr.f32.gmra.mxu0 %v1933
      %v3085 = vpop.f32.mrf.mxu0
      %v3086 = vadd.f32 %v3001, %v3085
      %v3087 = vpop.f32.mrf.mxu0
      %3088 = vmatprep.mubr.f32.mxu0 %v1941
      %3089 = vmatmul.mubr.f32.gmra.mxu0 %v1939
      %v3090 = vpop.f32.mrf.mxu0
      %v3091 = vadd.f32 %v3006, %v3090
      %v3092 = vpop.f32.mrf.mxu0
      %3093 = vmatprep.mubr.f32.mxu0 %v1947
      %3094 = vmatmul.mubr.f32.gmra.mxu0 %v1945
      %v3095 = vpop.f32.mrf.mxu0
      %v3096 = vadd.f32 %v3011, %v3095
      %v3097 = vpop.f32.mrf.mxu0
      %3098 = vmatprep.mubr.f32.mxu0 %v1953
      %3099 = vmatmul.mubr.f32.gmra.mxu0 %v1951
      %v3100 = vpop.f32.mrf.mxu0
      %v3101 = vadd.f32 %v3016, %v3100
      %v3102 = vpop.f32.mrf.mxu0
      %3103 = vdwg.mxu0
      %v3104 = vld [vmem:[#allocation2 + $0x180] sm:$0xff]
      %v3105 = vld [vmem:[#allocation2 + $0x188] sm:$0xff]
      %v3106 = vld [vmem:[#allocation2 + $0x190] sm:$0xff]
      %v3107 = vld [vmem:[#allocation2 + $0x198] sm:$0xff]
      %v3108 = vld [vmem:[#allocation2 + $0x1a0] sm:$0xff]
      %v3109 = vld [vmem:[#allocation2 + $0x1a8] sm:$0xff]
      %v3110 = vld [vmem:[#allocation2 + $0x1b0] sm:$0xff]
      %v3111 = vld [vmem:[#allocation2 + $0x1b8] sm:$0xff]
      %v3112 = vld [vmem:[#allocation2 + $0x280] sm:$0xff]
      %v3113 = vld [vmem:[#allocation2 + $0x288] sm:$0xff]
      %v3114 = vld [vmem:[#allocation2 + $0x290] sm:$0xff]
      %v3115 = vld [vmem:[#allocation2 + $0x298] sm:$0xff]
      %v3116 = vld [vmem:[#allocation2 + $0x2a0] sm:$0xff]
      %v3117 = vld [vmem:[#allocation2 + $0x2a8] sm:$0xff]
      %v3118 = vld [vmem:[#allocation2 + $0x2b0] sm:$0xff]
      %v3119 = vld [vmem:[#allocation2 + $0x2b8] sm:$0xff]
      %3120 = vrot.lane.b32.xlu0 %v976, 64
      %v3121 = vpop.permute.xlu0 %3120
      %3122 = vrot.lane.b32.xlu0 %v977, 64
      %v3123 = vpop.permute.xlu0 %3122
      %3124 = vrot.lane.b32.xlu0 %v978, 64
      %v3125 = vpop.permute.xlu0 %3124
      %3126 = vrot.lane.b32.xlu0 %v979, 64
      %v3127 = vpop.permute.xlu0 %3126
      %3128 = vrot.lane.b32.xlu0 %v980, 64
      %v3129 = vpop.permute.xlu0 %3128
      %3130 = vrot.lane.b32.xlu0 %v981, 64
      %v3131 = vpop.permute.xlu0 %3130
      %3132 = vrot.lane.b32.xlu0 %v982, 64
      %v3133 = vpop.permute.xlu0 %3132
      %3134 = vrot.lane.b32.xlu0 %v983, 64
      %v3135 = vpop.permute.xlu0 %3134
      %3136 = vrot.lane.b32.xlu0 %v984, 64
      %v3137 = vpop.permute.xlu0 %3136
      %3138 = vrot.lane.b32.xlu0 %v985, 64
      %v3139 = vpop.permute.xlu0 %3138
      %3140 = vrot.lane.b32.xlu0 %v986, 64
      %v3141 = vpop.permute.xlu0 %3140
      %3142 = vrot.lane.b32.xlu0 %v987, 64
      %v3143 = vpop.permute.xlu0 %3142
      %3144 = vrot.lane.b32.xlu0 %v988, 64
      %v3145 = vpop.permute.xlu0 %3144
      %3146 = vrot.lane.b32.xlu0 %v989, 64
      %v3147 = vpop.permute.xlu0 %3146
      %3148 = vrot.lane.b32.xlu0 %v990, 64
      %v3149 = vpop.permute.xlu0 %3148
      %3150 = vrot.lane.b32.xlu0 %v991, 64
      %v3151 = vpop.permute.xlu0 %3150
      %3152 = vrot.lane.b32.xlu0 %v992, 64
      %v3153 = vpop.permute.xlu0 %3152
      %3154 = vrot.lane.b32.xlu0 %v993, 64
      %v3155 = vpop.permute.xlu0 %3154
      %3156 = vrot.lane.b32.xlu0 %v994, 64
      %v3157 = vpop.permute.xlu0 %3156
      %3158 = vrot.lane.b32.xlu0 %v995, 64
      %v3159 = vpop.permute.xlu0 %3158
      %3160 = vrot.lane.b32.xlu0 %v996, 64
      %v3161 = vpop.permute.xlu0 %3160
      %3162 = vrot.lane.b32.xlu0 %v997, 64
      %v3163 = vpop.permute.xlu0 %3162
      %3164 = vrot.lane.b32.xlu0 %v998, 64
      %v3165 = vpop.permute.xlu0 %3164
      %3166 = vrot.lane.b32.xlu0 %v999, 64
      %v3167 = vpop.permute.xlu0 %3166
      %3168 = vrot.lane.b32.xlu0 %v1000, 64
      %v3169 = vpop.permute.xlu0 %3168
      %3170 = vrot.lane.b32.xlu0 %v1001, 64
      %v3171 = vpop.permute.xlu0 %3170
      %3172 = vrot.lane.b32.xlu0 %v1002, 64
      %v3173 = vpop.permute.xlu0 %3172
      %3174 = vrot.lane.b32.xlu0 %v1003, 64
      %v3175 = vpop.permute.xlu0 %3174
      %3176 = vrot.lane.b32.xlu0 %v1004, 64
      %v3177 = vpop.permute.xlu0 %3176
      %3178 = vrot.lane.b32.xlu0 %v1005, 64
      %v3179 = vpop.permute.xlu0 %3178
      %3180 = vrot.lane.b32.xlu0 %v1006, 64
      %v3181 = vpop.permute.xlu0 %3180
      %3182 = vrot.lane.b32.xlu0 %v1007, 64
      %v3183 = vpop.permute.xlu0 %3182
      %v3184 = vsel %vm1024, %v3121, 0
      %v3186 = vsel %vm1024, %v3123, 0
      %v3188 = vsel %vm1024, %v3125, 0
      %v3190 = vsel %vm1024, %v3127, 0
      %v3192 = vsel %vm1024, %v3129, 0
      %v3194 = vsel %vm1024, %v3131, 0
      %v3196 = vsel %vm1024, %v3133, 0
      %v3198 = vsel %vm1024, %v3135, 0
      %v3200 = vsel %vm1024, %v3137, 0
      %v3202 = vsel %vm1024, %v3139, 0
      %v3204 = vsel %vm1024, %v3141, 0
      %v3206 = vsel %vm1024, %v3143, 0
      %v3208 = vsel %vm1024, %v3145, 0
      %v3210 = vsel %vm1024, %v3147, 0
      %v3212 = vsel %vm1024, %v3149, 0
      %v3214 = vsel %vm1024, %v3151, 0
      %v3216 = vsel %vm1024, %v3153, 0
      %v3218 = vsel %vm1024, %v3155, 0
      %v3220 = vsel %vm1024, %v3157, 0
      %v3222 = vsel %vm1024, %v3159, 0
      %v3224 = vsel %vm1024, %v3161, 0
      %v3226 = vsel %vm1024, %v3163, 0
      %v3228 = vsel %vm1024, %v3165, 0
      %v3230 = vsel %vm1024, %v3167, 0
      %v3232 = vsel %vm1024, %v3169, 0
      %v3234 = vsel %vm1024, %v3171, 0
      %v3236 = vsel %vm1024, %v3173, 0
      %v3238 = vsel %vm1024, %v3175, 0
      %v3240 = vsel %vm1024, %v3177, 0
      %v3242 = vsel %vm1024, %v3179, 0
      %v3244 = vsel %vm1024, %v3181, 0
      %v3246 = vsel %vm1024, %v3183, 0
      %3248 = vmatprep.subr.mxu0 0.0
      %3249 = vmatpush1.msra.mxu0 0.0
      %3250 = vmatprep.subr.mxu0 0.0
      %3251 = vmatpush1.msra.mxu0 0.0
      %3252 = vmatprep.subr.mxu0 0.0
      %3253 = vmatpush1.msra.mxu0 0.0
      %3254 = vmatprep.subr.mxu0 0.0
      %3255 = vmatpush1.msra.mxu0 0.0
      %3256 = vmatprep.subr.mxu0 0.0
      %3257 = vmatpush1.msra.mxu0 0.0
      %3258 = vmatprep.subr.mxu0 0.0
      %3259 = vmatpush1.msra.mxu0 0.0
      %3260 = vmatprep.subr.mxu0 0.0
      %3261 = vmatpush1.msra.mxu0 0.0
      %3262 = vmatprep.subr.mxu0 0.0
      %3263 = vmatpush1.msra.mxu0 0.0
      %3264 = vmatprep.subr.mxu0 0.0
      %3265 = vmatpush1.msra.mxu0 0.0
      %3266 = vmatprep.subr.mxu0 0.0
      %3267 = vmatpush1.msra.mxu0 0.0
      %3268 = vmatprep.subr.mxu0 0.0
      %3269 = vmatpush1.msra.mxu0 0.0
      %3270 = vmatprep.subr.mxu0 0.0
      %3271 = vmatpush1.msra.mxu0 0.0
      %3272 = vmatprep.subr.mxu0 %v3111
      %3273 = vmatpush1.msra.mxu0 %v3110
      %3274 = vmatprep.subr.mxu0 %v3109
      %3275 = vmatpush1.msra.mxu0 %v3108
      %3276 = vmatprep.subr.mxu0 %v3107
      %3277 = vmatpush1.msra.mxu0 %v3106
      %3278 = vmatprep.subr.mxu0 %v3105
      %3279 = vmatpush1.msra.mxu0 %v3104
      %3280 = vmatprep.subr.mxu0 0.0
      %3281 = vmatpush2.msra.mxu0 0.0
      %3282 = vmatprep.subr.mxu0 0.0
      %3283 = vmatpush2.msra.mxu0 0.0
      %3284 = vmatprep.subr.mxu0 0.0
      %3285 = vmatpush2.msra.mxu0 0.0
      %3286 = vmatprep.subr.mxu0 0.0
      %3287 = vmatpush2.msra.mxu0 0.0
      %3288 = vmatprep.subr.mxu0 0.0
      %3289 = vmatpush2.msra.mxu0 0.0
      %3290 = vmatprep.subr.mxu0 0.0
      %3291 = vmatpush2.msra.mxu0 0.0
      %3292 = vmatprep.subr.mxu0 0.0
      %3293 = vmatpush2.msra.mxu0 0.0
      %3294 = vmatprep.subr.mxu0 0.0
      %3295 = vmatpush2.msra.mxu0 0.0
      %3296 = vmatprep.subr.mxu0 0.0
      %3297 = vmatpush2.msra.mxu0 0.0
      %3298 = vmatprep.subr.mxu0 0.0
      %3299 = vmatpush2.msra.mxu0 0.0
      %3300 = vmatprep.subr.mxu0 0.0
      %3301 = vmatpush2.msra.mxu0 0.0
      %3302 = vmatprep.subr.mxu0 0.0
      %3303 = vmatpush2.msra.mxu0 0.0
      %3304 = vmatprep.subr.mxu0 0.0
      %3305 = vmatpush2.msra.mxu0 0.0
      %3306 = vmatprep.subr.mxu0 0.0
      %3307 = vmatpush2.msra.mxu0 0.0
      %3308 = vmatprep.subr.mxu0 0.0
      %3309 = vmatpush2.msra.mxu0 0.0
      %3310 = vmatprep.subr.mxu0 0.0
      %3311 = vmatpush2.msra.mxu0 0.0
      %3312 = vmatprep.mubr.f32.mxu0 0.0
      %3313 = vmatmul.mubr.f32.gmra.mxu0 %v3184
      %v3314 = vpop.f32.mrf.mxu0
      %v3315 = vadd.f32 0.0, %v3314
      %v3316 = vpop.f32.mrf.mxu0
      %v3317 = vadd.f32 0.0, %v3316
      %3318 = vmatprep.mubr.f32.mxu0 0.0
      %3319 = vmatmul.mubr.f32.gmra.mxu0 %v3186
      %v3320 = vpop.f32.mrf.mxu0
      %v3321 = vadd.f32 0.0, %v3320
      %v3322 = vpop.f32.mrf.mxu0
      %v3323 = vadd.f32 0.0, %v3322
      %3324 = vmatprep.mubr.f32.mxu0 0.0
      %3325 = vmatmul.mubr.f32.gmra.mxu0 %v3188
      %v3326 = vpop.f32.mrf.mxu0
      %v3327 = vadd.f32 0.0, %v3326
      %v3328 = vpop.f32.mrf.mxu0
      %v3329 = vadd.f32 0.0, %v3328
      %3330 = vmatprep.mubr.f32.mxu0 0.0
      %3331 = vmatmul.mubr.f32.gmra.mxu0 %v3190
      %v3332 = vpop.f32.mrf.mxu0
      %v3333 = vadd.f32 0.0, %v3332
      %v3334 = vpop.f32.mrf.mxu0
      %v3335 = vadd.f32 0.0, %v3334
      %3336 = vmatprep.mubr.f32.mxu0 0.0
      %3337 = vmatmul.mubr.f32.gmra.mxu0 %v3192
      %v3338 = vpop.f32.mrf.mxu0
      %v3339 = vadd.f32 0.0, %v3338
      %v3340 = vpop.f32.mrf.mxu0
      %v3341 = vadd.f32 0.0, %v3340
      %3342 = vmatprep.mubr.f32.mxu0 0.0
      %3343 = vmatmul.mubr.f32.gmra.mxu0 %v3194
      %v3344 = vpop.f32.mrf.mxu0
      %v3345 = vadd.f32 0.0, %v3344
      %v3346 = vpop.f32.mrf.mxu0
      %v3347 = vadd.f32 0.0, %v3346
      %3348 = vmatprep.mubr.f32.mxu0 0.0
      %3349 = vmatmul.mubr.f32.gmra.mxu0 %v3196
      %v3350 = vpop.f32.mrf.mxu0
      %v3351 = vadd.f32 0.0, %v3350
      %v3352 = vpop.f32.mrf.mxu0
      %v3353 = vadd.f32 0.0, %v3352
      %3354 = vmatprep.mubr.f32.mxu0 0.0
      %3355 = vmatmul.mubr.f32.gmra.mxu0 %v3198
      %v3356 = vpop.f32.mrf.mxu0
      %v3357 = vadd.f32 0.0, %v3356
      %v3358 = vpop.f32.mrf.mxu0
      %v3359 = vadd.f32 0.0, %v3358
      %3360 = vmatprep.mubr.f32.mxu0 0.0
      %3361 = vmatmul.mubr.f32.gmra.mxu0 %v3200
      %v3362 = vpop.f32.mrf.mxu0
      %v3363 = vadd.f32 0.0, %v3362
      %v3364 = vpop.f32.mrf.mxu0
      %v3365 = vadd.f32 0.0, %v3364
      %3366 = vmatprep.mubr.f32.mxu0 0.0
      %3367 = vmatmul.mubr.f32.gmra.mxu0 %v3202
      %v3368 = vpop.f32.mrf.mxu0
      %v3369 = vadd.f32 0.0, %v3368
      %v3370 = vpop.f32.mrf.mxu0
      %v3371 = vadd.f32 0.0, %v3370
      %3372 = vmatprep.mubr.f32.mxu0 0.0
      %3373 = vmatmul.mubr.f32.gmra.mxu0 %v3204
      %v3374 = vpop.f32.mrf.mxu0
      %v3375 = vadd.f32 0.0, %v3374
      %v3376 = vpop.f32.mrf.mxu0
      %v3377 = vadd.f32 0.0, %v3376
      %3378 = vmatprep.mubr.f32.mxu0 0.0
      %3379 = vmatmul.mubr.f32.gmra.mxu0 %v3206
      %v3380 = vpop.f32.mrf.mxu0
      %v3381 = vadd.f32 0.0, %v3380
      %v3382 = vpop.f32.mrf.mxu0
      %v3383 = vadd.f32 0.0, %v3382
      %3384 = vmatprep.mubr.f32.mxu0 0.0
      %3385 = vmatmul.mubr.f32.gmra.mxu0 %v3208
      %v3386 = vpop.f32.mrf.mxu0
      %v3387 = vadd.f32 0.0, %v3386
      %v3388 = vpop.f32.mrf.mxu0
      %v3389 = vadd.f32 0.0, %v3388
      %3390 = vmatprep.mubr.f32.mxu0 0.0
      %3391 = vmatmul.mubr.f32.gmra.mxu0 %v3210
      %v3392 = vpop.f32.mrf.mxu0
      %v3393 = vadd.f32 0.0, %v3392
      %v3394 = vpop.f32.mrf.mxu0
      %v3395 = vadd.f32 0.0, %v3394
      %3396 = vmatprep.mubr.f32.mxu0 0.0
      %3397 = vmatmul.mubr.f32.gmra.mxu0 %v3212
      %v3398 = vpop.f32.mrf.mxu0
      %v3399 = vadd.f32 0.0, %v3398
      %v3400 = vpop.f32.mrf.mxu0
      %v3401 = vadd.f32 0.0, %v3400
      %3402 = vmatprep.mubr.f32.mxu0 0.0
      %3403 = vmatmul.mubr.f32.gmra.mxu0 %v3214
      %v3404 = vpop.f32.mrf.mxu0
      %v3405 = vadd.f32 0.0, %v3404
      %v3406 = vpop.f32.mrf.mxu0
      %v3407 = vadd.f32 0.0, %v3406
      %3408 = vmatprep.mubr.f32.mxu0 0.0
      %3409 = vmatmul.mubr.f32.gmra.mxu0 %v3216
      %v3410 = vpop.f32.mrf.mxu0
      %v3411 = vadd.f32 0.0, %v3410
      %v3412 = vpop.f32.mrf.mxu0
      %v3413 = vadd.f32 0.0, %v3412
      %3414 = vmatprep.mubr.f32.mxu0 0.0
      %3415 = vmatmul.mubr.f32.gmra.mxu0 %v3218
      %v3416 = vpop.f32.mrf.mxu0
      %v3417 = vadd.f32 0.0, %v3416
      %v3418 = vpop.f32.mrf.mxu0
      %v3419 = vadd.f32 0.0, %v3418
      %3420 = vmatprep.mubr.f32.mxu0 0.0
      %3421 = vmatmul.mubr.f32.gmra.mxu0 %v3220
      %v3422 = vpop.f32.mrf.mxu0
      %v3423 = vadd.f32 0.0, %v3422
      %v3424 = vpop.f32.mrf.mxu0
      %v3425 = vadd.f32 0.0, %v3424
      %3426 = vmatprep.mubr.f32.mxu0 0.0
      %3427 = vmatmul.mubr.f32.gmra.mxu0 %v3222
      %v3428 = vpop.f32.mrf.mxu0
      %v3429 = vadd.f32 0.0, %v3428
      %v3430 = vpop.f32.mrf.mxu0
      %v3431 = vadd.f32 0.0, %v3430
      %3432 = vmatprep.mubr.f32.mxu0 0.0
      %3433 = vmatmul.mubr.f32.gmra.mxu0 %v3224
      %v3434 = vpop.f32.mrf.mxu0
      %v3435 = vadd.f32 0.0, %v3434
      %v3436 = vpop.f32.mrf.mxu0
      %v3437 = vadd.f32 0.0, %v3436
      %3438 = vmatprep.mubr.f32.mxu0 0.0
      %3439 = vmatmul.mubr.f32.gmra.mxu0 %v3226
      %v3440 = vpop.f32.mrf.mxu0
      %v3441 = vadd.f32 0.0, %v3440
      %v3442 = vpop.f32.mrf.mxu0
      %v3443 = vadd.f32 0.0, %v3442
      %3444 = vmatprep.mubr.f32.mxu0 0.0
      %3445 = vmatmul.mubr.f32.gmra.mxu0 %v3228
      %v3446 = vpop.f32.mrf.mxu0
      %v3447 = vadd.f32 0.0, %v3446
      %v3448 = vpop.f32.mrf.mxu0
      %v3449 = vadd.f32 0.0, %v3448
      %3450 = vmatprep.mubr.f32.mxu0 0.0
      %3451 = vmatmul.mubr.f32.gmra.mxu0 %v3230
      %v3452 = vpop.f32.mrf.mxu0
      %v3453 = vadd.f32 0.0, %v3452
      %v3454 = vpop.f32.mrf.mxu0
      %v3455 = vadd.f32 0.0, %v3454
      %3456 = vmatprep.mubr.f32.mxu0 0.0
      %3457 = vmatmul.mubr.f32.gmra.mxu0 %v3232
      %v3458 = vpop.f32.mrf.mxu0
      %v3459 = vadd.f32 0.0, %v3458
      %v3460 = vpop.f32.mrf.mxu0
      %v3461 = vadd.f32 0.0, %v3460
      %3462 = vmatprep.mubr.f32.mxu0 0.0
      %3463 = vmatmul.mubr.f32.gmra.mxu0 %v3234
      %v3464 = vpop.f32.mrf.mxu0
      %v3465 = vadd.f32 0.0, %v3464
      %v3466 = vpop.f32.mrf.mxu0
      %v3467 = vadd.f32 0.0, %v3466
      %3468 = vmatprep.mubr.f32.mxu0 0.0
      %3469 = vmatmul.mubr.f32.gmra.mxu0 %v3236
      %v3470 = vpop.f32.mrf.mxu0
      %v3471 = vadd.f32 0.0, %v3470
      %v3472 = vpop.f32.mrf.mxu0
      %v3473 = vadd.f32 0.0, %v3472
      %3474 = vmatprep.mubr.f32.mxu0 0.0
      %3475 = vmatmul.mubr.f32.gmra.mxu0 %v3238
      %v3476 = vpop.f32.mrf.mxu0
      %v3477 = vadd.f32 0.0, %v3476
      %v3478 = vpop.f32.mrf.mxu0
      %v3479 = vadd.f32 0.0, %v3478
      %3480 = vmatprep.mubr.f32.mxu0 0.0
      %3481 = vmatmul.mubr.f32.gmra.mxu0 %v3240
      %v3482 = vpop.f32.mrf.mxu0
      %v3483 = vadd.f32 0.0, %v3482
      %v3484 = vpop.f32.mrf.mxu0
      %v3485 = vadd.f32 0.0, %v3484
      %3486 = vmatprep.mubr.f32.mxu0 0.0
      %3487 = vmatmul.mubr.f32.gmra.mxu0 %v3242
      %v3488 = vpop.f32.mrf.mxu0
      %v3489 = vadd.f32 0.0, %v3488
      %v3490 = vpop.f32.mrf.mxu0
      %v3491 = vadd.f32 0.0, %v3490
      %3492 = vmatprep.mubr.f32.mxu0 0.0
      %3493 = vmatmul.mubr.f32.gmra.mxu0 %v3244
      %v3494 = vpop.f32.mrf.mxu0
      %v3495 = vadd.f32 0.0, %v3494
      %v3496 = vpop.f32.mrf.mxu0
      %v3497 = vadd.f32 0.0, %v3496
      %3498 = vmatprep.mubr.f32.mxu0 0.0
      %3499 = vmatmul.mubr.f32.gmra.mxu0 %v3246
      %v3500 = vpop.f32.mrf.mxu0
      %v3501 = vadd.f32 0.0, %v3500
      %v3502 = vpop.f32.mrf.mxu0
      %v3503 = vadd.f32 0.0, %v3502
      %3504 = vdwg.mxu0
      %v3505 = vmax.f32 %v3315, %v3317
      %3506 = vmax.xlane.f32.xlu0 %v3505
      %v3507 = vpop.xlane.xlu0 %3506
      %v3508 = vmax.f32 %v3321, %v3323
      %3509 = vmax.xlane.f32.xlu0 %v3508
      %v3510 = vpop.xlane.xlu0 %3509
      %v3511 = vmax.f32 %v3327, %v3329
      %3512 = vmax.xlane.f32.xlu0 %v3511
      %v3513 = vpop.xlane.xlu0 %3512
      %v3514 = vmax.f32 %v3333, %v3335
      %3515 = vmax.xlane.f32.xlu0 %v3514
      %v3516 = vpop.xlane.xlu0 %3515
      %v3517 = vmax.f32 %v3339, %v3341
      %3518 = vmax.xlane.f32.xlu0 %v3517
      %v3519 = vpop.xlane.xlu0 %3518
      %v3520 = vmax.f32 %v3345, %v3347
      %3521 = vmax.xlane.f32.xlu0 %v3520
      %v3522 = vpop.xlane.xlu0 %3521
      %v3523 = vmax.f32 %v3351, %v3353
      %3524 = vmax.xlane.f32.xlu0 %v3523
      %v3525 = vpop.xlane.xlu0 %3524
      %v3526 = vmax.f32 %v3357, %v3359
      %3527 = vmax.xlane.f32.xlu0 %v3526
      %v3528 = vpop.xlane.xlu0 %3527
      %v3529 = vmax.f32 %v3363, %v3365
      %3530 = vmax.xlane.f32.xlu0 %v3529
      %v3531 = vpop.xlane.xlu0 %3530
      %v3532 = vmax.f32 %v3369, %v3371
      %3533 = vmax.xlane.f32.xlu0 %v3532
      %v3534 = vpop.xlane.xlu0 %3533
      %v3535 = vmax.f32 %v3375, %v3377
      %3536 = vmax.xlane.f32.xlu0 %v3535
      %v3537 = vpop.xlane.xlu0 %3536
      %v3538 = vmax.f32 %v3381, %v3383
      %3539 = vmax.xlane.f32.xlu0 %v3538
      %v3540 = vpop.xlane.xlu0 %3539
      %v3541 = vmax.f32 %v3387, %v3389
      %3542 = vmax.xlane.f32.xlu0 %v3541
      %v3543 = vpop.xlane.xlu0 %3542
      %v3544 = vmax.f32 %v3393, %v3395
      %3545 = vmax.xlane.f32.xlu0 %v3544
      %v3546 = vpop.xlane.xlu0 %3545
      %v3547 = vmax.f32 %v3399, %v3401
      %3548 = vmax.xlane.f32.xlu0 %v3547
      %v3549 = vpop.xlane.xlu0 %3548
      %v3550 = vmax.f32 %v3405, %v3407
      %3551 = vmax.xlane.f32.xlu0 %v3550
      %v3552 = vpop.xlane.xlu0 %3551
      %v3553 = vmax.f32 %v3411, %v3413
      %3554 = vmax.xlane.f32.xlu0 %v3553
      %v3555 = vpop.xlane.xlu0 %3554
      %v3556 = vmax.f32 %v3417, %v3419
      %3557 = vmax.xlane.f32.xlu0 %v3556
      %v3558 = vpop.xlane.xlu0 %3557
      %v3559 = vmax.f32 %v3423, %v3425
      %3560 = vmax.xlane.f32.xlu0 %v3559
      %v3561 = vpop.xlane.xlu0 %3560
      %v3562 = vmax.f32 %v3429, %v3431
      %3563 = vmax.xlane.f32.xlu0 %v3562
      %v3564 = vpop.xlane.xlu0 %3563
      %v3565 = vmax.f32 %v3435, %v3437
      %3566 = vmax.xlane.f32.xlu0 %v3565
      %v3567 = vpop.xlane.xlu0 %3566
      %v3568 = vmax.f32 %v3441, %v3443
      %3569 = vmax.xlane.f32.xlu0 %v3568
      %v3570 = vpop.xlane.xlu0 %3569
      %v3571 = vmax.f32 %v3447, %v3449
      %3572 = vmax.xlane.f32.xlu0 %v3571
      %v3573 = vpop.xlane.xlu0 %3572
      %v3574 = vmax.f32 %v3453, %v3455
      %3575 = vmax.xlane.f32.xlu0 %v3574
      %v3576 = vpop.xlane.xlu0 %3575
      %v3577 = vmax.f32 %v3459, %v3461
      %3578 = vmax.xlane.f32.xlu0 %v3577
      %v3579 = vpop.xlane.xlu0 %3578
      %v3580 = vmax.f32 %v3465, %v3467
      %3581 = vmax.xlane.f32.xlu0 %v3580
      %v3582 = vpop.xlane.xlu0 %3581
      %v3583 = vmax.f32 %v3471, %v3473
      %3584 = vmax.xlane.f32.xlu0 %v3583
      %v3585 = vpop.xlane.xlu0 %3584
      %v3586 = vmax.f32 %v3477, %v3479
      %3587 = vmax.xlane.f32.xlu0 %v3586
      %v3588 = vpop.xlane.xlu0 %3587
      %v3589 = vmax.f32 %v3483, %v3485
      %3590 = vmax.xlane.f32.xlu0 %v3589
      %v3591 = vpop.xlane.xlu0 %3590
      %v3592 = vmax.f32 %v3489, %v3491
      %3593 = vmax.xlane.f32.xlu0 %v3592
      %v3594 = vpop.xlane.xlu0 %3593
      %v3595 = vmax.f32 %v3495, %v3497
      %3596 = vmax.xlane.f32.xlu0 %v3595
      %v3597 = vpop.xlane.xlu0 %3596
      %v3598 = vmax.f32 %v3501, %v3503
      %3599 = vmax.xlane.f32.xlu0 %v3598
      %v3600 = vpop.xlane.xlu0 %3599
      %v3601 = vsub.f32 %v3315, %v3507
      %v3602 = vsub.f32 %v3317, %v3507
      %v3603 = vsub.f32 %v3321, %v3510
      %v3604 = vsub.f32 %v3323, %v3510
      %v3605 = vsub.f32 %v3327, %v3513
      %v3606 = vsub.f32 %v3329, %v3513
      %v3607 = vsub.f32 %v3333, %v3516
      %v3608 = vsub.f32 %v3335, %v3516
      %v3609 = vsub.f32 %v3339, %v3519
      %v3610 = vsub.f32 %v3341, %v3519
      %v3611 = vsub.f32 %v3345, %v3522
      %v3612 = vsub.f32 %v3347, %v3522
      %v3613 = vsub.f32 %v3351, %v3525
      %v3614 = vsub.f32 %v3353, %v3525
      %v3615 = vsub.f32 %v3357, %v3528
      %v3616 = vsub.f32 %v3359, %v3528
      %v3617 = vsub.f32 %v3363, %v3531
      %v3618 = vsub.f32 %v3365, %v3531
      %v3619 = vsub.f32 %v3369, %v3534
      %v3620 = vsub.f32 %v3371, %v3534
      %v3621 = vsub.f32 %v3375, %v3537
      %v3622 = vsub.f32 %v3377, %v3537
      %v3623 = vsub.f32 %v3381, %v3540
      %v3624 = vsub.f32 %v3383, %v3540
      %v3625 = vsub.f32 %v3387, %v3543
      %v3626 = vsub.f32 %v3389, %v3543
      %v3627 = vsub.f32 %v3393, %v3546
      %v3628 = vsub.f32 %v3395, %v3546
      %v3629 = vsub.f32 %v3399, %v3549
      %v3630 = vsub.f32 %v3401, %v3549
      %v3631 = vsub.f32 %v3405, %v3552
      %v3632 = vsub.f32 %v3407, %v3552
      %v3633 = vsub.f32 %v3411, %v3555
      %v3634 = vsub.f32 %v3413, %v3555
      %v3635 = vsub.f32 %v3417, %v3558
      %v3636 = vsub.f32 %v3419, %v3558
      %v3637 = vsub.f32 %v3423, %v3561
      %v3638 = vsub.f32 %v3425, %v3561
      %v3639 = vsub.f32 %v3429, %v3564
      %v3640 = vsub.f32 %v3431, %v3564
      %v3641 = vsub.f32 %v3435, %v3567
      %v3642 = vsub.f32 %v3437, %v3567
      %v3643 = vsub.f32 %v3441, %v3570
      %v3644 = vsub.f32 %v3443, %v3570
      %v3645 = vsub.f32 %v3447, %v3573
      %v3646 = vsub.f32 %v3449, %v3573
      %v3647 = vsub.f32 %v3453, %v3576
      %v3648 = vsub.f32 %v3455, %v3576
      %v3649 = vsub.f32 %v3459, %v3579
      %v3650 = vsub.f32 %v3461, %v3579
      %v3651 = vsub.f32 %v3465, %v3582
      %v3652 = vsub.f32 %v3467, %v3582
      %v3653 = vsub.f32 %v3471, %v3585
      %v3654 = vsub.f32 %v3473, %v3585
      %v3655 = vsub.f32 %v3477, %v3588
      %v3656 = vsub.f32 %v3479, %v3588
      %v3657 = vsub.f32 %v3483, %v3591
      %v3658 = vsub.f32 %v3485, %v3591
      %v3659 = vsub.f32 %v3489, %v3594
      %v3660 = vsub.f32 %v3491, %v3594
      %v3661 = vsub.f32 %v3495, %v3597
      %v3662 = vsub.f32 %v3497, %v3597
      %v3663 = vsub.f32 %v3501, %v3600
      %v3664 = vsub.f32 %v3503, %v3600
      %v3665 = vmul.f32 %v3601, 1.442695
      %v3666 = vpow.pop %v3665
      %v3667 = vmul.f32 %v3602, 1.442695
      %v3668 = vpow.pop %v3667
      %v3669 = vmul.f32 %v3603, 1.442695
      %v3670 = vpow.pop %v3669
      %v3671 = vmul.f32 %v3604, 1.442695
      %v3672 = vpow.pop %v3671
      %v3673 = vmul.f32 %v3605, 1.442695
      %v3674 = vpow.pop %v3673
      %v3675 = vmul.f32 %v3606, 1.442695
      %v3676 = vpow.pop %v3675
      %v3677 = vmul.f32 %v3607, 1.442695
      %v3678 = vpow.pop %v3677
      %v3679 = vmul.f32 %v3608, 1.442695
      %v3680 = vpow.pop %v3679
      %v3681 = vmul.f32 %v3609, 1.442695
      %v3682 = vpow.pop %v3681
      %v3683 = vmul.f32 %v3610, 1.442695
      %v3684 = vpow.pop %v3683
      %v3685 = vmul.f32 %v3611, 1.442695
      %v3686 = vpow.pop %v3685
      %v3687 = vmul.f32 %v3612, 1.442695
      %v3688 = vpow.pop %v3687
      %v3689 = vmul.f32 %v3613, 1.442695
      %v3690 = vpow.pop %v3689
      %v3691 = vmul.f32 %v3614, 1.442695
      %v3692 = vpow.pop %v3691
      %v3693 = vmul.f32 %v3615, 1.442695
      %v3694 = vpow.pop %v3693
      %v3695 = vmul.f32 %v3616, 1.442695
      %v3696 = vpow.pop %v3695
      %v3697 = vmul.f32 %v3617, 1.442695
      %v3698 = vpow.pop %v3697
      %v3699 = vmul.f32 %v3618, 1.442695
      %v3700 = vpow.pop %v3699
      %v3701 = vmul.f32 %v3619, 1.442695
      %v3702 = vpow.pop %v3701
      %v3703 = vmul.f32 %v3620, 1.442695
      %v3704 = vpow.pop %v3703
      %v3705 = vmul.f32 %v3621, 1.442695
      %v3706 = vpow.pop %v3705
      %v3707 = vmul.f32 %v3622, 1.442695
      %v3708 = vpow.pop %v3707
      %v3709 = vmul.f32 %v3623, 1.442695
      %v3710 = vpow.pop %v3709
      %v3711 = vmul.f32 %v3624, 1.442695
      %v3712 = vpow.pop %v3711
      %v3713 = vmul.f32 %v3625, 1.442695
      %v3714 = vpow.pop %v3713
      %v3715 = vmul.f32 %v3626, 1.442695
      %v3716 = vpow.pop %v3715
      %v3717 = vmul.f32 %v3627, 1.442695
      %v3718 = vpow.pop %v3717
      %v3719 = vmul.f32 %v3628, 1.442695
      %v3720 = vpow.pop %v3719
      %v3721 = vmul.f32 %v3629, 1.442695
      %v3722 = vpow.pop %v3721
      %v3723 = vmul.f32 %v3630, 1.442695
      %v3724 = vpow.pop %v3723
      %v3725 = vmul.f32 %v3631, 1.442695
      %v3726 = vpow.pop %v3725
      %v3727 = vmul.f32 %v3632, 1.442695
      %v3728 = vpow.pop %v3727
      %v3729 = vmul.f32 %v3633, 1.442695
      %v3730 = vpow.pop %v3729
      %v3731 = vmul.f32 %v3634, 1.442695
      %v3732 = vpow.pop %v3731
      %v3733 = vmul.f32 %v3635, 1.442695
      %v3734 = vpow.pop %v3733
      %v3735 = vmul.f32 %v3636, 1.442695
      %v3736 = vpow.pop %v3735
      %v3737 = vmul.f32 %v3637, 1.442695
      %v3738 = vpow.pop %v3737
      %v3739 = vmul.f32 %v3638, 1.442695
      %v3740 = vpow.pop %v3739
      %v3741 = vmul.f32 %v3639, 1.442695
      %v3742 = vpow.pop %v3741
      %v3743 = vmul.f32 %v3640, 1.442695
      %v3744 = vpow.pop %v3743
      %v3745 = vmul.f32 %v3641, 1.442695
      %v3746 = vpow.pop %v3745
      %v3747 = vmul.f32 %v3642, 1.442695
      %v3748 = vpow.pop %v3747
      %v3749 = vmul.f32 %v3643, 1.442695
      %v3750 = vpow.pop %v3749
      %v3751 = vmul.f32 %v3644, 1.442695
      %v3752 = vpow.pop %v3751
      %v3753 = vmul.f32 %v3645, 1.442695
      %v3754 = vpow.pop %v3753
      %v3755 = vmul.f32 %v3646, 1.442695
      %v3756 = vpow.pop %v3755
      %v3757 = vmul.f32 %v3647, 1.442695
      %v3758 = vpow.pop %v3757
      %v3759 = vmul.f32 %v3648, 1.442695
      %v3760 = vpow.pop %v3759
      %v3761 = vmul.f32 %v3649, 1.442695
      %v3762 = vpow.pop %v3761
      %v3763 = vmul.f32 %v3650, 1.442695
      %v3764 = vpow.pop %v3763
      %v3765 = vmul.f32 %v3651, 1.442695
      %v3766 = vpow.pop %v3765
      %v3767 = vmul.f32 %v3652, 1.442695
      %v3768 = vpow.pop %v3767
      %v3769 = vmul.f32 %v3653, 1.442695
      %v3770 = vpow.pop %v3769
      %v3771 = vmul.f32 %v3654, 1.442695
      %v3772 = vpow.pop %v3771
      %v3773 = vmul.f32 %v3655, 1.442695
      %v3774 = vpow.pop %v3773
      %v3775 = vmul.f32 %v3656, 1.442695
      %v3776 = vpow.pop %v3775
      %v3777 = vmul.f32 %v3657, 1.442695
      %v3778 = vpow.pop %v3777
      %v3779 = vmul.f32 %v3658, 1.442695
      %v3780 = vpow.pop %v3779
      %v3781 = vmul.f32 %v3659, 1.442695
      %v3782 = vpow.pop %v3781
      %v3783 = vmul.f32 %v3660, 1.442695
      %v3784 = vpow.pop %v3783
      %v3785 = vmul.f32 %v3661, 1.442695
      %v3786 = vpow.pop %v3785
      %v3787 = vmul.f32 %v3662, 1.442695
      %v3788 = vpow.pop %v3787
      %v3789 = vmul.f32 %v3663, 1.442695
      %v3790 = vpow.pop %v3789
      %v3791 = vmul.f32 %v3664, 1.442695
      %v3792 = vpow.pop %v3791
      %v3793 = vadd.f32 %v3666, %v3668
      %3794 = vadd.xlane.f32.xlu0 %v3793
      %v3795 = vpop.xlane.xlu0 %3794
      %v3796 = vadd.f32 %v3670, %v3672
      %3797 = vadd.xlane.f32.xlu0 %v3796
      %v3798 = vpop.xlane.xlu0 %3797
      %v3799 = vadd.f32 %v3674, %v3676
      %3800 = vadd.xlane.f32.xlu0 %v3799
      %v3801 = vpop.xlane.xlu0 %3800
      %v3802 = vadd.f32 %v3678, %v3680
      %3803 = vadd.xlane.f32.xlu0 %v3802
      %v3804 = vpop.xlane.xlu0 %3803
      %v3805 = vadd.f32 %v3682, %v3684
      %3806 = vadd.xlane.f32.xlu0 %v3805
      %v3807 = vpop.xlane.xlu0 %3806
      %v3808 = vadd.f32 %v3686, %v3688
      %3809 = vadd.xlane.f32.xlu0 %v3808
      %v3810 = vpop.xlane.xlu0 %3809
      %v3811 = vadd.f32 %v3690, %v3692
      %3812 = vadd.xlane.f32.xlu0 %v3811
      %v3813 = vpop.xlane.xlu0 %3812
      %v3814 = vadd.f32 %v3694, %v3696
      %3815 = vadd.xlane.f32.xlu0 %v3814
      %v3816 = vpop.xlane.xlu0 %3815
      %v3817 = vadd.f32 %v3698, %v3700
      %3818 = vadd.xlane.f32.xlu0 %v3817
      %v3819 = vpop.xlane.xlu0 %3818
      %v3820 = vadd.f32 %v3702, %v3704
      %3821 = vadd.xlane.f32.xlu0 %v3820
      %v3822 = vpop.xlane.xlu0 %3821
      %v3823 = vadd.f32 %v3706, %v3708
      %3824 = vadd.xlane.f32.xlu0 %v3823
      %v3825 = vpop.xlane.xlu0 %3824
      %v3826 = vadd.f32 %v3710, %v3712
      %3827 = vadd.xlane.f32.xlu0 %v3826
      %v3828 = vpop.xlane.xlu0 %3827
      %v3829 = vadd.f32 %v3714, %v3716
      %3830 = vadd.xlane.f32.xlu0 %v3829
      %v3831 = vpop.xlane.xlu0 %3830
      %v3832 = vadd.f32 %v3718, %v3720
      %3833 = vadd.xlane.f32.xlu0 %v3832
      %v3834 = vpop.xlane.xlu0 %3833
      %v3835 = vadd.f32 %v3722, %v3724
      %3836 = vadd.xlane.f32.xlu0 %v3835
      %v3837 = vpop.xlane.xlu0 %3836
      %v3838 = vadd.f32 %v3726, %v3728
      %3839 = vadd.xlane.f32.xlu0 %v3838
      %v3840 = vpop.xlane.xlu0 %3839
      %v3841 = vadd.f32 %v3730, %v3732
      %3842 = vadd.xlane.f32.xlu0 %v3841
      %v3843 = vpop.xlane.xlu0 %3842
      %v3844 = vadd.f32 %v3734, %v3736
      %3845 = vadd.xlane.f32.xlu0 %v3844
      %v3846 = vpop.xlane.xlu0 %3845
      %v3847 = vadd.f32 %v3738, %v3740
      %3848 = vadd.xlane.f32.xlu0 %v3847
      %v3849 = vpop.xlane.xlu0 %3848
      %v3850 = vadd.f32 %v3742, %v3744
      %3851 = vadd.xlane.f32.xlu0 %v3850
      %v3852 = vpop.xlane.xlu0 %3851
      %v3853 = vadd.f32 %v3746, %v3748
      %3854 = vadd.xlane.f32.xlu0 %v3853
      %v3855 = vpop.xlane.xlu0 %3854
      %v3856 = vadd.f32 %v3750, %v3752
      %3857 = vadd.xlane.f32.xlu0 %v3856
      %v3858 = vpop.xlane.xlu0 %3857
      %v3859 = vadd.f32 %v3754, %v3756
      %3860 = vadd.xlane.f32.xlu0 %v3859
      %v3861 = vpop.xlane.xlu0 %3860
      %v3862 = vadd.f32 %v3758, %v3760
      %3863 = vadd.xlane.f32.xlu0 %v3862
      %v3864 = vpop.xlane.xlu0 %3863
      %v3865 = vadd.f32 %v3762, %v3764
      %3866 = vadd.xlane.f32.xlu0 %v3865
      %v3867 = vpop.xlane.xlu0 %3866
      %v3868 = vadd.f32 %v3766, %v3768
      %3869 = vadd.xlane.f32.xlu0 %v3868
      %v3870 = vpop.xlane.xlu0 %3869
      %v3871 = vadd.f32 %v3770, %v3772
      %3872 = vadd.xlane.f32.xlu0 %v3871
      %v3873 = vpop.xlane.xlu0 %3872
      %v3874 = vadd.f32 %v3774, %v3776
      %3875 = vadd.xlane.f32.xlu0 %v3874
      %v3876 = vpop.xlane.xlu0 %3875
      %v3877 = vadd.f32 %v3778, %v3780
      %3878 = vadd.xlane.f32.xlu0 %v3877
      %v3879 = vpop.xlane.xlu0 %3878
      %v3880 = vadd.f32 %v3782, %v3784
      %3881 = vadd.xlane.f32.xlu0 %v3880
      %v3882 = vpop.xlane.xlu0 %3881
      %v3883 = vadd.f32 %v3786, %v3788
      %3884 = vadd.xlane.f32.xlu0 %v3883
      %v3885 = vpop.xlane.xlu0 %3884
      %v3886 = vadd.f32 %v3790, %v3792
      %3887 = vadd.xlane.f32.xlu0 %v3886
      %v3888 = vpop.xlane.xlu0 %3887
      %v3889 = vrcp.pop %v3795
      %v3890 = vrcp.pop %v3798
      %v3891 = vrcp.pop %v3801
      %v3892 = vrcp.pop %v3804
      %v3893 = vrcp.pop %v3807
      %v3894 = vrcp.pop %v3810
      %v3895 = vrcp.pop %v3813
      %v3896 = vrcp.pop %v3816
      %v3897 = vrcp.pop %v3819
      %v3898 = vrcp.pop %v3822
      %v3899 = vrcp.pop %v3825
      %v3900 = vrcp.pop %v3828
      %v3901 = vrcp.pop %v3831
      %v3902 = vrcp.pop %v3834
      %v3903 = vrcp.pop %v3837
      %v3904 = vrcp.pop %v3840
      %v3905 = vrcp.pop %v3843
      %v3906 = vrcp.pop %v3846
      %v3907 = vrcp.pop %v3849
      %v3908 = vrcp.pop %v3852
      %v3909 = vrcp.pop %v3855
      %v3910 = vrcp.pop %v3858
      %v3911 = vrcp.pop %v3861
      %v3912 = vrcp.pop %v3864
      %v3913 = vrcp.pop %v3867
      %v3914 = vrcp.pop %v3870
      %v3915 = vrcp.pop %v3873
      %v3916 = vrcp.pop %v3876
      %v3917 = vrcp.pop %v3879
      %v3918 = vrcp.pop %v3882
      %v3919 = vrcp.pop %v3885
      %v3920 = vrcp.pop %v3888
      %v3921 = vmul.f32 %v3666, %v3889
      %v3922 = vmul.f32 %v3668, %v3889
      %v3923 = vmul.f32 %v3670, %v3890
      %v3924 = vmul.f32 %v3672, %v3890
      %v3925 = vmul.f32 %v3674, %v3891
      %v3926 = vmul.f32 %v3676, %v3891
      %v3927 = vmul.f32 %v3678, %v3892
      %v3928 = vmul.f32 %v3680, %v3892
      %v3929 = vmul.f32 %v3682, %v3893
      %v3930 = vmul.f32 %v3684, %v3893
      %v3931 = vmul.f32 %v3686, %v3894
      %v3932 = vmul.f32 %v3688, %v3894
      %v3933 = vmul.f32 %v3690, %v3895
      %v3934 = vmul.f32 %v3692, %v3895
      %v3935 = vmul.f32 %v3694, %v3896
      %v3936 = vmul.f32 %v3696, %v3896
      %v3937 = vmul.f32 %v3698, %v3897
      %v3938 = vmul.f32 %v3700, %v3897
      %v3939 = vmul.f32 %v3702, %v3898
      %v3940 = vmul.f32 %v3704, %v3898
      %v3941 = vmul.f32 %v3706, %v3899
      %v3942 = vmul.f32 %v3708, %v3899
      %v3943 = vmul.f32 %v3710, %v3900
      %v3944 = vmul.f32 %v3712, %v3900
      %v3945 = vmul.f32 %v3714, %v3901
      %v3946 = vmul.f32 %v3716, %v3901
      %v3947 = vmul.f32 %v3718, %v3902
      %v3948 = vmul.f32 %v3720, %v3902
      %v3949 = vmul.f32 %v3722, %v3903
      %v3950 = vmul.f32 %v3724, %v3903
      %v3951 = vmul.f32 %v3726, %v3904
      %v3952 = vmul.f32 %v3728, %v3904
      %v3953 = vmul.f32 %v3730, %v3905
      %v3954 = vmul.f32 %v3732, %v3905
      %v3955 = vmul.f32 %v3734, %v3906
      %v3956 = vmul.f32 %v3736, %v3906
      %v3957 = vmul.f32 %v3738, %v3907
      %v3958 = vmul.f32 %v3740, %v3907
      %v3959 = vmul.f32 %v3742, %v3908
      %v3960 = vmul.f32 %v3744, %v3908
      %v3961 = vmul.f32 %v3746, %v3909
      %v3962 = vmul.f32 %v3748, %v3909
      %v3963 = vmul.f32 %v3750, %v3910
      %v3964 = vmul.f32 %v3752, %v3910
      %v3965 = vmul.f32 %v3754, %v3911
      %v3966 = vmul.f32 %v3756, %v3911
      %v3967 = vmul.f32 %v3758, %v3912
      %v3968 = vmul.f32 %v3760, %v3912
      %v3969 = vmul.f32 %v3762, %v3913
      %v3970 = vmul.f32 %v3764, %v3913
      %v3971 = vmul.f32 %v3766, %v3914
      %v3972 = vmul.f32 %v3768, %v3914
      %v3973 = vmul.f32 %v3770, %v3915
      %v3974 = vmul.f32 %v3772, %v3915
      %v3975 = vmul.f32 %v3774, %v3916
      %v3976 = vmul.f32 %v3776, %v3916
      %v3977 = vmul.f32 %v3778, %v3917
      %v3978 = vmul.f32 %v3780, %v3917
      %v3979 = vmul.f32 %v3782, %v3918
      %v3980 = vmul.f32 %v3784, %v3918
      %v3981 = vmul.f32 %v3786, %v3919
      %v3982 = vmul.f32 %v3788, %v3919
      %v3983 = vmul.f32 %v3790, %v3920
      %v3984 = vmul.f32 %v3792, %v3920
      %s3985 = scalar_lea.vmem %s2, 128
      %v3986 = vld [vmem:[%s3985] sm:$0xff]
      %v3987 = vld [vmem:[%s3985 + $0x8] sm:$0xff]
      %v3988 = vld [vmem:[%s3985 + $0x10] sm:$0xff]
      %v3989 = vld [vmem:[%s3985 + $0x18] sm:$0xff]
      %v3990 = vld [vmem:[%s3985 + $0x20] sm:$0xff]
      %v3991 = vld [vmem:[%s3985 + $0x28] sm:$0xff]
      %v3992 = vld [vmem:[%s3985 + $0x30] sm:$0xff]
      %v3993 = vld [vmem:[%s3985 + $0x38] sm:$0xff]
      %3994 = vmatprep.subr.mxu0 %v3952
      %3995 = vmatpush1.msra.mxu0 %v3951
      %3996 = vmatprep.subr.mxu0 %v3950
      %3997 = vmatpush1.msra.mxu0 %v3949
      %3998 = vmatprep.subr.mxu0 %v3948
      %3999 = vmatpush1.msra.mxu0 %v3947
      %4000 = vmatprep.subr.mxu0 %v3946
      %4001 = vmatpush1.msra.mxu0 %v3945
      %4002 = vmatprep.subr.mxu0 %v3944
      %4003 = vmatpush1.msra.mxu0 %v3943
      %4004 = vmatprep.subr.mxu0 %v3942
      %4005 = vmatpush1.msra.mxu0 %v3941
      %4006 = vmatprep.subr.mxu0 %v3940
      %4007 = vmatpush1.msra.mxu0 %v3939
      %4008 = vmatprep.subr.mxu0 %v3938
      %4009 = vmatpush1.msra.mxu0 %v3937
      %4010 = vmatprep.subr.mxu0 %v3936
      %4011 = vmatpush1.msra.mxu0 %v3935
      %4012 = vmatprep.subr.mxu0 %v3934
      %4013 = vmatpush1.msra.mxu0 %v3933
      %4014 = vmatprep.subr.mxu0 %v3932
      %4015 = vmatpush1.msra.mxu0 %v3931
      %4016 = vmatprep.subr.mxu0 %v3930
      %4017 = vmatpush1.msra.mxu0 %v3929
      %4018 = vmatprep.subr.mxu0 %v3928
      %4019 = vmatpush1.msra.mxu0 %v3927
      %4020 = vmatprep.subr.mxu0 %v3926
      %4021 = vmatpush1.msra.mxu0 %v3925
      %4022 = vmatprep.subr.mxu0 %v3924
      %4023 = vmatpush1.msra.mxu0 %v3923
      %4024 = vmatprep.subr.mxu0 %v3922
      %4025 = vmatpush1.msra.mxu0 %v3921
      %4026 = vmatprep.subr.mxu0 %v3984
      %4027 = vmatpush2.msra.mxu0 %v3983
      %4028 = vmatprep.subr.mxu0 %v3982
      %4029 = vmatpush2.msra.mxu0 %v3981
      %4030 = vmatprep.subr.mxu0 %v3980
      %4031 = vmatpush2.msra.mxu0 %v3979
      %4032 = vmatprep.subr.mxu0 %v3978
      %4033 = vmatpush2.msra.mxu0 %v3977
      %4034 = vmatprep.subr.mxu0 %v3976
      %4035 = vmatpush2.msra.mxu0 %v3975
      %4036 = vmatprep.subr.mxu0 %v3974
      %4037 = vmatpush2.msra.mxu0 %v3973
      %4038 = vmatprep.subr.mxu0 %v3972
      %4039 = vmatpush2.msra.mxu0 %v3971
      %4040 = vmatprep.subr.mxu0 %v3970
      %4041 = vmatpush2.msra.mxu0 %v3969
      %4042 = vmatprep.subr.mxu0 %v3968
      %4043 = vmatpush2.msra.mxu0 %v3967
      %4044 = vmatprep.subr.mxu0 %v3966
      %4045 = vmatpush2.msra.mxu0 %v3965
      %4046 = vmatprep.subr.mxu0 %v3964
      %4047 = vmatpush2.msra.mxu0 %v3963
      %4048 = vmatprep.subr.mxu0 %v3962
      %4049 = vmatpush2.msra.mxu0 %v3961
      %4050 = vmatprep.subr.mxu0 %v3960
      %4051 = vmatpush2.msra.mxu0 %v3959
      %4052 = vmatprep.subr.mxu0 %v3958
      %4053 = vmatpush2.msra.mxu0 %v3957
      %4054 = vmatprep.subr.mxu0 %v3956
      %4055 = vmatpush2.msra.mxu0 %v3955
      %4056 = vmatprep.subr.mxu0 %v3954
      %4057 = vmatpush2.msra.mxu0 %v3953
      %4058 = vmatprep.mubr.f32.mxu0 %v3987
      %4059 = vmatmul.mubr.f32.gmra.mxu0 %v3986
      %v4060 = vpop.f32.mrf.mxu0
      %v4061 = vadd.f32 0.0, %v4060
      %v4062 = vpop.f32.mrf.mxu0
      %v4063 = vadd.f32 0.0, %v4062
      %4064 = vmatprep.mubr.f32.mxu0 %v3989
      %4065 = vmatmul.mubr.f32.gmra.mxu0 %v3988
      %v4066 = vpop.f32.mrf.mxu0
      %v4067 = vadd.f32 0.0, %v4066
      %v4068 = vpop.f32.mrf.mxu0
      %v4069 = vadd.f32 0.0, %v4068
      %4070 = vmatprep.mubr.f32.mxu0 %v3991
      %4071 = vmatmul.mubr.f32.gmra.mxu0 %v3990
      %v4072 = vpop.f32.mrf.mxu0
      %v4073 = vadd.f32 0.0, %v4072
      %v4074 = vpop.f32.mrf.mxu0
      %v4075 = vadd.f32 0.0, %v4074
      %4076 = vmatprep.mubr.f32.mxu0 %v3993
      %4077 = vmatmul.mubr.f32.gmra.mxu0 %v3992
      %v4078 = vpop.f32.mrf.mxu0
      %v4079 = vadd.f32 0.0, %v4078
      %v4080 = vpop.f32.mrf.mxu0
      %v4081 = vadd.f32 0.0, %v4080
      %4082 = vdwg.mxu0
      %4083 = vmatprep.subr.mxu0 0.0
      %4084 = vmatpush1.xpose.msra.mxu0 0.0
      %4085 = vmatprep.subr.mxu0 0.0
      %4086 = vmatpush1.xpose.msra.mxu0 0.0
      %4087 = vmatprep.subr.mxu0 0.0
      %4088 = vmatpush1.xpose.msra.mxu0 0.0
      %4089 = vmatprep.subr.mxu0 0.0
      %4090 = vmatpush1.xpose.msra.mxu0 0.0
      %4091 = vmatprep.subr.mxu0 0.0
      %4092 = vmatpush1.xpose.msra.mxu0 0.0
      %4093 = vmatprep.subr.mxu0 0.0
      %4094 = vmatpush1.xpose.msra.mxu0 0.0
      %4095 = vmatprep.subr.mxu0 0.0
      %4096 = vmatpush1.xpose.msra.mxu0 0.0
      %4097 = vmatprep.subr.mxu0 0.0
      %4098 = vmatpush1.xpose.msra.mxu0 0.0
      %4099 = vmatprep.subr.mxu0 0.0
      %4100 = vmatpush1.xpose.msra.mxu0 0.0
      %4101 = vmatprep.subr.mxu0 0.0
      %4102 = vmatpush1.xpose.msra.mxu0 0.0
      %4103 = vmatprep.subr.mxu0 0.0
      %4104 = vmatpush1.xpose.msra.mxu0 0.0
      %4105 = vmatprep.subr.mxu0 0.0
      %4106 = vmatpush1.xpose.msra.mxu0 0.0
      %4107 = vmatprep.subr.mxu0 %v3119
      %4108 = vmatpush1.xpose.msra.mxu0 %v3118
      %4109 = vmatprep.subr.mxu0 %v3117
      %4110 = vmatpush1.xpose.msra.mxu0 %v3116
      %4111 = vmatprep.subr.mxu0 %v3115
      %4112 = vmatpush1.xpose.msra.mxu0 %v3114
      %4113 = vmatprep.subr.mxu0 %v3113
      %4114 = vmatpush1.xpose.msra.mxu0 %v3112
      %4115 = vmatprep.subr.mxu0 0.0
      %4116 = vmatpush2.xpose.msra.mxu0 0.0
      %4117 = vmatprep.subr.mxu0 0.0
      %4118 = vmatpush2.xpose.msra.mxu0 0.0
      %4119 = vmatprep.subr.mxu0 0.0
      %4120 = vmatpush2.xpose.msra.mxu0 0.0
      %4121 = vmatprep.subr.mxu0 0.0
      %4122 = vmatpush2.xpose.msra.mxu0 0.0
      %4123 = vmatprep.subr.mxu0 0.0
      %4124 = vmatpush2.xpose.msra.mxu0 0.0
      %4125 = vmatprep.subr.mxu0 0.0
      %4126 = vmatpush2.xpose.msra.mxu0 0.0
      %4127 = vmatprep.subr.mxu0 0.0
      %4128 = vmatpush2.xpose.msra.mxu0 0.0
      %4129 = vmatprep.subr.mxu0 0.0
      %4130 = vmatpush2.xpose.msra.mxu0 0.0
      %4131 = vmatprep.subr.mxu0 0.0
      %4132 = vmatpush2.xpose.msra.mxu0 0.0
      %4133 = vmatprep.subr.mxu0 0.0
      %4134 = vmatpush2.xpose.msra.mxu0 0.0
      %4135 = vmatprep.subr.mxu0 0.0
      %4136 = vmatpush2.xpose.msra.mxu0 0.0
      %4137 = vmatprep.subr.mxu0 0.0
      %4138 = vmatpush2.xpose.msra.mxu0 0.0
      %4139 = vmatprep.subr.mxu0 0.0
      %4140 = vmatpush2.xpose.msra.mxu0 0.0
      %4141 = vmatprep.subr.mxu0 0.0
      %4142 = vmatpush2.xpose.msra.mxu0 0.0
      %4143 = vmatprep.subr.mxu0 0.0
      %4144 = vmatpush2.xpose.msra.mxu0 0.0
      %4145 = vmatprep.subr.mxu0 0.0
      %4146 = vmatpush2.xpose.msra.mxu0 0.0
      %4147 = vmatprep.mubr.f32.mxu0 %v4063
      %4148 = vmatmul.mubr.f32.gmra.mxu0 %v4061
      %v4149 = vpop.f32.mrf.mxu0
      %v4150 = vadd.f32 0.0, %v4149
      %v4151 = vpop.f32.mrf.mxu0
      %4152 = vmatprep.mubr.f32.mxu0 %v4069
      %4153 = vmatmul.mubr.f32.gmra.mxu0 %v4067
      %v4154 = vpop.f32.mrf.mxu0
      %v4155 = vadd.f32 0.0, %v4154
      %v4156 = vpop.f32.mrf.mxu0
      %4157 = vmatprep.mubr.f32.mxu0 %v4075
      %4158 = vmatmul.mubr.f32.gmra.mxu0 %v4073
      %v4159 = vpop.f32.mrf.mxu0
      %v4160 = vadd.f32 0.0, %v4159
      %v4161 = vpop.f32.mrf.mxu0
      %4162 = vmatprep.mubr.f32.mxu0 %v4081
      %4163 = vmatmul.mubr.f32.gmra.mxu0 %v4079
      %v4164 = vpop.f32.mrf.mxu0
      %v4165 = vadd.f32 0.0, %v4164
      %v4166 = vpop.f32.mrf.mxu0
      %4167 = vdwg.mxu0
      %v4168 = vadd.f32 %v3086, %v4150
      %v4169 = vadd.f32 %v3091, %v4155
      %v4170 = vadd.f32 %v3096, %v4160
      %v4171 = vadd.f32 %v3101, %v4165
      %v4172 = vld [vmem:[#allocation2 + $0x1c0] sm:$0xff]
      %v4173 = vld [vmem:[#allocation2 + $0x1c8] sm:$0xff]
      %v4174 = vld [vmem:[#allocation2 + $0x1d0] sm:$0xff]
      %v4175 = vld [vmem:[#allocation2 + $0x1d8] sm:$0xff]
      %v4176 = vld [vmem:[#allocation2 + $0x1e0] sm:$0xff]
      %v4177 = vld [vmem:[#allocation2 + $0x1e8] sm:$0xff]
      %v4178 = vld [vmem:[#allocation2 + $0x1f0] sm:$0xff]
      %v4179 = vld [vmem:[#allocation2 + $0x1f8] sm:$0xff]
      %v4180 = vld [vmem:[#allocation2 + $0x2c0] sm:$0xff]
      %v4181 = vld [vmem:[#allocation2 + $0x2c8] sm:$0xff]
      %v4182 = vld [vmem:[#allocation2 + $0x2d0] sm:$0xff]
      %v4183 = vld [vmem:[#allocation2 + $0x2d8] sm:$0xff]
      %v4184 = vld [vmem:[#allocation2 + $0x2e0] sm:$0xff]
      %v4185 = vld [vmem:[#allocation2 + $0x2e8] sm:$0xff]
      %v4186 = vld [vmem:[#allocation2 + $0x2f0] sm:$0xff]
      %v4187 = vld [vmem:[#allocation2 + $0x2f8] sm:$0xff]
      %4188 = vrot.lane.b32.xlu0 %v976, 32
      %v4189 = vpop.permute.xlu0 %4188
      %4190 = vrot.lane.b32.xlu0 %v977, 32
      %v4191 = vpop.permute.xlu0 %4190
      %4192 = vrot.lane.b32.xlu0 %v978, 32
      %v4193 = vpop.permute.xlu0 %4192
      %4194 = vrot.lane.b32.xlu0 %v979, 32
      %v4195 = vpop.permute.xlu0 %4194
      %4196 = vrot.lane.b32.xlu0 %v980, 32
      %v4197 = vpop.permute.xlu0 %4196
      %4198 = vrot.lane.b32.xlu0 %v981, 32
      %v4199 = vpop.permute.xlu0 %4198
      %4200 = vrot.lane.b32.xlu0 %v982, 32
      %v4201 = vpop.permute.xlu0 %4200
      %4202 = vrot.lane.b32.xlu0 %v983, 32
      %v4203 = vpop.permute.xlu0 %4202
      %4204 = vrot.lane.b32.xlu0 %v984, 32
      %v4205 = vpop.permute.xlu0 %4204
      %4206 = vrot.lane.b32.xlu0 %v985, 32
      %v4207 = vpop.permute.xlu0 %4206
      %4208 = vrot.lane.b32.xlu0 %v986, 32
      %v4209 = vpop.permute.xlu0 %4208
      %4210 = vrot.lane.b32.xlu0 %v987, 32
      %v4211 = vpop.permute.xlu0 %4210
      %4212 = vrot.lane.b32.xlu0 %v988, 32
      %v4213 = vpop.permute.xlu0 %4212
      %4214 = vrot.lane.b32.xlu0 %v989, 32
      %v4215 = vpop.permute.xlu0 %4214
      %4216 = vrot.lane.b32.xlu0 %v990, 32
      %v4217 = vpop.permute.xlu0 %4216
      %4218 = vrot.lane.b32.xlu0 %v991, 32
      %v4219 = vpop.permute.xlu0 %4218
      %4220 = vrot.lane.b32.xlu0 %v992, 32
      %v4221 = vpop.permute.xlu0 %4220
      %4222 = vrot.lane.b32.xlu0 %v993, 32
      %v4223 = vpop.permute.xlu0 %4222
      %4224 = vrot.lane.b32.xlu0 %v994, 32
      %v4225 = vpop.permute.xlu0 %4224
      %4226 = vrot.lane.b32.xlu0 %v995, 32
      %v4227 = vpop.permute.xlu0 %4226
      %4228 = vrot.lane.b32.xlu0 %v996, 32
      %v4229 = vpop.permute.xlu0 %4228
      %4230 = vrot.lane.b32.xlu0 %v997, 32
      %v4231 = vpop.permute.xlu0 %4230
      %4232 = vrot.lane.b32.xlu0 %v998, 32
      %v4233 = vpop.permute.xlu0 %4232
      %4234 = vrot.lane.b32.xlu0 %v999, 32
      %v4235 = vpop.permute.xlu0 %4234
      %4236 = vrot.lane.b32.xlu0 %v1000, 32
      %v4237 = vpop.permute.xlu0 %4236
      %4238 = vrot.lane.b32.xlu0 %v1001, 32
      %v4239 = vpop.permute.xlu0 %4238
      %4240 = vrot.lane.b32.xlu0 %v1002, 32
      %v4241 = vpop.permute.xlu0 %4240
      %4242 = vrot.lane.b32.xlu0 %v1003, 32
      %v4243 = vpop.permute.xlu0 %4242
      %4244 = vrot.lane.b32.xlu0 %v1004, 32
      %v4245 = vpop.permute.xlu0 %4244
      %4246 = vrot.lane.b32.xlu0 %v1005, 32
      %v4247 = vpop.permute.xlu0 %4246
      %4248 = vrot.lane.b32.xlu0 %v1006, 32
      %v4249 = vpop.permute.xlu0 %4248
      %4250 = vrot.lane.b32.xlu0 %v1007, 32
      %v4251 = vpop.permute.xlu0 %4250
      %v4252 = vsel %vm1024, %v4189, 0
      %v4254 = vsel %vm1024, %v4191, 0
      %v4256 = vsel %vm1024, %v4193, 0
      %v4258 = vsel %vm1024, %v4195, 0
      %v4260 = vsel %vm1024, %v4197, 0
      %v4262 = vsel %vm1024, %v4199, 0
      %v4264 = vsel %vm1024, %v4201, 0
      %v4266 = vsel %vm1024, %v4203, 0
      %v4268 = vsel %vm1024, %v4205, 0
      %v4270 = vsel %vm1024, %v4207, 0
      %v4272 = vsel %vm1024, %v4209, 0
      %v4274 = vsel %vm1024, %v4211, 0
      %v4276 = vsel %vm1024, %v4213, 0
      %v4278 = vsel %vm1024, %v4215, 0
      %v4280 = vsel %vm1024, %v4217, 0
      %v4282 = vsel %vm1024, %v4219, 0
      %v4284 = vsel %vm1024, %v4221, 0
      %v4286 = vsel %vm1024, %v4223, 0
      %v4288 = vsel %vm1024, %v4225, 0
      %v4290 = vsel %vm1024, %v4227, 0
      %v4292 = vsel %vm1024, %v4229, 0
      %v4294 = vsel %vm1024, %v4231, 0
      %v4296 = vsel %vm1024, %v4233, 0
      %v4298 = vsel %vm1024, %v4235, 0
      %v4300 = vsel %vm1024, %v4237, 0
      %v4302 = vsel %vm1024, %v4239, 0
      %v4304 = vsel %vm1024, %v4241, 0
      %v4306 = vsel %vm1024, %v4243, 0
      %v4308 = vsel %vm1024, %v4245, 0
      %v4310 = vsel %vm1024, %v4247, 0
      %v4312 = vsel %vm1024, %v4249, 0
      %v4314 = vsel %vm1024, %v4251, 0
      %4316 = vmatprep.subr.mxu0 0.0
      %4317 = vmatpush1.msra.mxu0 0.0
      %4318 = vmatprep.subr.mxu0 0.0
      %4319 = vmatpush1.msra.mxu0 0.0
      %4320 = vmatprep.subr.mxu0 0.0
      %4321 = vmatpush1.msra.mxu0 0.0
      %4322 = vmatprep.subr.mxu0 0.0
      %4323 = vmatpush1.msra.mxu0 0.0
      %4324 = vmatprep.subr.mxu0 0.0
      %4325 = vmatpush1.msra.mxu0 0.0
      %4326 = vmatprep.subr.mxu0 0.0
      %4327 = vmatpush1.msra.mxu0 0.0
      %4328 = vmatprep.subr.mxu0 0.0
      %4329 = vmatpush1.msra.mxu0 0.0
      %4330 = vmatprep.subr.mxu0 0.0
      %4331 = vmatpush1.msra.mxu0 0.0
      %4332 = vmatprep.subr.mxu0 0.0
      %4333 = vmatpush1.msra.mxu0 0.0
      %4334 = vmatprep.subr.mxu0 0.0
      %4335 = vmatpush1.msra.mxu0 0.0
      %4336 = vmatprep.subr.mxu0 0.0
      %4337 = vmatpush1.msra.mxu0 0.0
      %4338 = vmatprep.subr.mxu0 0.0
      %4339 = vmatpush1.msra.mxu0 0.0
      %4340 = vmatprep.subr.mxu0 %v4179
      %4341 = vmatpush1.msra.mxu0 %v4178
      %4342 = vmatprep.subr.mxu0 %v4177
      %4343 = vmatpush1.msra.mxu0 %v4176
      %4344 = vmatprep.subr.mxu0 %v4175
      %4345 = vmatpush1.msra.mxu0 %v4174
      %4346 = vmatprep.subr.mxu0 %v4173
      %4347 = vmatpush1.msra.mxu0 %v4172
      %4348 = vmatprep.subr.mxu0 0.0
      %4349 = vmatpush2.msra.mxu0 0.0
      %4350 = vmatprep.subr.mxu0 0.0
      %4351 = vmatpush2.msra.mxu0 0.0
      %4352 = vmatprep.subr.mxu0 0.0
      %4353 = vmatpush2.msra.mxu0 0.0
      %4354 = vmatprep.subr.mxu0 0.0
      %4355 = vmatpush2.msra.mxu0 0.0
      %4356 = vmatprep.subr.mxu0 0.0
      %4357 = vmatpush2.msra.mxu0 0.0
      %4358 = vmatprep.subr.mxu0 0.0
      %4359 = vmatpush2.msra.mxu0 0.0
      %4360 = vmatprep.subr.mxu0 0.0
      %4361 = vmatpush2.msra.mxu0 0.0
      %4362 = vmatprep.subr.mxu0 0.0
      %4363 = vmatpush2.msra.mxu0 0.0
      %4364 = vmatprep.subr.mxu0 0.0
      %4365 = vmatpush2.msra.mxu0 0.0
      %4366 = vmatprep.subr.mxu0 0.0
      %4367 = vmatpush2.msra.mxu0 0.0
      %4368 = vmatprep.subr.mxu0 0.0
      %4369 = vmatpush2.msra.mxu0 0.0
      %4370 = vmatprep.subr.mxu0 0.0
      %4371 = vmatpush2.msra.mxu0 0.0
      %4372 = vmatprep.subr.mxu0 0.0
      %4373 = vmatpush2.msra.mxu0 0.0
      %4374 = vmatprep.subr.mxu0 0.0
      %4375 = vmatpush2.msra.mxu0 0.0
      %4376 = vmatprep.subr.mxu0 0.0
      %4377 = vmatpush2.msra.mxu0 0.0
      %4378 = vmatprep.subr.mxu0 0.0
      %4379 = vmatpush2.msra.mxu0 0.0
      %4380 = vmatprep.mubr.f32.mxu0 0.0
      %4381 = vmatmul.mubr.f32.gmra.mxu0 %v4252
      %v4382 = vpop.f32.mrf.mxu0
      %v4383 = vadd.f32 0.0, %v4382
      %v4384 = vpop.f32.mrf.mxu0
      %v4385 = vadd.f32 0.0, %v4384
      %4386 = vmatprep.mubr.f32.mxu0 0.0
      %4387 = vmatmul.mubr.f32.gmra.mxu0 %v4254
      %v4388 = vpop.f32.mrf.mxu0
      %v4389 = vadd.f32 0.0, %v4388
      %v4390 = vpop.f32.mrf.mxu0
      %v4391 = vadd.f32 0.0, %v4390
      %4392 = vmatprep.mubr.f32.mxu0 0.0
      %4393 = vmatmul.mubr.f32.gmra.mxu0 %v4256
      %v4394 = vpop.f32.mrf.mxu0
      %v4395 = vadd.f32 0.0, %v4394
      %v4396 = vpop.f32.mrf.mxu0
      %v4397 = vadd.f32 0.0, %v4396
      %4398 = vmatprep.mubr.f32.mxu0 0.0
      %4399 = vmatmul.mubr.f32.gmra.mxu0 %v4258
      %v4400 = vpop.f32.mrf.mxu0
      %v4401 = vadd.f32 0.0, %v4400
      %v4402 = vpop.f32.mrf.mxu0
      %v4403 = vadd.f32 0.0, %v4402
      %4404 = vmatprep.mubr.f32.mxu0 0.0
      %4405 = vmatmul.mubr.f32.gmra.mxu0 %v4260
      %v4406 = vpop.f32.mrf.mxu0
      %v4407 = vadd.f32 0.0, %v4406
      %v4408 = vpop.f32.mrf.mxu0
      %v4409 = vadd.f32 0.0, %v4408
      %4410 = vmatprep.mubr.f32.mxu0 0.0
      %4411 = vmatmul.mubr.f32.gmra.mxu0 %v4262
      %v4412 = vpop.f32.mrf.mxu0
      %v4413 = vadd.f32 0.0, %v4412
      %v4414 = vpop.f32.mrf.mxu0
      %v4415 = vadd.f32 0.0, %v4414
      %4416 = vmatprep.mubr.f32.mxu0 0.0
      %4417 = vmatmul.mubr.f32.gmra.mxu0 %v4264
      %v4418 = vpop.f32.mrf.mxu0
      %v4419 = vadd.f32 0.0, %v4418
      %v4420 = vpop.f32.mrf.mxu0
      %v4421 = vadd.f32 0.0, %v4420
      %4422 = vmatprep.mubr.f32.mxu0 0.0
      %4423 = vmatmul.mubr.f32.gmra.mxu0 %v4266
      %v4424 = vpop.f32.mrf.mxu0
      %v4425 = vadd.f32 0.0, %v4424
      %v4426 = vpop.f32.mrf.mxu0
      %v4427 = vadd.f32 0.0, %v4426
      %4428 = vmatprep.mubr.f32.mxu0 0.0
      %4429 = vmatmul.mubr.f32.gmra.mxu0 %v4268
      %v4430 = vpop.f32.mrf.mxu0
      %v4431 = vadd.f32 0.0, %v4430
      %v4432 = vpop.f32.mrf.mxu0
      %v4433 = vadd.f32 0.0, %v4432
      %4434 = vmatprep.mubr.f32.mxu0 0.0
      %4435 = vmatmul.mubr.f32.gmra.mxu0 %v4270
      %v4436 = vpop.f32.mrf.mxu0
      %v4437 = vadd.f32 0.0, %v4436
      %v4438 = vpop.f32.mrf.mxu0
      %v4439 = vadd.f32 0.0, %v4438
      %4440 = vmatprep.mubr.f32.mxu0 0.0
      %4441 = vmatmul.mubr.f32.gmra.mxu0 %v4272
      %v4442 = vpop.f32.mrf.mxu0
      %v4443 = vadd.f32 0.0, %v4442
      %v4444 = vpop.f32.mrf.mxu0
      %v4445 = vadd.f32 0.0, %v4444
      %4446 = vmatprep.mubr.f32.mxu0 0.0
      %4447 = vmatmul.mubr.f32.gmra.mxu0 %v4274
      %v4448 = vpop.f32.mrf.mxu0
      %v4449 = vadd.f32 0.0, %v4448
      %v4450 = vpop.f32.mrf.mxu0
      %v4451 = vadd.f32 0.0, %v4450
      %4452 = vmatprep.mubr.f32.mxu0 0.0
      %4453 = vmatmul.mubr.f32.gmra.mxu0 %v4276
      %v4454 = vpop.f32.mrf.mxu0
      %v4455 = vadd.f32 0.0, %v4454
      %v4456 = vpop.f32.mrf.mxu0
      %v4457 = vadd.f32 0.0, %v4456
      %4458 = vmatprep.mubr.f32.mxu0 0.0
      %4459 = vmatmul.mubr.f32.gmra.mxu0 %v4278
      %v4460 = vpop.f32.mrf.mxu0
      %v4461 = vadd.f32 0.0, %v4460
      %v4462 = vpop.f32.mrf.mxu0
      %v4463 = vadd.f32 0.0, %v4462
      %4464 = vmatprep.mubr.f32.mxu0 0.0
      %4465 = vmatmul.mubr.f32.gmra.mxu0 %v4280
      %v4466 = vpop.f32.mrf.mxu0
      %v4467 = vadd.f32 0.0, %v4466
      %v4468 = vpop.f32.mrf.mxu0
      %v4469 = vadd.f32 0.0, %v4468
      %4470 = vmatprep.mubr.f32.mxu0 0.0
      %4471 = vmatmul.mubr.f32.gmra.mxu0 %v4282
      %v4472 = vpop.f32.mrf.mxu0
      %v4473 = vadd.f32 0.0, %v4472
      %v4474 = vpop.f32.mrf.mxu0
      %v4475 = vadd.f32 0.0, %v4474
      %4476 = vmatprep.mubr.f32.mxu0 0.0
      %4477 = vmatmul.mubr.f32.gmra.mxu0 %v4284
      %v4478 = vpop.f32.mrf.mxu0
      %v4479 = vadd.f32 0.0, %v4478
      %v4480 = vpop.f32.mrf.mxu0
      %v4481 = vadd.f32 0.0, %v4480
      %4482 = vmatprep.mubr.f32.mxu0 0.0
      %4483 = vmatmul.mubr.f32.gmra.mxu0 %v4286
      %v4484 = vpop.f32.mrf.mxu0
      %v4485 = vadd.f32 0.0, %v4484
      %v4486 = vpop.f32.mrf.mxu0
      %v4487 = vadd.f32 0.0, %v4486
      %4488 = vmatprep.mubr.f32.mxu0 0.0
      %4489 = vmatmul.mubr.f32.gmra.mxu0 %v4288
      %v4490 = vpop.f32.mrf.mxu0
      %v4491 = vadd.f32 0.0, %v4490
      %v4492 = vpop.f32.mrf.mxu0
      %v4493 = vadd.f32 0.0, %v4492
      %4494 = vmatprep.mubr.f32.mxu0 0.0
      %4495 = vmatmul.mubr.f32.gmra.mxu0 %v4290
      %v4496 = vpop.f32.mrf.mxu0
      %v4497 = vadd.f32 0.0, %v4496
      %v4498 = vpop.f32.mrf.mxu0
      %v4499 = vadd.f32 0.0, %v4498
      %4500 = vmatprep.mubr.f32.mxu0 0.0
      %4501 = vmatmul.mubr.f32.gmra.mxu0 %v4292
      %v4502 = vpop.f32.mrf.mxu0
      %v4503 = vadd.f32 0.0, %v4502
      %v4504 = vpop.f32.mrf.mxu0
      %v4505 = vadd.f32 0.0, %v4504
      %4506 = vmatprep.mubr.f32.mxu0 0.0
      %4507 = vmatmul.mubr.f32.gmra.mxu0 %v4294
      %v4508 = vpop.f32.mrf.mxu0
      %v4509 = vadd.f32 0.0, %v4508
      %v4510 = vpop.f32.mrf.mxu0
      %v4511 = vadd.f32 0.0, %v4510
      %4512 = vmatprep.mubr.f32.mxu0 0.0
      %4513 = vmatmul.mubr.f32.gmra.mxu0 %v4296
      %v4514 = vpop.f32.mrf.mxu0
      %v4515 = vadd.f32 0.0, %v4514
      %v4516 = vpop.f32.mrf.mxu0
      %v4517 = vadd.f32 0.0, %v4516
      %4518 = vmatprep.mubr.f32.mxu0 0.0
      %4519 = vmatmul.mubr.f32.gmra.mxu0 %v4298
      %v4520 = vpop.f32.mrf.mxu0
      %v4521 = vadd.f32 0.0, %v4520
      %v4522 = vpop.f32.mrf.mxu0
      %v4523 = vadd.f32 0.0, %v4522
      %4524 = vmatprep.mubr.f32.mxu0 0.0
      %4525 = vmatmul.mubr.f32.gmra.mxu0 %v4300
      %v4526 = vpop.f32.mrf.mxu0
      %v4527 = vadd.f32 0.0, %v4526
      %v4528 = vpop.f32.mrf.mxu0
      %v4529 = vadd.f32 0.0, %v4528
      %4530 = vmatprep.mubr.f32.mxu0 0.0
      %4531 = vmatmul.mubr.f32.gmra.mxu0 %v4302
      %v4532 = vpop.f32.mrf.mxu0
      %v4533 = vadd.f32 0.0, %v4532
      %v4534 = vpop.f32.mrf.mxu0
      %v4535 = vadd.f32 0.0, %v4534
      %4536 = vmatprep.mubr.f32.mxu0 0.0
      %4537 = vmatmul.mubr.f32.gmra.mxu0 %v4304
      %v4538 = vpop.f32.mrf.mxu0
      %v4539 = vadd.f32 0.0, %v4538
      %v4540 = vpop.f32.mrf.mxu0
      %v4541 = vadd.f32 0.0, %v4540
      %4542 = vmatprep.mubr.f32.mxu0 0.0
      %4543 = vmatmul.mubr.f32.gmra.mxu0 %v4306
      %v4544 = vpop.f32.mrf.mxu0
      %v4545 = vadd.f32 0.0, %v4544
      %v4546 = vpop.f32.mrf.mxu0
      %v4547 = vadd.f32 0.0, %v4546
      %4548 = vmatprep.mubr.f32.mxu0 0.0
      %4549 = vmatmul.mubr.f32.gmra.mxu0 %v4308
      %v4550 = vpop.f32.mrf.mxu0
      %v4551 = vadd.f32 0.0, %v4550
      %v4552 = vpop.f32.mrf.mxu0
      %v4553 = vadd.f32 0.0, %v4552
      %4554 = vmatprep.mubr.f32.mxu0 0.0
      %4555 = vmatmul.mubr.f32.gmra.mxu0 %v4310
      %v4556 = vpop.f32.mrf.mxu0
      %v4557 = vadd.f32 0.0, %v4556
      %v4558 = vpop.f32.mrf.mxu0
      %v4559 = vadd.f32 0.0, %v4558
      %4560 = vmatprep.mubr.f32.mxu0 0.0
      %4561 = vmatmul.mubr.f32.gmra.mxu0 %v4312
      %v4562 = vpop.f32.mrf.mxu0
      %v4563 = vadd.f32 0.0, %v4562
      %v4564 = vpop.f32.mrf.mxu0
      %v4565 = vadd.f32 0.0, %v4564
      %4566 = vmatprep.mubr.f32.mxu0 0.0
      %4567 = vmatmul.mubr.f32.gmra.mxu0 %v4314
      %v4568 = vpop.f32.mrf.mxu0
      %v4569 = vadd.f32 0.0, %v4568
      %v4570 = vpop.f32.mrf.mxu0
      %v4571 = vadd.f32 0.0, %v4570
      %4572 = vdwg.mxu0
      %v4573 = vmax.f32 %v4383, %v4385
      %4574 = vmax.xlane.f32.xlu0 %v4573
      %v4575 = vpop.xlane.xlu0 %4574
      %v4576 = vmax.f32 %v4389, %v4391
      %4577 = vmax.xlane.f32.xlu0 %v4576
      %v4578 = vpop.xlane.xlu0 %4577
      %v4579 = vmax.f32 %v4395, %v4397
      %4580 = vmax.xlane.f32.xlu0 %v4579
      %v4581 = vpop.xlane.xlu0 %4580
      %v4582 = vmax.f32 %v4401, %v4403
      %4583 = vmax.xlane.f32.xlu0 %v4582
      %v4584 = vpop.xlane.xlu0 %4583
      %v4585 = vmax.f32 %v4407, %v4409
      %4586 = vmax.xlane.f32.xlu0 %v4585
      %v4587 = vpop.xlane.xlu0 %4586
      %v4588 = vmax.f32 %v4413, %v4415
      %4589 = vmax.xlane.f32.xlu0 %v4588
      %v4590 = vpop.xlane.xlu0 %4589
      %v4591 = vmax.f32 %v4419, %v4421
      %4592 = vmax.xlane.f32.xlu0 %v4591
      %v4593 = vpop.xlane.xlu0 %4592
      %v4594 = vmax.f32 %v4425, %v4427
      %4595 = vmax.xlane.f32.xlu0 %v4594
      %v4596 = vpop.xlane.xlu0 %4595
      %v4597 = vmax.f32 %v4431, %v4433
      %4598 = vmax.xlane.f32.xlu0 %v4597
      %v4599 = vpop.xlane.xlu0 %4598
      %v4600 = vmax.f32 %v4437, %v4439
      %4601 = vmax.xlane.f32.xlu0 %v4600
      %v4602 = vpop.xlane.xlu0 %4601
      %v4603 = vmax.f32 %v4443, %v4445
      %4604 = vmax.xlane.f32.xlu0 %v4603
      %v4605 = vpop.xlane.xlu0 %4604
      %v4606 = vmax.f32 %v4449, %v4451
      %4607 = vmax.xlane.f32.xlu0 %v4606
      %v4608 = vpop.xlane.xlu0 %4607
      %v4609 = vmax.f32 %v4455, %v4457
      %4610 = vmax.xlane.f32.xlu0 %v4609
      %v4611 = vpop.xlane.xlu0 %4610
      %v4612 = vmax.f32 %v4461, %v4463
      %4613 = vmax.xlane.f32.xlu0 %v4612
      %v4614 = vpop.xlane.xlu0 %4613
      %v4615 = vmax.f32 %v4467, %v4469
      %4616 = vmax.xlane.f32.xlu0 %v4615
      %v4617 = vpop.xlane.xlu0 %4616
      %v4618 = vmax.f32 %v4473, %v4475
      %4619 = vmax.xlane.f32.xlu0 %v4618
      %v4620 = vpop.xlane.xlu0 %4619
      %v4621 = vmax.f32 %v4479, %v4481
      %4622 = vmax.xlane.f32.xlu0 %v4621
      %v4623 = vpop.xlane.xlu0 %4622
      %v4624 = vmax.f32 %v4485, %v4487
      %4625 = vmax.xlane.f32.xlu0 %v4624
      %v4626 = vpop.xlane.xlu0 %4625
      %v4627 = vmax.f32 %v4491, %v4493
      %4628 = vmax.xlane.f32.xlu0 %v4627
      %v4629 = vpop.xlane.xlu0 %4628
      %v4630 = vmax.f32 %v4497, %v4499
      %4631 = vmax.xlane.f32.xlu0 %v4630
      %v4632 = vpop.xlane.xlu0 %4631
      %v4633 = vmax.f32 %v4503, %v4505
      %4634 = vmax.xlane.f32.xlu0 %v4633
      %v4635 = vpop.xlane.xlu0 %4634
      %v4636 = vmax.f32 %v4509, %v4511
      %4637 = vmax.xlane.f32.xlu0 %v4636
      %v4638 = vpop.xlane.xlu0 %4637
      %v4639 = vmax.f32 %v4515, %v4517
      %4640 = vmax.xlane.f32.xlu0 %v4639
      %v4641 = vpop.xlane.xlu0 %4640
      %v4642 = vmax.f32 %v4521, %v4523
      %4643 = vmax.xlane.f32.xlu0 %v4642
      %v4644 = vpop.xlane.xlu0 %4643
      %v4645 = vmax.f32 %v4527, %v4529
      %4646 = vmax.xlane.f32.xlu0 %v4645
      %v4647 = vpop.xlane.xlu0 %4646
      %v4648 = vmax.f32 %v4533, %v4535
      %4649 = vmax.xlane.f32.xlu0 %v4648
      %v4650 = vpop.xlane.xlu0 %4649
      %v4651 = vmax.f32 %v4539, %v4541
      %4652 = vmax.xlane.f32.xlu0 %v4651
      %v4653 = vpop.xlane.xlu0 %4652
      %v4654 = vmax.f32 %v4545, %v4547
      %4655 = vmax.xlane.f32.xlu0 %v4654
      %v4656 = vpop.xlane.xlu0 %4655
      %v4657 = vmax.f32 %v4551, %v4553
      %4658 = vmax.xlane.f32.xlu0 %v4657
      %v4659 = vpop.xlane.xlu0 %4658
      %v4660 = vmax.f32 %v4557, %v4559
      %4661 = vmax.xlane.f32.xlu0 %v4660
      %v4662 = vpop.xlane.xlu0 %4661
      %v4663 = vmax.f32 %v4563, %v4565
      %4664 = vmax.xlane.f32.xlu0 %v4663
      %v4665 = vpop.xlane.xlu0 %4664
      %v4666 = vmax.f32 %v4569, %v4571
      %4667 = vmax.xlane.f32.xlu0 %v4666
      %v4668 = vpop.xlane.xlu0 %4667
      %v4669 = vsub.f32 %v4383, %v4575
      %v4670 = vsub.f32 %v4385, %v4575
      %v4671 = vsub.f32 %v4389, %v4578
      %v4672 = vsub.f32 %v4391, %v4578
      %v4673 = vsub.f32 %v4395, %v4581
      %v4674 = vsub.f32 %v4397, %v4581
      %v4675 = vsub.f32 %v4401, %v4584
      %v4676 = vsub.f32 %v4403, %v4584
      %v4677 = vsub.f32 %v4407, %v4587
      %v4678 = vsub.f32 %v4409, %v4587
      %v4679 = vsub.f32 %v4413, %v4590
      %v4680 = vsub.f32 %v4415, %v4590
      %v4681 = vsub.f32 %v4419, %v4593
      %v4682 = vsub.f32 %v4421, %v4593
      %v4683 = vsub.f32 %v4425, %v4596
      %v4684 = vsub.f32 %v4427, %v4596
      %v4685 = vsub.f32 %v4431, %v4599
      %v4686 = vsub.f32 %v4433, %v4599
      %v4687 = vsub.f32 %v4437, %v4602
      %v4688 = vsub.f32 %v4439, %v4602
      %v4689 = vsub.f32 %v4443, %v4605
      %v4690 = vsub.f32 %v4445, %v4605
      %v4691 = vsub.f32 %v4449, %v4608
      %v4692 = vsub.f32 %v4451, %v4608
      %v4693 = vsub.f32 %v4455, %v4611
      %v4694 = vsub.f32 %v4457, %v4611
      %v4695 = vsub.f32 %v4461, %v4614
      %v4696 = vsub.f32 %v4463, %v4614
      %v4697 = vsub.f32 %v4467, %v4617
      %v4698 = vsub.f32 %v4469, %v4617
      %v4699 = vsub.f32 %v4473, %v4620
      %v4700 = vsub.f32 %v4475, %v4620
      %v4701 = vsub.f32 %v4479, %v4623
      %v4702 = vsub.f32 %v4481, %v4623
      %v4703 = vsub.f32 %v4485, %v4626
      %v4704 = vsub.f32 %v4487, %v4626
      %v4705 = vsub.f32 %v4491, %v4629
      %v4706 = vsub.f32 %v4493, %v4629
      %v4707 = vsub.f32 %v4497, %v4632
      %v4708 = vsub.f32 %v4499, %v4632
      %v4709 = vsub.f32 %v4503, %v4635
      %v4710 = vsub.f32 %v4505, %v4635
      %v4711 = vsub.f32 %v4509, %v4638
      %v4712 = vsub.f32 %v4511, %v4638
      %v4713 = vsub.f32 %v4515, %v4641
      %v4714 = vsub.f32 %v4517, %v4641
      %v4715 = vsub.f32 %v4521, %v4644
      %v4716 = vsub.f32 %v4523, %v4644
      %v4717 = vsub.f32 %v4527, %v4647
      %v4718 = vsub.f32 %v4529, %v4647
      %v4719 = vsub.f32 %v4533, %v4650
      %v4720 = vsub.f32 %v4535, %v4650
      %v4721 = vsub.f32 %v4539, %v4653
      %v4722 = vsub.f32 %v4541, %v4653
      %v4723 = vsub.f32 %v4545, %v4656
      %v4724 = vsub.f32 %v4547, %v4656
      %v4725 = vsub.f32 %v4551, %v4659
      %v4726 = vsub.f32 %v4553, %v4659
      %v4727 = vsub.f32 %v4557, %v4662
      %v4728 = vsub.f32 %v4559, %v4662
      %v4729 = vsub.f32 %v4563, %v4665
      %v4730 = vsub.f32 %v4565, %v4665
      %v4731 = vsub.f32 %v4569, %v4668
      %v4732 = vsub.f32 %v4571, %v4668
      %v4733 = vmul.f32 %v4669, 1.442695
      %v4734 = vpow.pop %v4733
      %v4735 = vmul.f32 %v4670, 1.442695
      %v4736 = vpow.pop %v4735
      %v4737 = vmul.f32 %v4671, 1.442695
      %v4738 = vpow.pop %v4737
      %v4739 = vmul.f32 %v4672, 1.442695
      %v4740 = vpow.pop %v4739
      %v4741 = vmul.f32 %v4673, 1.442695
      %v4742 = vpow.pop %v4741
      %v4743 = vmul.f32 %v4674, 1.442695
      %v4744 = vpow.pop %v4743
      %v4745 = vmul.f32 %v4675, 1.442695
      %v4746 = vpow.pop %v4745
      %v4747 = vmul.f32 %v4676, 1.442695
      %v4748 = vpow.pop %v4747
      %v4749 = vmul.f32 %v4677, 1.442695
      %v4750 = vpow.pop %v4749
      %v4751 = vmul.f32 %v4678, 1.442695
      %v4752 = vpow.pop %v4751
      %v4753 = vmul.f32 %v4679, 1.442695
      %v4754 = vpow.pop %v4753
      %v4755 = vmul.f32 %v4680, 1.442695
      %v4756 = vpow.pop %v4755
      %v4757 = vmul.f32 %v4681, 1.442695
      %v4758 = vpow.pop %v4757
      %v4759 = vmul.f32 %v4682, 1.442695
      %v4760 = vpow.pop %v4759
      %v4761 = vmul.f32 %v4683, 1.442695
      %v4762 = vpow.pop %v4761
      %v4763 = vmul.f32 %v4684, 1.442695
      %v4764 = vpow.pop %v4763
      %v4765 = vmul.f32 %v4685, 1.442695
      %v4766 = vpow.pop %v4765
      %v4767 = vmul.f32 %v4686, 1.442695
      %v4768 = vpow.pop %v4767
      %v4769 = vmul.f32 %v4687, 1.442695
      %v4770 = vpow.pop %v4769
      %v4771 = vmul.f32 %v4688, 1.442695
      %v4772 = vpow.pop %v4771
      %v4773 = vmul.f32 %v4689, 1.442695
      %v4774 = vpow.pop %v4773
      %v4775 = vmul.f32 %v4690, 1.442695
      %v4776 = vpow.pop %v4775
      %v4777 = vmul.f32 %v4691, 1.442695
      %v4778 = vpow.pop %v4777
      %v4779 = vmul.f32 %v4692, 1.442695
      %v4780 = vpow.pop %v4779
      %v4781 = vmul.f32 %v4693, 1.442695
      %v4782 = vpow.pop %v4781
      %v4783 = vmul.f32 %v4694, 1.442695
      %v4784 = vpow.pop %v4783
      %v4785 = vmul.f32 %v4695, 1.442695
      %v4786 = vpow.pop %v4785
      %v4787 = vmul.f32 %v4696, 1.442695
      %v4788 = vpow.pop %v4787
      %v4789 = vmul.f32 %v4697, 1.442695
      %v4790 = vpow.pop %v4789
      %v4791 = vmul.f32 %v4698, 1.442695
      %v4792 = vpow.pop %v4791
      %v4793 = vmul.f32 %v4699, 1.442695
      %v4794 = vpow.pop %v4793
      %v4795 = vmul.f32 %v4700, 1.442695
      %v4796 = vpow.pop %v4795
      %v4797 = vmul.f32 %v4701, 1.442695
      %v4798 = vpow.pop %v4797
      %v4799 = vmul.f32 %v4702, 1.442695
      %v4800 = vpow.pop %v4799
      %v4801 = vmul.f32 %v4703, 1.442695
      %v4802 = vpow.pop %v4801
      %v4803 = vmul.f32 %v4704, 1.442695
      %v4804 = vpow.pop %v4803
      %v4805 = vmul.f32 %v4705, 1.442695
      %v4806 = vpow.pop %v4805
      %v4807 = vmul.f32 %v4706, 1.442695
      %v4808 = vpow.pop %v4807
      %v4809 = vmul.f32 %v4707, 1.442695
      %v4810 = vpow.pop %v4809
      %v4811 = vmul.f32 %v4708, 1.442695
      %v4812 = vpow.pop %v4811
      %v4813 = vmul.f32 %v4709, 1.442695
      %v4814 = vpow.pop %v4813
      %v4815 = vmul.f32 %v4710, 1.442695
      %v4816 = vpow.pop %v4815
      %v4817 = vmul.f32 %v4711, 1.442695
      %v4818 = vpow.pop %v4817
      %v4819 = vmul.f32 %v4712, 1.442695
      %v4820 = vpow.pop %v4819
      %v4821 = vmul.f32 %v4713, 1.442695
      %v4822 = vpow.pop %v4821
      %v4823 = vmul.f32 %v4714, 1.442695
      %v4824 = vpow.pop %v4823
      %v4825 = vmul.f32 %v4715, 1.442695
      %v4826 = vpow.pop %v4825
      %v4827 = vmul.f32 %v4716, 1.442695
      %v4828 = vpow.pop %v4827
      %v4829 = vmul.f32 %v4717, 1.442695
      %v4830 = vpow.pop %v4829
      %v4831 = vmul.f32 %v4718, 1.442695
      %v4832 = vpow.pop %v4831
      %v4833 = vmul.f32 %v4719, 1.442695
      %v4834 = vpow.pop %v4833
      %v4835 = vmul.f32 %v4720, 1.442695
      %v4836 = vpow.pop %v4835
      %v4837 = vmul.f32 %v4721, 1.442695
      %v4838 = vpow.pop %v4837
      %v4839 = vmul.f32 %v4722, 1.442695
      %v4840 = vpow.pop %v4839
      %v4841 = vmul.f32 %v4723, 1.442695
      %v4842 = vpow.pop %v4841
      %v4843 = vmul.f32 %v4724, 1.442695
      %v4844 = vpow.pop %v4843
      %v4845 = vmul.f32 %v4725, 1.442695
      %v4846 = vpow.pop %v4845
      %v4847 = vmul.f32 %v4726, 1.442695
      %v4848 = vpow.pop %v4847
      %v4849 = vmul.f32 %v4727, 1.442695
      %v4850 = vpow.pop %v4849
      %v4851 = vmul.f32 %v4728, 1.442695
      %v4852 = vpow.pop %v4851
      %v4853 = vmul.f32 %v4729, 1.442695
      %v4854 = vpow.pop %v4853
      %v4855 = vmul.f32 %v4730, 1.442695
      %v4856 = vpow.pop %v4855
      %v4857 = vmul.f32 %v4731, 1.442695
      %v4858 = vpow.pop %v4857
      %v4859 = vmul.f32 %v4732, 1.442695
      %v4860 = vpow.pop %v4859
      %v4861 = vadd.f32 %v4734, %v4736
      %4862 = vadd.xlane.f32.xlu0 %v4861
      %v4863 = vpop.xlane.xlu0 %4862
      %v4864 = vadd.f32 %v4738, %v4740
      %4865 = vadd.xlane.f32.xlu0 %v4864
      %v4866 = vpop.xlane.xlu0 %4865
      %v4867 = vadd.f32 %v4742, %v4744
      %4868 = vadd.xlane.f32.xlu0 %v4867
      %v4869 = vpop.xlane.xlu0 %4868
      %v4870 = vadd.f32 %v4746, %v4748
      %4871 = vadd.xlane.f32.xlu0 %v4870
      %v4872 = vpop.xlane.xlu0 %4871
      %v4873 = vadd.f32 %v4750, %v4752
      %4874 = vadd.xlane.f32.xlu0 %v4873
      %v4875 = vpop.xlane.xlu0 %4874
      %v4876 = vadd.f32 %v4754, %v4756
      %4877 = vadd.xlane.f32.xlu0 %v4876
      %v4878 = vpop.xlane.xlu0 %4877
      %v4879 = vadd.f32 %v4758, %v4760
      %4880 = vadd.xlane.f32.xlu0 %v4879
      %v4881 = vpop.xlane.xlu0 %4880
      %v4882 = vadd.f32 %v4762, %v4764
      %4883 = vadd.xlane.f32.xlu0 %v4882
      %v4884 = vpop.xlane.xlu0 %4883
      %v4885 = vadd.f32 %v4766, %v4768
      %4886 = vadd.xlane.f32.xlu0 %v4885
      %v4887 = vpop.xlane.xlu0 %4886
      %v4888 = vadd.f32 %v4770, %v4772
      %4889 = vadd.xlane.f32.xlu0 %v4888
      %v4890 = vpop.xlane.xlu0 %4889
      %v4891 = vadd.f32 %v4774, %v4776
      %4892 = vadd.xlane.f32.xlu0 %v4891
      %v4893 = vpop.xlane.xlu0 %4892
      %v4894 = vadd.f32 %v4778, %v4780
      %4895 = vadd.xlane.f32.xlu0 %v4894
      %v4896 = vpop.xlane.xlu0 %4895
      %v4897 = vadd.f32 %v4782, %v4784
      %4898 = vadd.xlane.f32.xlu0 %v4897
      %v4899 = vpop.xlane.xlu0 %4898
      %v4900 = vadd.f32 %v4786, %v4788
      %4901 = vadd.xlane.f32.xlu0 %v4900
      %v4902 = vpop.xlane.xlu0 %4901
      %v4903 = vadd.f32 %v4790, %v4792
      %4904 = vadd.xlane.f32.xlu0 %v4903
      %v4905 = vpop.xlane.xlu0 %4904
      %v4906 = vadd.f32 %v4794, %v4796
      %4907 = vadd.xlane.f32.xlu0 %v4906
      %v4908 = vpop.xlane.xlu0 %4907
      %v4909 = vadd.f32 %v4798, %v4800
      %4910 = vadd.xlane.f32.xlu0 %v4909
      %v4911 = vpop.xlane.xlu0 %4910
      %v4912 = vadd.f32 %v4802, %v4804
      %4913 = vadd.xlane.f32.xlu0 %v4912
      %v4914 = vpop.xlane.xlu0 %4913
      %v4915 = vadd.f32 %v4806, %v4808
      %4916 = vadd.xlane.f32.xlu0 %v4915
      %v4917 = vpop.xlane.xlu0 %4916
      %v4918 = vadd.f32 %v4810, %v4812
      %4919 = vadd.xlane.f32.xlu0 %v4918
      %v4920 = vpop.xlane.xlu0 %4919
      %v4921 = vadd.f32 %v4814, %v4816
      %4922 = vadd.xlane.f32.xlu0 %v4921
      %v4923 = vpop.xlane.xlu0 %4922
      %v4924 = vadd.f32 %v4818, %v4820
      %4925 = vadd.xlane.f32.xlu0 %v4924
      %v4926 = vpop.xlane.xlu0 %4925
      %v4927 = vadd.f32 %v4822, %v4824
      %4928 = vadd.xlane.f32.xlu0 %v4927
      %v4929 = vpop.xlane.xlu0 %4928
      %v4930 = vadd.f32 %v4826, %v4828
      %4931 = vadd.xlane.f32.xlu0 %v4930
      %v4932 = vpop.xlane.xlu0 %4931
      %v4933 = vadd.f32 %v4830, %v4832
      %4934 = vadd.xlane.f32.xlu0 %v4933
      %v4935 = vpop.xlane.xlu0 %4934
      %v4936 = vadd.f32 %v4834, %v4836
      %4937 = vadd.xlane.f32.xlu0 %v4936
      %v4938 = vpop.xlane.xlu0 %4937
      %v4939 = vadd.f32 %v4838, %v4840
      %4940 = vadd.xlane.f32.xlu0 %v4939
      %v4941 = vpop.xlane.xlu0 %4940
      %v4942 = vadd.f32 %v4842, %v4844
      %4943 = vadd.xlane.f32.xlu0 %v4942
      %v4944 = vpop.xlane.xlu0 %4943
      %v4945 = vadd.f32 %v4846, %v4848
      %4946 = vadd.xlane.f32.xlu0 %v4945
      %v4947 = vpop.xlane.xlu0 %4946
      %v4948 = vadd.f32 %v4850, %v4852
      %4949 = vadd.xlane.f32.xlu0 %v4948
      %v4950 = vpop.xlane.xlu0 %4949
      %v4951 = vadd.f32 %v4854, %v4856
      %4952 = vadd.xlane.f32.xlu0 %v4951
      %v4953 = vpop.xlane.xlu0 %4952
      %v4954 = vadd.f32 %v4858, %v4860
      %4955 = vadd.xlane.f32.xlu0 %v4954
      %v4956 = vpop.xlane.xlu0 %4955
      %v4957 = vrcp.pop %v4863
      %v4958 = vrcp.pop %v4866
      %v4959 = vrcp.pop %v4869
      %v4960 = vrcp.pop %v4872
      %v4961 = vrcp.pop %v4875
      %v4962 = vrcp.pop %v4878
      %v4963 = vrcp.pop %v4881
      %v4964 = vrcp.pop %v4884
      %v4965 = vrcp.pop %v4887
      %v4966 = vrcp.pop %v4890
      %v4967 = vrcp.pop %v4893
      %v4968 = vrcp.pop %v4896
      %v4969 = vrcp.pop %v4899
      %v4970 = vrcp.pop %v4902
      %v4971 = vrcp.pop %v4905
      %v4972 = vrcp.pop %v4908
      %v4973 = vrcp.pop %v4911
      %v4974 = vrcp.pop %v4914
      %v4975 = vrcp.pop %v4917
      %v4976 = vrcp.pop %v4920
      %v4977 = vrcp.pop %v4923
      %v4978 = vrcp.pop %v4926
      %v4979 = vrcp.pop %v4929
      %v4980 = vrcp.pop %v4932
      %v4981 = vrcp.pop %v4935
      %v4982 = vrcp.pop %v4938
      %v4983 = vrcp.pop %v4941
      %v4984 = vrcp.pop %v4944
      %v4985 = vrcp.pop %v4947
      %v4986 = vrcp.pop %v4950
      %v4987 = vrcp.pop %v4953
      %v4988 = vrcp.pop %v4956
      %v4989 = vmul.f32 %v4734, %v4957
      %v4990 = vmul.f32 %v4736, %v4957
      %v4991 = vmul.f32 %v4738, %v4958
      %v4992 = vmul.f32 %v4740, %v4958
      %v4993 = vmul.f32 %v4742, %v4959
      %v4994 = vmul.f32 %v4744, %v4959
      %v4995 = vmul.f32 %v4746, %v4960
      %v4996 = vmul.f32 %v4748, %v4960
      %v4997 = vmul.f32 %v4750, %v4961
      %v4998 = vmul.f32 %v4752, %v4961
      %v4999 = vmul.f32 %v4754, %v4962
      %v5000 = vmul.f32 %v4756, %v4962
      %v5001 = vmul.f32 %v4758, %v4963
      %v5002 = vmul.f32 %v4760, %v4963
      %v5003 = vmul.f32 %v4762, %v4964
      %v5004 = vmul.f32 %v4764, %v4964
      %v5005 = vmul.f32 %v4766, %v4965
      %v5006 = vmul.f32 %v4768, %v4965
      %v5007 = vmul.f32 %v4770, %v4966
      %v5008 = vmul.f32 %v4772, %v4966
      %v5009 = vmul.f32 %v4774, %v4967
      %v5010 = vmul.f32 %v4776, %v4967
      %v5011 = vmul.f32 %v4778, %v4968
      %v5012 = vmul.f32 %v4780, %v4968
      %v5013 = vmul.f32 %v4782, %v4969
      %v5014 = vmul.f32 %v4784, %v4969
      %v5015 = vmul.f32 %v4786, %v4970
      %v5016 = vmul.f32 %v4788, %v4970
      %v5017 = vmul.f32 %v4790, %v4971
      %v5018 = vmul.f32 %v4792, %v4971
      %v5019 = vmul.f32 %v4794, %v4972
      %v5020 = vmul.f32 %v4796, %v4972
      %v5021 = vmul.f32 %v4798, %v4973
      %v5022 = vmul.f32 %v4800, %v4973
      %v5023 = vmul.f32 %v4802, %v4974
      %v5024 = vmul.f32 %v4804, %v4974
      %v5025 = vmul.f32 %v4806, %v4975
      %v5026 = vmul.f32 %v4808, %v4975
      %v5027 = vmul.f32 %v4810, %v4976
      %v5028 = vmul.f32 %v4812, %v4976
      %v5029 = vmul.f32 %v4814, %v4977
      %v5030 = vmul.f32 %v4816, %v4977
      %v5031 = vmul.f32 %v4818, %v4978
      %v5032 = vmul.f32 %v4820, %v4978
      %v5033 = vmul.f32 %v4822, %v4979
      %v5034 = vmul.f32 %v4824, %v4979
      %v5035 = vmul.f32 %v4826, %v4980
      %v5036 = vmul.f32 %v4828, %v4980
      %v5037 = vmul.f32 %v4830, %v4981
      %v5038 = vmul.f32 %v4832, %v4981
      %v5039 = vmul.f32 %v4834, %v4982
      %v5040 = vmul.f32 %v4836, %v4982
      %v5041 = vmul.f32 %v4838, %v4983
      %v5042 = vmul.f32 %v4840, %v4983
      %v5043 = vmul.f32 %v4842, %v4984
      %v5044 = vmul.f32 %v4844, %v4984
      %v5045 = vmul.f32 %v4846, %v4985
      %v5046 = vmul.f32 %v4848, %v4985
      %v5047 = vmul.f32 %v4850, %v4986
      %v5048 = vmul.f32 %v4852, %v4986
      %v5049 = vmul.f32 %v4854, %v4987
      %v5050 = vmul.f32 %v4856, %v4987
      %v5051 = vmul.f32 %v4858, %v4988
      %v5052 = vmul.f32 %v4860, %v4988
      %s5053 = scalar_lea.vmem %s2, 192
      %v5054 = vld [vmem:[%s5053] sm:$0xff]
      %v5055 = vld [vmem:[%s5053 + $0x8] sm:$0xff]
      %v5056 = vld [vmem:[%s5053 + $0x10] sm:$0xff]
      %v5057 = vld [vmem:[%s5053 + $0x18] sm:$0xff]
      %v5058 = vld [vmem:[%s5053 + $0x20] sm:$0xff]
      %v5059 = vld [vmem:[%s5053 + $0x28] sm:$0xff]
      %v5060 = vld [vmem:[%s5053 + $0x30] sm:$0xff]
      %v5061 = vld [vmem:[%s5053 + $0x38] sm:$0xff]
      %5062 = vmatprep.subr.mxu0 %v5020
      %5063 = vmatpush1.msra.mxu0 %v5019
      %5064 = vmatprep.subr.mxu0 %v5018
      %5065 = vmatpush1.msra.mxu0 %v5017
      %5066 = vmatprep.subr.mxu0 %v5016
      %5067 = vmatpush1.msra.mxu0 %v5015
      %5068 = vmatprep.subr.mxu0 %v5014
      %5069 = vmatpush1.msra.mxu0 %v5013
      %5070 = vmatprep.subr.mxu0 %v5012
      %5071 = vmatpush1.msra.mxu0 %v5011
      %5072 = vmatprep.subr.mxu0 %v5010
      %5073 = vmatpush1.msra.mxu0 %v5009
      %5074 = vmatprep.subr.mxu0 %v5008
      %5075 = vmatpush1.msra.mxu0 %v5007
      %5076 = vmatprep.subr.mxu0 %v5006
      %5077 = vmatpush1.msra.mxu0 %v5005
      %5078 = vmatprep.subr.mxu0 %v5004
      %5079 = vmatpush1.msra.mxu0 %v5003
      %5080 = vmatprep.subr.mxu0 %v5002
      %5081 = vmatpush1.msra.mxu0 %v5001
      %5082 = vmatprep.subr.mxu0 %v5000
      %5083 = vmatpush1.msra.mxu0 %v4999
      %5084 = vmatprep.subr.mxu0 %v4998
      %5085 = vmatpush1.msra.mxu0 %v4997
      %5086 = vmatprep.subr.mxu0 %v4996
      %5087 = vmatpush1.msra.mxu0 %v4995
      %5088 = vmatprep.subr.mxu0 %v4994
      %5089 = vmatpush1.msra.mxu0 %v4993
      %5090 = vmatprep.subr.mxu0 %v4992
      %5091 = vmatpush1.msra.mxu0 %v4991
      %5092 = vmatprep.subr.mxu0 %v4990
      %5093 = vmatpush1.msra.mxu0 %v4989
      %5094 = vmatprep.subr.mxu0 %v5052
      %5095 = vmatpush2.msra.mxu0 %v5051
      %5096 = vmatprep.subr.mxu0 %v5050
      %5097 = vmatpush2.msra.mxu0 %v5049
      %5098 = vmatprep.subr.mxu0 %v5048
      %5099 = vmatpush2.msra.mxu0 %v5047
      %5100 = vmatprep.subr.mxu0 %v5046
      %5101 = vmatpush2.msra.mxu0 %v5045
      %5102 = vmatprep.subr.mxu0 %v5044
      %5103 = vmatpush2.msra.mxu0 %v5043
      %5104 = vmatprep.subr.mxu0 %v5042
      %5105 = vmatpush2.msra.mxu0 %v5041
      %5106 = vmatprep.subr.mxu0 %v5040
      %5107 = vmatpush2.msra.mxu0 %v5039
      %5108 = vmatprep.subr.mxu0 %v5038
      %5109 = vmatpush2.msra.mxu0 %v5037
      %5110 = vmatprep.subr.mxu0 %v5036
      %5111 = vmatpush2.msra.mxu0 %v5035
      %5112 = vmatprep.subr.mxu0 %v5034
      %5113 = vmatpush2.msra.mxu0 %v5033
      %5114 = vmatprep.subr.mxu0 %v5032
      %5115 = vmatpush2.msra.mxu0 %v5031
      %5116 = vmatprep.subr.mxu0 %v5030
      %5117 = vmatpush2.msra.mxu0 %v5029
      %5118 = vmatprep.subr.mxu0 %v5028
      %5119 = vmatpush2.msra.mxu0 %v5027
      %5120 = vmatprep.subr.mxu0 %v5026
      %5121 = vmatpush2.msra.mxu0 %v5025
      %5122 = vmatprep.subr.mxu0 %v5024
      %5123 = vmatpush2.msra.mxu0 %v5023
      %5124 = vmatprep.subr.mxu0 %v5022
      %5125 = vmatpush2.msra.mxu0 %v5021
      %5126 = vmatprep.mubr.f32.mxu0 %v5055
      %5127 = vmatmul.mubr.f32.gmra.mxu0 %v5054
      %v5128 = vpop.f32.mrf.mxu0
      %v5129 = vadd.f32 0.0, %v5128
      %v5130 = vpop.f32.mrf.mxu0
      %v5131 = vadd.f32 0.0, %v5130
      %5132 = vmatprep.mubr.f32.mxu0 %v5057
      %5133 = vmatmul.mubr.f32.gmra.mxu0 %v5056
      %v5134 = vpop.f32.mrf.mxu0
      %v5135 = vadd.f32 0.0, %v5134
      %v5136 = vpop.f32.mrf.mxu0
      %v5137 = vadd.f32 0.0, %v5136
      %5138 = vmatprep.mubr.f32.mxu0 %v5059
      %5139 = vmatmul.mubr.f32.gmra.mxu0 %v5058
      %v5140 = vpop.f32.mrf.mxu0
      %v5141 = vadd.f32 0.0, %v5140
      %v5142 = vpop.f32.mrf.mxu0
      %v5143 = vadd.f32 0.0, %v5142
      %5144 = vmatprep.mubr.f32.mxu0 %v5061
      %5145 = vmatmul.mubr.f32.gmra.mxu0 %v5060
      %v5146 = vpop.f32.mrf.mxu0
      %v5147 = vadd.f32 0.0, %v5146
      %v5148 = vpop.f32.mrf.mxu0
      %v5149 = vadd.f32 0.0, %v5148
      %5150 = vdwg.mxu0
      %5151 = vmatprep.subr.mxu0 0.0
      %5152 = vmatpush1.xpose.msra.mxu0 0.0
      %5153 = vmatprep.subr.mxu0 0.0
      %5154 = vmatpush1.xpose.msra.mxu0 0.0
      %5155 = vmatprep.subr.mxu0 0.0
      %5156 = vmatpush1.xpose.msra.mxu0 0.0
      %5157 = vmatprep.subr.mxu0 0.0
      %5158 = vmatpush1.xpose.msra.mxu0 0.0
      %5159 = vmatprep.subr.mxu0 0.0
      %5160 = vmatpush1.xpose.msra.mxu0 0.0
      %5161 = vmatprep.subr.mxu0 0.0
      %5162 = vmatpush1.xpose.msra.mxu0 0.0
      %5163 = vmatprep.subr.mxu0 0.0
      %5164 = vmatpush1.xpose.msra.mxu0 0.0
      %5165 = vmatprep.subr.mxu0 0.0
      %5166 = vmatpush1.xpose.msra.mxu0 0.0
      %5167 = vmatprep.subr.mxu0 0.0
      %5168 = vmatpush1.xpose.msra.mxu0 0.0
      %5169 = vmatprep.subr.mxu0 0.0
      %5170 = vmatpush1.xpose.msra.mxu0 0.0
      %5171 = vmatprep.subr.mxu0 0.0
      %5172 = vmatpush1.xpose.msra.mxu0 0.0
      %5173 = vmatprep.subr.mxu0 0.0
      %5174 = vmatpush1.xpose.msra.mxu0 0.0
      %5175 = vmatprep.subr.mxu0 %v4187
      %5176 = vmatpush1.xpose.msra.mxu0 %v4186
      %5177 = vmatprep.subr.mxu0 %v4185
      %5178 = vmatpush1.xpose.msra.mxu0 %v4184
      %5179 = vmatprep.subr.mxu0 %v4183
      %5180 = vmatpush1.xpose.msra.mxu0 %v4182
      %5181 = vmatprep.subr.mxu0 %v4181
      %5182 = vmatpush1.xpose.msra.mxu0 %v4180
      %5183 = vmatprep.subr.mxu0 0.0
      %5184 = vmatpush2.xpose.msra.mxu0 0.0
      %5185 = vmatprep.subr.mxu0 0.0
      %5186 = vmatpush2.xpose.msra.mxu0 0.0
      %5187 = vmatprep.subr.mxu0 0.0
      %5188 = vmatpush2.xpose.msra.mxu0 0.0
      %5189 = vmatprep.subr.mxu0 0.0
      %5190 = vmatpush2.xpose.msra.mxu0 0.0
      %5191 = vmatprep.subr.mxu0 0.0
      %5192 = vmatpush2.xpose.msra.mxu0 0.0
      %5193 = vmatprep.subr.mxu0 0.0
      %5194 = vmatpush2.xpose.msra.mxu0 0.0
      %5195 = vmatprep.subr.mxu0 0.0
      %5196 = vmatpush2.xpose.msra.mxu0 0.0
      %5197 = vmatprep.subr.mxu0 0.0
      %5198 = vmatpush2.xpose.msra.mxu0 0.0
      %5199 = vmatprep.subr.mxu0 0.0
      %5200 = vmatpush2.xpose.msra.mxu0 0.0
      %5201 = vmatprep.subr.mxu0 0.0
      %5202 = vmatpush2.xpose.msra.mxu0 0.0
      %5203 = vmatprep.subr.mxu0 0.0
      %5204 = vmatpush2.xpose.msra.mxu0 0.0
      %5205 = vmatprep.subr.mxu0 0.0
      %5206 = vmatpush2.xpose.msra.mxu0 0.0
      %5207 = vmatprep.subr.mxu0 0.0
      %5208 = vmatpush2.xpose.msra.mxu0 0.0
      %5209 = vmatprep.subr.mxu0 0.0
      %5210 = vmatpush2.xpose.msra.mxu0 0.0
      %5211 = vmatprep.subr.mxu0 0.0
      %5212 = vmatpush2.xpose.msra.mxu0 0.0
      %5213 = vmatprep.subr.mxu0 0.0
      %5214 = vmatpush2.xpose.msra.mxu0 0.0
      %5215 = vmatprep.mubr.f32.mxu0 %v5131
      %5216 = vmatmul.mubr.f32.gmra.mxu0 %v5129
      %v5217 = vpop.f32.mrf.mxu0
      %v5218 = vadd.f32 0.0, %v5217
      %v5219 = vpop.f32.mrf.mxu0
      %5220 = vmatprep.mubr.f32.mxu0 %v5137
      %5221 = vmatmul.mubr.f32.gmra.mxu0 %v5135
      %v5222 = vpop.f32.mrf.mxu0
      %v5223 = vadd.f32 0.0, %v5222
      %v5224 = vpop.f32.mrf.mxu0
      %5225 = vmatprep.mubr.f32.mxu0 %v5143
      %5226 = vmatmul.mubr.f32.gmra.mxu0 %v5141
      %v5227 = vpop.f32.mrf.mxu0
      %v5228 = vadd.f32 0.0, %v5227
      %v5229 = vpop.f32.mrf.mxu0
      %5230 = vmatprep.mubr.f32.mxu0 %v5149
      %5231 = vmatmul.mubr.f32.gmra.mxu0 %v5147
      %v5232 = vpop.f32.mrf.mxu0
      %v5233 = vadd.f32 0.0, %v5232
      %v5234 = vpop.f32.mrf.mxu0
      %5235 = vdwg.mxu0
      %v5236 = vadd.f32 %v4168, %v5218
      %v5237 = vadd.f32 %v4169, %v5223
      %v5238 = vadd.f32 %v4170, %v5228
      %v5239 = vadd.f32 %v4171, %v5233
      %v5240 = vld [vmem:[%s3] sm:$0xff]
      %v5241 = vld [vmem:[%s3 + $0x8] sm:$0xff]
      %v5242 = vld [vmem:[%s3 + $0x10] sm:$0xff]
      %v5243 = vld [vmem:[%s3 + $0x18] sm:$0xff]
      %5245 = vset.pattern.permute.xlu0 0
      %5246 = vperm.xlu0 %5245, %v5240
      %v5247 = vpop.permute.xlu0 %5246
      %5250 = vset.pattern.permute.xlu0 0
      %5251 = vperm.xlu0 %5250, %v5241
      %v5252 = vpop.permute.xlu0 %5251
      %5255 = vset.pattern.permute.xlu0 0
      %5256 = vperm.xlu0 %5255, %v5242
      %v5257 = vpop.permute.xlu0 %5256
      %5260 = vset.pattern.permute.xlu0 0
      %5261 = vperm.xlu0 %5260, %v5243
      %v5262 = vpop.permute.xlu0 %5261
      %v5264 = vadd.f32 %v5236, %v5247
      %v5265 = vadd.f32 %v5237, %v5252
      %v5266 = vadd.f32 %v5238, %v5257
      %v5267 = vadd.f32 %v5239, %v5262
      %5268 = vst.msk [vmem:[%s197] sm:$0xff] %vm1024, %v5264
      %5269 = vst.msk [vmem:[%s197 + $0x8] sm:$0xff] %vm1024, %v5265
      %5270 = vst.msk [vmem:[%s197 + $0x10] sm:$0xff] %vm1024, %v5266
      %5271 = vst.msk [vmem:[%s197 + $0x18] sm:$0xff] %vm1024, %v5267
      %p5272 = scmp.lt.s32.totalorder %s15, 1
      %s5273 = scalar_select %p5272, %s15, 1
      %s5274 = smul.addr %s5273, 4
      %s5275 = smul.addr %s5274, 8
      %s5276 = scalar_lea.vmem %s4, %s5275
      // Predicated region
      $region37: #{attention_forward.1} parent=35 // pred_check
        %p5277 = pneg %p122
      $region38: #{attention_forward.1} parent=35 // pred_check_branch
        %5279 = sbr.rel (%p5277) target = $region40
      $region39: #{attention_forward.1} parent=35 // pred_region
        _
      $region40: #{attention_forward.1} parent=35 // pred_fallthru
        _
    $region36: #{attention_forward.1} parent=5 // pred_fallthru
      _
    %p5280 = scmp.le.s32.totalorder 2, %s10
    // Predicated region
    $region41: #{attention_forward.1} parent=5 // pred_check
      %p5281 = pneg %p5280
    $region42: #{attention_forward.1} parent=5 // pred_check_branch
      %5283 = sbr.rel (%p5281) target = $region44
    $region43: #{attention_forward.1} parent=5 // pred_region
      %s5284 = ssub.s32 %s10, 2
      // Predicated region
      $region45: #{attention_forward.1} parent=43 // pred_check
        %p5285 = pneg %p128
      $region46: #{attention_forward.1} parent=43 // pred_check_branch
        %5287 = sbr.rel (%p5285) target = $region48
      $region47: #{attention_forward.1} parent=43 // pred_region
        %p5288 = scmp.lt.s32.totalorder %s16, 1
        %s5289 = scalar_select %p5288, %s16, 1
        %s5290 = smul.addr %s5289, 4
        %s5291 = smul.addr %s5290, 8
        %s5292 = scalar_lea.vmem %s4, %s5291
      $region48: #{attention_forward.1} parent=43 // pred_fallthru
        _
    $region44: #{attention_forward.1} parent=5 // pred_fallthru
      _
  $region6: #{attention_forward.1} parent=0 // loop_footer
    %s14 = sadd.s32 1, %s10
  $region7: #{attention_forward.1} parent=0 // loop_footer_branch
    %9 = sbr.rel target = $region3
  $region8: #{attention_forward.1} parent=0 // loop_exit
    _

</llo_original>
